<compile_context>
chip_gen: v7x
topology: tpu7x:2x2x1
jax: 0.10.0
libtpu: 0.0.40
codegen_flags: <defaults>
</compile_context>

<pallas_src>
import math
from functools import partial

import jax
import jax.numpy as jnp
from jax import lax
from jax.experimental import pallas as pl
from jax.experimental.pallas import tpu as pltpu


# ----------------------------------------------------------------------------
# merge(): same semantics as the PyTorch helper (JAX glue, not a hot path).
# ----------------------------------------------------------------------------
def merge(a):
    return jnp.stack(a).sum(axis=0) if a != [] else jnp.zeros((1024,), jnp.float32)


# ----------------------------------------------------------------------------
# Kernel 1: fused projections.
#   q_flat  = x @ Wq_eff  + bq_eff    (B, S*E)
#   kv_flat = y @ Wkv_eff + bkv_eff   (B, 2*S*E)   (K | V concatenated)
# Weights arrive pre-cast to bf16 (halves weight DMA bytes); accumulate in f32.
# Grid splits the output columns in two ("parallel" -> both v7x TensorCores).
# ----------------------------------------------------------------------------
def _project(x, y, wq_eff, bq_eff, wkv_eff, bkv_eff):
    B, K = x.shape
    NQ = wq_eff.shape[1]
    NKV = wkv_eff.shape[1]
    NS = 2  # column split for the parallel grid axis

    def kernel(x_ref, y_ref, wq_ref, bq_ref, wkv_ref, bkv_ref, q_ref, kv_ref):
        xb = x_ref[...].astype(jnp.bfloat16)
        yb = y_ref[...].astype(jnp.bfloat16)
        q_ref[...] = (jnp.dot(xb, wq_ref[...],
                              preferred_element_type=jnp.float32) + bq_ref[...])
        kv_ref[...] = (jnp.dot(yb, wkv_ref[...],
                               preferred_element_type=jnp.float32) + bkv_ref[...])

    return pl.pallas_call(
        kernel,
        grid=(NS,),
        in_specs=[
            pl.BlockSpec((B, K), lambda j: (0, 0)),
            pl.BlockSpec((B, K), lambda j: (0, 0)),
            pl.BlockSpec((K, NQ // NS), lambda j: (0, j)),
            pl.BlockSpec((1, NQ // NS), lambda j: (0, j)),
            pl.BlockSpec((K, NKV // NS), lambda j: (0, j)),
            pl.BlockSpec((1, NKV // NS), lambda j: (0, j)),
        ],
        out_specs=[
            pl.BlockSpec((B, NQ // NS), lambda j: (0, j)),
            pl.BlockSpec((B, NKV // NS), lambda j: (0, j)),
        ],
        out_shape=[
            jax.ShapeDtypeStruct((B, NQ), jnp.float32),
            jax.ShapeDtypeStruct((B, NKV), jnp.float32),
        ],
        compiler_params=pltpu.CompilerParams(
            dimension_semantics=("parallel",)),
    )(x, y, wq_eff, bq_eff, wkv_eff, bkv_eff)


# ----------------------------------------------------------------------------
# Kernel 2: attention core + out-projection, one batch element per grid step.
# Inputs are already projected and Q is pre-scaled (scale folded into Wq_eff).
# ----------------------------------------------------------------------------
def _attention(q_rows, k_rows, v_rows, wo, bo, *, B, S, E, H):
    Dh = E // H

    def kernel(q_ref, k_ref, v_ref, wo_ref, bo_ref, o_ref):
        q = q_ref[...]                      # (S, E), already scaled
        k = k_ref[...]
        v = v_ref[...]
        wo_m = wo_ref[...]
        acc = jnp.zeros((S, E), jnp.float32)
        for h in range(H):                  # H=4 static, tiny (8x8) tiles
            sl = slice(h * Dh, (h + 1) * Dh)
            qh = q[:, sl]
            kh = k[:, sl]
            vh = v[:, sl]
            s = lax.dot_general(qh, kh, (((1,), (1,)), ((), ())),
                                preferred_element_type=jnp.float32)   # (S, S)
            s = s - jnp.max(s, axis=-1, keepdims=True)
            p = jnp.exp(s)
            p = p * pl.reciprocal(jnp.sum(p, axis=-1, keepdims=True),
                                  approx=True)
            oh = jnp.dot(p, vh, preferred_element_type=jnp.float32)   # (S, Dh)
            # out_proj folded in per-head: concat(heads) @ Wo == sum_h h @ Wo[h]
            acc = acc + jnp.dot(oh, wo_m[sl, :],
                                preferred_element_type=jnp.float32)
        o_ref[...] = acc + bo_ref[...]

    return pl.pallas_call(
        kernel,
        grid=(B,),
        in_specs=[
            pl.BlockSpec((S, E), lambda b: (b, 0)),
            pl.BlockSpec((S, E), lambda b: (b, 0)),
            pl.BlockSpec((S, E), lambda b: (b, 0)),
            pl.BlockSpec((E, E), lambda b: (0, 0)),
            pl.BlockSpec((1, E), lambda b: (0, 0)),
        ],
        out_specs=pl.BlockSpec((S, E), lambda b: (b, 0)),
        out_shape=jax.ShapeDtypeStruct((B * S, E), jnp.float32),
        compiler_params=pltpu.CompilerParams(
            dimension_semantics=("parallel",)),
    )(q_rows, k_rows, v_rows, wo, bo)


# ----------------------------------------------------------------------------
# Kernel 3: tail MLP  (Linear(S*E,1024) -> ReLU -> Linear(1024,2)).
# ----------------------------------------------------------------------------
def _tail(a_flat, w1, b1, w2, b2):
    B, K1 = a_flat.shape
    N1 = w1.shape[1]
    N2 = w2.shape[1]

    def kernel(a_ref, w1_ref, b1_ref, w2_ref, b2_ref, o_ref):
        ab = a_ref[...].astype(jnp.bfloat16)
        h = (jnp.dot(ab, w1_ref[...], preferred_element_type=jnp.float32)
             + b1_ref[...])
        h = jnp.maximum(h, 0.0)
        o_ref[...] = (jnp.dot(h, w2_ref[...], preferred_element_type=jnp.float32)
                      + b2_ref[...])

    return pl.pallas_call(
        kernel,
        grid=(1,),
        in_specs=[
            pl.BlockSpec((B, K1), lambda i: (0, 0)),
            pl.BlockSpec((K1, N1), lambda i: (0, 0)),
            pl.BlockSpec((1, N1), lambda i: (0, 0)),
            pl.BlockSpec((N1, N2), lambda i: (0, 0)),
            pl.BlockSpec((1, N2), lambda i: (0, 0)),
        ],
        out_specs=pl.BlockSpec((B, N2), lambda i: (0, 0)),
        out_shape=jax.ShapeDtypeStruct((B, N2), jnp.float32),
    )(a_flat, w1, b1, w2, b2)


# ----------------------------------------------------------------------------
# Full AttnNet forward.
# ----------------------------------------------------------------------------
@partial(jax.jit, static_argnums=(3, 4, 5))
def attn_net_forward(x, y, params, x_dim, y_dim, num_heads):
    B = x.shape[0]
    S, E, H = x_dim, y_dim, num_heads
    Dh = E // H
    scale = 1.0 / math.sqrt(Dh)

    wl, bl = params["wl"], params["bl"]
    eye_s = jnp.eye(S, dtype=jnp.float32)

    # Constant-fold self.linear, the attention scale and the Q/K/V
    # in-projections into effective (1024 -> S*E) matrices.
    kq = jnp.kron(eye_s, params["wq"] * scale)          # (S*E, S*E) block-diag
    kk = jnp.kron(eye_s, params["wk"])
    kv = jnp.kron(eye_s, params["wv"])
    wq_eff = wl @ kq                                     # (1024, S*E)
    bq_eff = bl @ kq + jnp.tile(params["bq"] * scale, S)
    wk_eff = wl @ kk
    bk_eff = bl @ kk + jnp.tile(params["bk"], S)
    wv_eff = wl @ kv
    bv_eff = bl @ kv + jnp.tile(params["bv"], S)
    wkv_eff = jnp.concatenate([wk_eff, wv_eff], axis=1)  # (1024, 2*S*E)
    bkv_eff = jnp.concatenate([bk_eff, bv_eff])

    # Kernel 1: fused projections (lane-dense outputs).
    q_flat, kv_flat = _project(
        x, y,
        wq_eff.astype(jnp.bfloat16), bq_eff.reshape(1, -1),
        wkv_eff.astype(jnp.bfloat16), bkv_eff.reshape(1, -1))

    # Layout-only glue (lane<->sublane relayouts kept in XLA, tensors are tiny).
    q_rows = q_flat.reshape(B * S, E)
    k_rows = kv_flat[:, :S * E].reshape(B * S, E)
    v_rows = kv_flat[:, S * E:].reshape(B * S, E)

    # Kernel 2: attention + out-projection.
    a_rows = _attention(q_rows, k_rows, v_rows,
                        params["wo"], params["bo"].reshape(1, E),
                        B=B, S=S, E=E, H=H)              # (B*S, E)

    a_flat = a_rows.reshape(B, S * E)

    # Kernel 3: tail MLP.
    out = _tail(a_flat,
                params["w1"].astype(jnp.bfloat16), params["b1"].reshape(1, -1),
                params["w2"], params["b2"].reshape(1, -1))
    return out


# Pure-JAX f32 reference (faithful, uncomposed) for numerical verification.
def attn_net_reference(x, y, p, x_dim, y_dim, num_heads):
    B = x.shape[0]
    S, E = x_dim, y_dim
    H, Dh = num_heads, y_dim // num_heads
    xp = x @ p["wl"] + p["bl"]
    yp = y @ p["wl"] + p["bl"]
    xq = xp.reshape(B, S, E)
    ykv = yp.reshape(B, S, E)
    q = xq @ p["wq"] + p["bq"]
    k = ykv @ p["wk"] + p["bk"]
    v = ykv @ p["wv"] + p["bv"]
    qh = q.reshape(B, S, H, Dh).transpose(0, 2, 1, 3)
    kh = k.reshape(B, S, H, Dh).transpose(0, 2, 1, 3)
    vh = v.reshape(B, S, H, Dh).transpose(0, 2, 1, 3)
    s = (qh / math.sqrt(Dh)) @ kh.transpose(0, 1, 3, 2)
    w = jax.nn.softmax(s, axis=-1)
    o = (w @ vh).transpose(0, 2, 1, 3).reshape(B, S, E)
    o = o @ p["wo"] + p["bo"]
    a = o.reshape(B, S * E)
    h = jnp.maximum(a @ p["w1"] + p["b1"], 0.0)
    return h @ p["w2"] + p["b2"]


if __name__ == "__main__":
    # Module hyper-parameters (dim=1024 is fixed inside AttnNet.__init__).
    DIM = 1024
    X_DIM, Y_DIM, NUM_HEADS = 8, 32, 4
    XY = X_DIM * Y_DIM
    B = 2

    key = jax.random.PRNGKey(0)
    ks = jax.random.split(key, 20)

    def init(k, shape, scale=0.05):
        return (jax.random.normal(k, shape, jnp.float32) * scale).astype(jnp.float32)

    params = {
        # self.linear: Linear(1024, x_dim*y_dim)  (stored as (in, out))
        "wl": init(ks[0], (DIM, XY)),
        "bl": init(ks[1], (XY,)),
        # self.attn in-proj / out-proj (embed_dim = y_dim)
        "wq": init(ks[2], (Y_DIM, Y_DIM)),
        "wk": init(ks[3], (Y_DIM, Y_DIM)),
        "wv": init(ks[4], (Y_DIM, Y_DIM)),
        "bq": init(ks[5], (Y_DIM,)),
        "bk": init(ks[6], (Y_DIM,)),
        "bv": init(ks[7], (Y_DIM,)),
        "wo": init(ks[8], (Y_DIM, Y_DIM)),
        "bo": init(ks[9], (Y_DIM,)),
        # self.net: Linear(x_dim*y_dim, 1024) -> ReLU -> Linear(1024, 2)
        "w1": init(ks[10], (XY, DIM)),
        "b1": init(ks[11], (DIM,)),
        "w2": init(ks[12], (DIM, 2)),
        "b2": init(ks[13], (2,)),
    }

    # Build post-BERT token lists and apply `merge` exactly as the module does.
    # (BERT itself is an undefined external module -- see TODO at top.)
    x_lists = [
        [jax.random.normal(ks[14], (DIM,), jnp.float32),
         jax.random.normal(ks[15], (DIM,), jnp.float32)],
        [jax.random.normal(ks[16], (DIM,), jnp.float32)],
    ]
    y_lists = [
        [jax.random.normal(ks[17], (DIM,), jnp.float32)],
        [],  # exercises the zeros((1024,)) branch of merge()
    ]
    x = jnp.stack([merge(a) for a in x_lists])   # (B, 1024)
    y = jnp.stack([merge(a) for a in y_lists])   # (B, 1024)

    out = attn_net_forward(x, y, params, X_DIM, Y_DIM, NUM_HEADS)
    out = jax.block_until_ready(out)

    ref = attn_net_reference(x, y, params, X_DIM, Y_DIM, NUM_HEADS)
    assert out.shape == (B, 2), out.shape
    # bf16 MXU inputs (f32 accumulation) + approx reciprocal => relaxed tol.
    assert jnp.allclose(out, ref, rtol=2e-2, atol=2e-2), (out, ref)

    print("KERNEL_OK")
</pallas_src>

<mosaic_0001>
module attributes {stable_mosaic.version = 11 : i64} {
  func.func @kernel(%arg0: i32, %arg1: memref<2x1024xf32, #tpu.memory_space<vmem>>, %arg2: memref<2x1024xf32, #tpu.memory_space<vmem>>, %arg3: memref<1024x128xbf16, #tpu.memory_space<vmem>>, %arg4: memref<1x128xf32, #tpu.memory_space<vmem>>, %arg5: memref<1024x256xbf16, #tpu.memory_space<vmem>>, %arg6: memref<1x256xf32, #tpu.memory_space<vmem>>, %arg7: memref<2x128xf32, #tpu.memory_space<vmem>>, %arg8: memref<2x256xf32, #tpu.memory_space<vmem>>) attributes {dimension_semantics = [#tpu.dimension_semantics<parallel>], iteration_bounds = array<i64: 2>, scalar_prefetch = 0 : i64, scratch_operands = 0 : i64, tpu.core_type = #tpu.core_type<tc>, window_params = [{pipeline_mode = #tpu.pipeline_mode<synchronous>, transform_indices = @transform_0, window_bounds = array<i64: 2, 1024>}, {pipeline_mode = #tpu.pipeline_mode<synchronous>, transform_indices = @transform_1, window_bounds = array<i64: 2, 1024>}, {transform_indices = @transform_2, window_bounds = array<i64: 1024, 128>}, {transform_indices = @transform_3, window_bounds = array<i64: 1, 128>}, {transform_indices = @transform_4, window_bounds = array<i64: 1024, 256>}, {transform_indices = @transform_5, window_bounds = array<i64: 1, 256>}, {transform_indices = @transform_6, window_bounds = array<i64: 2, 128>}, {transform_indices = @transform_7, window_bounds = array<i64: 2, 256>}]} {
    %c0 = arith.constant 0 : index
    %c0_0 = arith.constant 0 : index
    %0 = vector.load %arg1[%c0, %c0_0] : memref<2x1024xf32, #tpu.memory_space<vmem>>, vector<2x1024xf32>
    %1 = arith.truncf %0 : vector<2x1024xf32> to vector<2x1024xbf16>
    %c0_1 = arith.constant 0 : index
    %c0_2 = arith.constant 0 : index
    %2 = vector.load %arg2[%c0_1, %c0_2] : memref<2x1024xf32, #tpu.memory_space<vmem>>, vector<2x1024xf32>
    %3 = arith.truncf %2 : vector<2x1024xf32> to vector<2x1024xbf16>
    %c0_3 = arith.constant 0 : index
    %c0_4 = arith.constant 0 : index
    %4 = vector.load %arg3[%c0_3, %c0_4] : memref<1024x128xbf16, #tpu.memory_space<vmem>>, vector<1024x128xbf16>
    %cst = arith.constant dense<0.000000e+00> : vector<2x128xf32>
    %5 = tpu.matmul %1, %4, %cst {dimension_numbers = #tpu.dot_dimension_numbers<[1], [0], [0], [1], [0, 0, 1, 1], [], []>} : vector<2x1024xbf16>, vector<1024x128xbf16>, vector<2x128xf32> -> vector<2x128xf32>
    %c0_5 = arith.constant 0 : index
    %c0_6 = arith.constant 0 : index
    %6 = vector.load %arg4[%c0_5, %c0_6] : memref<1x128xf32, #tpu.memory_space<vmem>>, vector<1x128xf32>
    %7 = vector.broadcast %6 : vector<1x128xf32> to vector<2x128xf32>
    %8 = arith.addf %5, %7 : vector<2x128xf32>
    %c0_7 = arith.constant 0 : index
    %c0_8 = arith.constant 0 : index
    %9 = vector.load %arg7[%c0_7, %c0_8] : memref<2x128xf32, #tpu.memory_space<vmem>>, vector<2x128xf32>
    tpu.vector_store %arg7[%c0_7, %c0_8], %8 {strides = array<i32>} : memref<2x128xf32, #tpu.memory_space<vmem>>, vector<2x128xf32>,
    %c0_9 = arith.constant 0 : index
    %c0_10 = arith.constant 0 : index
    %10 = vector.load %arg5[%c0_9, %c0_10] : memref<1024x256xbf16, #tpu.memory_space<vmem>>, vector<1024x256xbf16>
    %cst_11 = arith.constant dense<0.000000e+00> : vector<2x256xf32>
    %11 = tpu.matmul %3, %10, %cst_11 {dimension_numbers = #tpu.dot_dimension_numbers<[1], [0], [0], [1], [0, 0, 1, 1], [], []>} : vector<2x1024xbf16>, vector<1024x256xbf16>, vector<2x256xf32> -> vector<2x256xf32>
    %c0_12 = arith.constant 0 : index
    %c0_13 = arith.constant 0 : index
    %12 = vector.load %arg6[%c0_12, %c0_13] : memref<1x256xf32, #tpu.memory_space<vmem>>, vector<1x256xf32>
    %13 = vector.broadcast %12 : vector<1x256xf32> to vector<2x256xf32>
    %14 = arith.addf %11, %13 : vector<2x256xf32>
    %c0_14 = arith.constant 0 : index
    %c0_15 = arith.constant 0 : index
    %15 = vector.load %arg8[%c0_14, %c0_15] : memref<2x256xf32, #tpu.memory_space<vmem>>, vector<2x256xf32>
    tpu.vector_store %arg8[%c0_14, %c0_15], %14 {strides = array<i32>} : memref<2x256xf32, #tpu.memory_space<vmem>>, vector<2x256xf32>,
    return
  }
  func.func @transform_0(%arg0: i32) -> (i32, i32) {
    %c0_i32 = arith.constant 0 : i32
    %c0_i32_0 = arith.constant 0 : i32
    %c0_i32_1 = arith.constant 0 : i32
    return %c0_i32, %c0_i32_0 : i32, i32
  }
  func.func @transform_1(%arg0: i32) -> (i32, i32) {
    %c0_i32 = arith.constant 0 : i32
    %c0_i32_0 = arith.constant 0 : i32
    %c0_i32_1 = arith.constant 0 : i32
    return %c0_i32, %c0_i32_0 : i32, i32
  }
  func.func @transform_2(%arg0: i32) -> (i32, i32) {
    %c0_i32 = arith.constant 0 : i32
    %c0_i32_0 = arith.constant 0 : i32
    return %c0_i32, %arg0 : i32, i32
  }
  func.func @transform_3(%arg0: i32) -> (i32, i32) {
    %c0_i32 = arith.constant 0 : i32
    %c0_i32_0 = arith.constant 0 : i32
    return %c0_i32, %arg0 : i32, i32
  }
  func.func @transform_4(%arg0: i32) -> (i32, i32) {
    %c0_i32 = arith.constant 0 : i32
    %c0_i32_0 = arith.constant 0 : i32
    return %c0_i32, %arg0 : i32, i32
  }
  func.func @transform_5(%arg0: i32) -> (i32, i32) {
    %c0_i32 = arith.constant 0 : i32
    %c0_i32_0 = arith.constant 0 : i32
    return %c0_i32, %arg0 : i32, i32
  }
  func.func @transform_6(%arg0: i32) -> (i32, i32) {
    %c0_i32 = arith.constant 0 : i32
    %c0_i32_0 = arith.constant 0 : i32
    return %c0_i32, %arg0 : i32, i32
  }
  func.func @transform_7(%arg0: i32) -> (i32, i32) {
    %c0_i32 = arith.constant 0 : i32
    %c0_i32_0 = arith.constant 0 : i32
    return %c0_i32, %arg0 : i32, i32
  }
}

module attributes {stable_mosaic.version = 11 : i64} {
  func.func @kernel(%arg0: i32, %arg1: memref<8x32xf32, #tpu.memory_space<vmem>>, %arg2: memref<8x32xf32, #tpu.memory_space<vmem>>, %arg3: memref<8x32xf32, #tpu.memory_space<vmem>>, %arg4: memref<32x32xf32, #tpu.memory_space<vmem>>, %arg5: memref<1x32xf32, #tpu.memory_space<vmem>>, %arg6: memref<8x32xf32, #tpu.memory_space<vmem>>) attributes {dimension_semantics = [#tpu.dimension_semantics<parallel>], iteration_bounds = array<i64: 2>, scalar_prefetch = 0 : i64, scratch_operands = 0 : i64, tpu.core_type = #tpu.core_type<tc>, window_params = [{transform_indices = @transform_0, window_bounds = array<i64: 8, 32>}, {transform_indices = @transform_1, window_bounds = array<i64: 8, 32>}, {transform_indices = @transform_2, window_bounds = array<i64: 8, 32>}, {pipeline_mode = #tpu.pipeline_mode<synchronous>, transform_indices = @transform_3, window_bounds = array<i64: 32, 32>}, {pipeline_mode = #tpu.pipeline_mode<synchronous>, transform_indices = @transform_4, window_bounds = array<i64: 1, 32>}, {transform_indices = @transform_5, window_bounds = array<i64: 8, 32>}]} {
    %c0 = arith.constant 0 : index
    %c0_0 = arith.constant 0 : index
    %0 = vector.load %arg1[%c0, %c0_0] : memref<8x32xf32, #tpu.memory_space<vmem>>, vector<8x32xf32>
    %c0_1 = arith.constant 0 : index
    %c0_2 = arith.constant 0 : index
    %1 = vector.load %arg2[%c0_1, %c0_2] : memref<8x32xf32, #tpu.memory_space<vmem>>, vector<8x32xf32>
    %c0_3 = arith.constant 0 : index
    %c0_4 = arith.constant 0 : index
    %2 = vector.load %arg3[%c0_3, %c0_4] : memref<8x32xf32, #tpu.memory_space<vmem>>, vector<8x32xf32>
    %c0_5 = arith.constant 0 : index
    %c0_6 = arith.constant 0 : index
    %3 = vector.load %arg4[%c0_5, %c0_6] : memref<32x32xf32, #tpu.memory_space<vmem>>, vector<32x32xf32>
    %cst = arith.constant 0.000000e+00 : f32
    %4 = vector.broadcast %cst : f32 to vector<8x32xf32>
    %5 = vector.extract_strided_slice %0 {offsets = [0, 0], sizes = [8, 8], strides = [1, 1]} : vector<8x32xf32> to vector<8x8xf32>
    %6 = vector.extract_strided_slice %1 {offsets = [0, 0], sizes = [8, 8], strides = [1, 1]} : vector<8x32xf32> to vector<8x8xf32>
    %7 = vector.extract_strided_slice %2 {offsets = [0, 0], sizes = [8, 8], strides = [1, 1]} : vector<8x32xf32> to vector<8x8xf32>
    %cst_7 = arith.constant dense<0.000000e+00> : vector<8x8xf32>
    %8 = tpu.matmul %5, %6, %cst_7 {dimension_numbers = #tpu.dot_dimension_numbers<[1], [1], [0], [0], [0, 0, 1, 0], [], []>} : vector<8x8xf32>, vector<8x8xf32>, vector<8x8xf32> -> vector<8x8xf32>
    %cst_8 = arith.constant dense<0xFF800000> : vector<8xf32>
    %9 = vector.multi_reduction <maximumf>, %8, %cst_8 [1] : vector<8x8xf32> to vector<8xf32>
    %10 = vector.shape_cast %9 : vector<8xf32> to vector<8x1xf32>
    %11 = vector.broadcast %10 : vector<8x1xf32> to vector<8x8xf32>
    %12 = arith.subf %8, %11 : vector<8x8xf32>
    %13 = math.exp %12 : vector<8x8xf32>
    %cst_9 = arith.constant dense<0.000000e+00> : vector<8xf32>
    %14 = vector.multi_reduction <add>, %13, %cst_9 [1] : vector<8x8xf32> to vector<8xf32>
    %15 = vector.shape_cast %14 : vector<8xf32> to vector<8x1xf32>
    %16 = tpu.reciprocal %15 {approx = true} : vector<8x1xf32> -> vector<8x1xf32>
    %17 = vector.broadcast %16 : vector<8x1xf32> to vector<8x8xf32>
    %18 = arith.mulf %13, %17 : vector<8x8xf32>
    %cst_10 = arith.constant dense<0.000000e+00> : vector<8x8xf32>
    %19 = tpu.matmul %18, %7, %cst_10 {dimension_numbers = #tpu.dot_dimension_numbers<[1], [0], [0], [1], [0, 0, 1, 1], [], []>} : vector<8x8xf32>, vector<8x8xf32>, vector<8x8xf32> -> vector<8x8xf32>
    %20 = vector.extract_strided_slice %3 {offsets = [0, 0], sizes = [8, 32], strides = [1, 1]} : vector<32x32xf32> to vector<8x32xf32>
    %cst_11 = arith.constant dense<0.000000e+00> : vector<8x32xf32>
    %21 = tpu.matmul %19, %20, %cst_11 {dimension_numbers = #tpu.dot_dimension_numbers<[1], [0], [0], [1], [0, 0, 1, 1], [], []>} : vector<8x8xf32>, vector<8x32xf32>, vector<8x32xf32> -> vector<8x32xf32>
    %22 = arith.addf %4, %21 : vector<8x32xf32>
    %23 = vector.extract_strided_slice %0 {offsets = [0, 8], sizes = [8, 8], strides = [1, 1]} : vector<8x32xf32> to vector<8x8xf32>
    %24 = vector.extract_strided_slice %1 {offsets = [0, 8], sizes = [8, 8], strides = [1, 1]} : vector<8x32xf32> to vector<8x8xf32>
    %25 = vector.extract_strided_slice %2 {offsets = [0, 8], sizes = [8, 8], strides = [1, 1]} : vector<8x32xf32> to vector<8x8xf32>
    %cst_12 = arith.constant dense<0.000000e+00> : vector<8x8xf32>
    %26 = tpu.matmul %23, %24, %cst_12 {dimension_numbers = #tpu.dot_dimension_numbers<[1], [1], [0], [0], [0, 0, 1, 0], [], []>} : vector<8x8xf32>, vector<8x8xf32>, vector<8x8xf32> -> vector<8x8xf32>
    %cst_13 = arith.constant dense<0xFF800000> : vector<8xf32>
    %27 = vector.multi_reduction <maximumf>, %26, %cst_13 [1] : vector<8x8xf32> to vector<8xf32>
    %28 = vector.shape_cast %27 : vector<8xf32> to vector<8x1xf32>
    %29 = vector.broadcast %28 : vector<8x1xf32> to vector<8x8xf32>
    %30 = arith.subf %26, %29 : vector<8x8xf32>
    %31 = math.exp %30 : vector<8x8xf32>
    %cst_14 = arith.constant dense<0.000000e+00> : vector<8xf32>
    %32 = vector.multi_reduction <add>, %31, %cst_14 [1] : vector<8x8xf32> to vector<8xf32>
    %33 = vector.shape_cast %32 : vector<8xf32> to vector<8x1xf32>
    %34 = tpu.reciprocal %33 {approx = true} : vector<8x1xf32> -> vector<8x1xf32>
    %35 = vector.broadcast %34 : vector<8x1xf32> to vector<8x8xf32>
    %36 = arith.mulf %31, %35 : vector<8x8xf32>
    %cst_15 = arith.constant dense<0.000000e+00> : vector<8x8xf32>
    %37 = tpu.matmul %36, %25, %cst_15 {dimension_numbers = #tpu.dot_dimension_numbers<[1], [0], [0], [1], [0, 0, 1, 1], [], []>} : vector<8x8xf32>, vector<8x8xf32>, vector<8x8xf32> -> vector<8x8xf32>
    %38 = vector.extract_strided_slice %3 {offsets = [8, 0], sizes = [8, 32], strides = [1, 1]} : vector<32x32xf32> to vector<8x32xf32>
    %cst_16 = arith.constant dense<0.000000e+00> : vector<8x32xf32>
    %39 = tpu.matmul %37, %38, %cst_16 {dimension_numbers = #tpu.dot_dimension_numbers<[1], [0], [0], [1], [0, 0, 1, 1], [], []>} : vector<8x8xf32>, vector<8x32xf32>, vector<8x32xf32> -> vector<8x32xf32>
    %40 = arith.addf %22, %39 : vector<8x32xf32>
    %41 = vector.extract_strided_slice %0 {offsets = [0, 16], sizes = [8, 8], strides = [1, 1]} : vector<8x32xf32> to vector<8x8xf32>
    %42 = vector.extract_strided_slice %1 {offsets = [0, 16], sizes = [8, 8], strides = [1, 1]} : vector<8x32xf32> to vector<8x8xf32>
    %43 = vector.extract_strided_slice %2 {offsets = [0, 16], sizes = [8, 8], strides = [1, 1]} : vector<8x32xf32> to vector<8x8xf32>
    %cst_17 = arith.constant dense<0.000000e+00> : vector<8x8xf32>
    %44 = tpu.matmul %41, %42, %cst_17 {dimension_numbers = #tpu.dot_dimension_numbers<[1], [1], [0], [0], [0, 0, 1, 0], [], []>} : vector<8x8xf32>, vector<8x8xf32>, vector<8x8xf32> -> vector<8x8xf32>
    %cst_18 = arith.constant dense<0xFF800000> : vector<8xf32>
    %45 = vector.multi_reduction <maximumf>, %44, %cst_18 [1] : vector<8x8xf32> to vector<8xf32>
    %46 = vector.shape_cast %45 : vector<8xf32> to vector<8x1xf32>
    %47 = vector.broadcast %46 : vector<8x1xf32> to vector<8x8xf32>
    %48 = arith.subf %44, %47 : vector<8x8xf32>
    %49 = math.exp %48 : vector<8x8xf32>
    %cst_19 = arith.constant dense<0.000000e+00> : vector<8xf32>
    %50 = vector.multi_reduction <add>, %49, %cst_19 [1] : vector<8x8xf32> to vector<8xf32>
    %51 = vector.shape_cast %50 : vector<8xf32> to vector<8x1xf32>
    %52 = tpu.reciprocal %51 {approx = true} : vector<8x1xf32> -> vector<8x1xf32>
    %53 = vector.broadcast %52 : vector<8x1xf32> to vector<8x8xf32>
    %54 = arith.mulf %49, %53 : vector<8x8xf32>
    %cst_20 = arith.constant dense<0.000000e+00> : vector<8x8xf32>
    %55 = tpu.matmul %54, %43, %cst_20 {dimension_numbers = #tpu.dot_dimension_numbers<[1], [0], [0], [1], [0, 0, 1, 1], [], []>} : vector<8x8xf32>, vector<8x8xf32>, vector<8x8xf32> -> vector<8x8xf32>
    %56 = vector.extract_strided_slice %3 {offsets = [16, 0], sizes = [8, 32], strides = [1, 1]} : vector<32x32xf32> to vector<8x32xf32>
    %cst_21 = arith.constant dense<0.000000e+00> : vector<8x32xf32>
    %57 = tpu.matmul %55, %56, %cst_21 {dimension_numbers = #tpu.dot_dimension_numbers<[1], [0], [0], [1], [0, 0, 1, 1], [], []>} : vector<8x8xf32>, vector<8x32xf32>, vector<8x32xf32> -> vector<8x32xf32>
    %58 = arith.addf %40, %57 : vector<8x32xf32>
    %59 = vector.extract_strided_slice %0 {offsets = [0, 24], sizes = [8, 8], strides = [1, 1]} : vector<8x32xf32> to vector<8x8xf32>
    %60 = vector.extract_strided_slice %1 {offsets = [0, 24], sizes = [8, 8], strides = [1, 1]} : vector<8x32xf32> to vector<8x8xf32>
    %61 = vector.extract_strided_slice %2 {offsets = [0, 24], sizes = [8, 8], strides = [1, 1]} : vector<8x32xf32> to vector<8x8xf32>
    %cst_22 = arith.constant dense<0.000000e+00> : vector<8x8xf32>
    %62 = tpu.matmul %59, %60, %cst_22 {dimension_numbers = #tpu.dot_dimension_numbers<[1], [1], [0], [0], [0, 0, 1, 0], [], []>} : vector<8x8xf32>, vector<8x8xf32>, vector<8x8xf32> -> vector<8x8xf32>
    %cst_23 = arith.constant dense<0xFF800000> : vector<8xf32>
    %63 = vector.multi_reduction <maximumf>, %62, %cst_23 [1] : vector<8x8xf32> to vector<8xf32>
    %64 = vector.shape_cast %63 : vector<8xf32> to vector<8x1xf32>
    %65 = vector.broadcast %64 : vector<8x1xf32> to vector<8x8xf32>
    %66 = arith.subf %62, %65 : vector<8x8xf32>
    %67 = math.exp %66 : vector<8x8xf32>
    %cst_24 = arith.constant dense<0.000000e+00> : vector<8xf32>
    %68 = vector.multi_reduction <add>, %67, %cst_24 [1] : vector<8x8xf32> to vector<8xf32>
    %69 = vector.shape_cast %68 : vector<8xf32> to vector<8x1xf32>
    %70 = tpu.reciprocal %69 {approx = true} : vector<8x1xf32> -> vector<8x1xf32>
    %71 = vector.broadcast %70 : vector<8x1xf32> to vector<8x8xf32>
    %72 = arith.mulf %67, %71 : vector<8x8xf32>
    %cst_25 = arith.constant dense<0.000000e+00> : vector<8x8xf32>
    %73 = tpu.matmul %72, %61, %cst_25 {dimension_numbers = #tpu.dot_dimension_numbers<[1], [0], [0], [1], [0, 0, 1, 1], [], []>} : vector<8x8xf32>, vector<8x8xf32>, vector<8x8xf32> -> vector<8x8xf32>
    %74 = vector.extract_strided_slice %3 {offsets = [24, 0], sizes = [8, 32], strides = [1, 1]} : vector<32x32xf32> to vector<8x32xf32>
    %cst_26 = arith.constant dense<0.000000e+00> : vector<8x32xf32>
    %75 = tpu.matmul %73, %74, %cst_26 {dimension_numbers = #tpu.dot_dimension_numbers<[1], [0], [0], [1], [0, 0, 1, 1], [], []>} : vector<8x8xf32>, vector<8x32xf32>, vector<8x32xf32> -> vector<8x32xf32>
    %76 = arith.addf %58, %75 : vector<8x32xf32>
    %c0_27 = arith.constant 0 : index
    %c0_28 = arith.constant 0 : index
    %77 = vector.load %arg5[%c0_27, %c0_28] : memref<1x32xf32, #tpu.memory_space<vmem>>, vector<1x32xf32>
    %78 = vector.broadcast %77 : vector<1x32xf32> to vector<8x32xf32>
    %79 = arith.addf %76, %78 : vector<8x32xf32>
    %c0_29 = arith.constant 0 : index
    %c0_30 = arith.constant 0 : index
    %80 = vector.load %arg6[%c0_29, %c0_30] : memref<8x32xf32, #tpu.memory_space<vmem>>, vector<8x32xf32>
    tpu.vector_store %arg6[%c0_29, %c0_30], %79 {strides = array<i32>} : memref<8x32xf32, #tpu.memory_space<vmem>>, vector<8x32xf32>,
    return
  }
  func.func @transform_0(%arg0: i32) -> (i32, i32) {
    %c0_i32 = arith.constant 0 : i32
    %c0_i32_0 = arith.constant 0 : i32
    return %arg0, %c0_i32 : i32, i32
  }
  func.func @transform_1(%arg0: i32) -> (i32, i32) {
    %c0_i32 = arith.constant 0 : i32
    %c0_i32_0 = arith.constant 0 : i32
    return %arg0, %c0_i32 : i32, i32
  }
  func.func @transform_2(%arg0: i32) -> (i32, i32) {
    %c0_i32 = arith.constant 0 : i32
    %c0_i32_0 = arith.constant 0 : i32
    return %arg0, %c0_i32 : i32, i32
  }
  func.func @transform_3(%arg0: i32) -> (i32, i32) {
    %c0_i32 = arith.constant 0 : i32
    %c0_i32_0 = arith.constant 0 : i32
    %c0_i32_1 = arith.constant 0 : i32
    return %c0_i32, %c0_i32_0 : i32, i32
  }
  func.func @transform_4(%arg0: i32) -> (i32, i32) {
    %c0_i32 = arith.constant 0 : i32
    %c0_i32_0 = arith.constant 0 : i32
    %c0_i32_1 = arith.constant 0 : i32
    return %c0_i32, %c0_i32_0 : i32, i32
  }
  func.func @transform_5(%arg0: i32) -> (i32, i32) {
    %c0_i32 = arith.constant 0 : i32
    %c0_i32_0 = arith.constant 0 : i32
    return %arg0, %c0_i32 : i32, i32
  }
}

module attributes {stable_mosaic.version = 11 : i64} {
  func.func @kernel(%arg0: i32, %arg1: memref<2x256xf32, #tpu.memory_space<vmem>>, %arg2: memref<256x1024xbf16, #tpu.memory_space<vmem>>, %arg3: memref<1x1024xf32, #tpu.memory_space<vmem>>, %arg4: memref<1024x2xf32, #tpu.memory_space<vmem>>, %arg5: memref<1x2xf32, #tpu.memory_space<vmem>>, %arg6: memref<2x2xf32, #tpu.memory_space<vmem>>) attributes {dimension_semantics = [#tpu.dimension_semantics<arbitrary>], iteration_bounds = array<i64: 1>, scalar_prefetch = 0 : i64, scratch_operands = 0 : i64, tpu.core_type = #tpu.core_type<tc>, window_params = [{pipeline_mode = #tpu.pipeline_mode<synchronous>, transform_indices = @transform_0, window_bounds = array<i64: 2, 256>}, {pipeline_mode = #tpu.pipeline_mode<synchronous>, transform_indices = @transform_1, window_bounds = array<i64: 256, 1024>}, {pipeline_mode = #tpu.pipeline_mode<synchronous>, transform_indices = @transform_2, window_bounds = array<i64: 1, 1024>}, {pipeline_mode = #tpu.pipeline_mode<synchronous>, transform_indices = @transform_3, window_bounds = array<i64: 1024, 2>}, {pipeline_mode = #tpu.pipeline_mode<synchronous>, transform_indices = @transform_4, window_bounds = array<i64: 1, 2>}, {pipeline_mode = #tpu.pipeline_mode<synchronous>, transform_indices = @transform_5, window_bounds = array<i64: 2, 2>}]} {
    %c0 = arith.constant 0 : index
    %c0_0 = arith.constant 0 : index
    %0 = vector.load %arg1[%c0, %c0_0] : memref<2x256xf32, #tpu.memory_space<vmem>>, vector<2x256xf32>
    %1 = arith.truncf %0 : vector<2x256xf32> to vector<2x256xbf16>
    %c0_1 = arith.constant 0 : index
    %c0_2 = arith.constant 0 : index
    %2 = vector.load %arg2[%c0_1, %c0_2] : memref<256x1024xbf16, #tpu.memory_space<vmem>>, vector<256x1024xbf16>
    %cst = arith.constant dense<0.000000e+00> : vector<2x1024xf32>
    %3 = tpu.matmul %1, %2, %cst {dimension_numbers = #tpu.dot_dimension_numbers<[1], [0], [0], [1], [0, 0, 1, 1], [], []>} : vector<2x256xbf16>, vector<256x1024xbf16>, vector<2x1024xf32> -> vector<2x1024xf32>
    %c0_3 = arith.constant 0 : index
    %c0_4 = arith.constant 0 : index
    %4 = vector.load %arg3[%c0_3, %c0_4] : memref<1x1024xf32, #tpu.memory_space<vmem>>, vector<1x1024xf32>
    %5 = vector.broadcast %4 : vector<1x1024xf32> to vector<2x1024xf32>
    %6 = arith.addf %3, %5 : vector<2x1024xf32>
    %cst_5 = arith.constant 0.000000e+00 : f32
    %7 = vector.broadcast %cst_5 : f32 to vector<2x1024xf32>
    %8 = arith.maximumf %6, %7 : vector<2x1024xf32>
    %c0_6 = arith.constant 0 : index
    %c0_7 = arith.constant 0 : index
    %9 = vector.load %arg4[%c0_6, %c0_7] : memref<1024x2xf32, #tpu.memory_space<vmem>>, vector<1024x2xf32>
    %cst_8 = arith.constant dense<0.000000e+00> : vector<2x2xf32>
    %10 = tpu.matmul %8, %9, %cst_8 {dimension_numbers = #tpu.dot_dimension_numbers<[1], [0], [0], [1], [0, 0, 1, 1], [], []>} : vector<2x1024xf32>, vector<1024x2xf32>, vector<2x2xf32> -> vector<2x2xf32>
    %c0_9 = arith.constant 0 : index
    %c0_10 = arith.constant 0 : index
    %11 = vector.load %arg5[%c0_9, %c0_10] : memref<1x2xf32, #tpu.memory_space<vmem>>, vector<1x2xf32>
    %12 = vector.broadcast %11 : vector<1x2xf32> to vector<2x2xf32>
    %13 = arith.addf %10, %12 : vector<2x2xf32>
    %c0_11 = arith.constant 0 : index
    %c0_12 = arith.constant 0 : index
    %14 = vector.load %arg6[%c0_11, %c0_12] : memref<2x2xf32, #tpu.memory_space<vmem>>, vector<2x2xf32>
    tpu.vector_store %arg6[%c0_11, %c0_12], %13 {strides = array<i32>} : memref<2x2xf32, #tpu.memory_space<vmem>>, vector<2x2xf32>,
    return
  }
  func.func @transform_0(%arg0: i32) -> (i32, i32) {
    %c0_i32 = arith.constant 0 : i32
    %c0_i32_0 = arith.constant 0 : i32
    %c0_i32_1 = arith.constant 0 : i32
    return %c0_i32, %c0_i32_0 : i32, i32
  }
  func.func @transform_1(%arg0: i32) -> (i32, i32) {
    %c0_i32 = arith.constant 0 : i32
    %c0_i32_0 = arith.constant 0 : i32
    %c0_i32_1 = arith.constant 0 : i32
    return %c0_i32, %c0_i32_0 : i32, i32
  }
  func.func @transform_2(%arg0: i32) -> (i32, i32) {
    %c0_i32 = arith.constant 0 : i32
    %c0_i32_0 = arith.constant 0 : i32
    %c0_i32_1 = arith.constant 0 : i32
    return %c0_i32, %c0_i32_0 : i32, i32
  }
  func.func @transform_3(%arg0: i32) -> (i32, i32) {
    %c0_i32 = arith.constant 0 : i32
    %c0_i32_0 = arith.constant 0 : i32
    %c0_i32_1 = arith.constant 0 : i32
    return %c0_i32, %c0_i32_0 : i32, i32
  }
  func.func @transform_4(%arg0: i32) -> (i32, i32) {
    %c0_i32 = arith.constant 0 : i32
    %c0_i32_0 = arith.constant 0 : i32
    %c0_i32_1 = arith.constant 0 : i32
    return %c0_i32, %c0_i32_0 : i32, i32
  }
  func.func @transform_5(%arg0: i32) -> (i32, i32) {
    %c0_i32 = arith.constant 0 : i32
    %c0_i32_0 = arith.constant 0 : i32
    %c0_i32_1 = arith.constant 0 : i32
    return %c0_i32, %c0_i32_0 : i32, i32
  }
}

</mosaic_0001>

<llo_original>
// kernel: tile.23
$region0: #{tile.23}
  #allocation0 [shape = 's32[1]{0}', space=sflag, size = 0x4, scoped, tag = 'scoped memory for tile.23']
  %s0 = inlined_call_operand.vmem [shape: f32[32], index: 0, kind: input, shape index: {}]
  %s1 = inlined_call_operand.vmem [shape: f32[8,32], index: 1, kind: output, shape index: {}]
  // Predicated region
  $region2: #{tile.23} parent=0 // pred_check
    _
  $region3: #{tile.23} parent=0 // pred_check_branch
    %3 = sbr.rel (0) target = $region5
  $region4: #{tile.23} parent=0 // pred_region
    _
  $region5: #{tile.23} parent=0 // pred_fallthru
    _
  %v4 = vld [vmem:[%s0] ss:$0 sm:$0xff]
  %5 = vst [vmem:[%s1] sm:$0xff] %v4

// kernel: tile.24
$region0: #{tile.24}
  %s0 = inlined_call_operand.vmem [shape: f32[8,32], index: 0, kind: input, shape index: {}]
  %s1 = inlined_call_operand.vmem [shape: f32[256], index: 1, kind: output, shape index: {}]
  $region1: #{tile.24} parent=0
    #allocation0 [shape = 'u8[4096]{0}', space=vmem, size = 0x1000, scoped, tag = 'scoped mem for output reshape']
    %s2 = smov 3
    %v3 = vld [vmem:[%s0] ss:$4 sm:%s2]
    %vm4 = vcmask 261120
    %5 = vst.msk [vmem:[#allocation0] sm:$0x3] %vm4, %v3
    %s6 = scalar_lea.vmem %s0, 3
    %s7 = smov 3
    %v8 = vld [vmem:[%s6] ss:$4 sm:%s7]
    %9 = vrot.lane.b32.xlu0 %v8, 96
    %v10 = vpop.permute.xlu0 %9
    %vm11 = vcmask 1048320
    %12 = vst.msk [vmem:[#allocation0] sm:$0x3] %vm11, %v10
    %s13 = scalar_lea.vmem %s0, 2
    %s14 = smov 3
    %v15 = vld [vmem:[%s13] ss:$4 sm:%s14]
    %16 = vrot.lane.b32.xlu0 %v15, 64
    %v17 = vpop.permute.xlu0 %16
    %vm18 = vcmask 785920
    %19 = vst.msk [vmem:[#allocation0] sm:$0x3] %vm18, %v17
    %s20 = scalar_lea.vmem %s0, 1
    %s21 = smov 3
    %v22 = vld [vmem:[%s20] ss:$4 sm:%s21]
    %23 = vrot.lane.b32.xlu0 %v22, 32
    %v24 = vpop.permute.xlu0 %23
    %vm25 = vcmask 523520
    %26 = vst.msk [vmem:[#allocation0] sm:$0x3] %vm25, %v24
    %s28 = sshllo.u32 0, 2
    %v30 = vld [vmem:[#allocation0] sm:%s28]
    %s31 = sshllo.u32 0, 2
    %32 = vst [vmem:[%s1] sm:%s31] %v30

// kernel: attn_net_forward.4
$region0: #{attn_net_forward.4}
  #allocation0 [shape = 'u32[]', space=smem, size = 0x4, offset = 0x4, fixed_abs, tag = 'smem constant byte address 0x4 - core index']
  #allocation1 [shape = 'u32[144,128]{1,0:T(1,128)}', space=vmem, size = 0x12000, scoped, tag = 'internal scratch']
  %s0 = inlined_call_operand.vmem [shape: f32[16,32], index: 0, kind: input, shape index: {}]
  %s1 = inlined_call_operand.vmem [shape: f32[16,32], index: 1, kind: input, shape index: {}]
  %s2 = inlined_call_operand.vmem [shape: f32[16,32], index: 2, kind: input, shape index: {}]
  %s3 = inlined_call_operand.vmem [shape: f32[32,32], index: 3, kind: input, shape index: {}]
  %s4 = inlined_call_operand.vmem [shape: f32[1,32], index: 4, kind: input, shape index: {}]
  %s5 = inlined_call_operand.vmem [shape: f32[16,32], index: 5, kind: output, shape index: {}]
  %s6 = sld [smem:[#allocation0]]
  $region53: #{attn_net_forward.4} parent=0
    _
  %s8 = ssub.s32 1, %s6
  %s9 = scalar_select 0, %s8, %s6
  loop: start=0, step=1, limit=4
  $region2: #{attn_net_forward.4} parent=0 // loop_pre_header
    _
  $region3: #{attn_net_forward.4} parent=0 // loop_header
    %s11 = sphi 0, %s15
    %p12 = scmp.ge.s32.totalorder %s11, 4
    %s21 = sphi 0, %s23
    %s24 = sphi 0, %s21
    %s25 = sphi 0, %s24
    %s41 = sphi 0, %s25
    %s47 = sphi 0, %s49
    %s50 = sphi 0, %s47
    %s51 = sphi 0, %s50
    %s67 = sphi 0, %s51
    %s73 = sphi 0, %s75
    %s76 = sphi 0, %s73
    %s77 = sphi 0, %s76
    %s93 = sphi 0, %s77
    %s97 = sphi 0, %s97
    %s99 = sphi 0, %s97
    %s100 = sphi 0, %s99
    %s114 = sphi 0, %s100
    %s118 = sphi 0, %s118
    %s120 = sphi 0, %s118
    %s121 = sphi 0, %s120
    %s135 = sphi 0, %s121
    %s141 = sphi 0, %s143
    %s144 = sphi 0, %s141
    %s145 = sphi 0, %s144
    %s161 = sphi 0, %s145
  $region4: #{attn_net_forward.4} parent=0 // loop_header_branch
    %14 = sbr.rel (%p12) target = $region8
  $region5: #{attn_net_forward.4} parent=0 // loop_body
    %s16 = ssub.s32 %s11, 1
    %s17 = ssub.s32 %s11, 2
    %s18 = sadd.s32 %s11, 1
    %s19 = ssub.s32 %s11, %s18
    %p20 = scmp.eq.s32.totalorder %s19, 0
    %s22 = sadd.s32 %s21, 1
    %s23 = scalar_select %p20, %s21, %s22
    %p26 = pneg %p20
    %p27 = scmp.eq.s32.totalorder %s11, 1
    %p28 = por %p26, %p27
    %p29 = scmp.ne.s32.totalorder %s21, %s24
    %p30 = scmp.eq.s32.totalorder %s11, 0
    %p31 = por %p29, %p30
    %p32 = scmp.ne.s32.totalorder %s21, %s24
    %p33 = scmp.eq.s32.totalorder %s16, 1
    %p34 = por %p32, %p33
    %p35 = scmp.ne.s32.totalorder %s24, %s25
    %p36 = scmp.eq.s32.totalorder %s16, 0
    %p37 = por %p35, %p36
    %p38 = scmp.ne.s32.totalorder %s24, %s25
    %p39 = scmp.eq.s32.totalorder %s17, 1
    %p40 = por %p38, %p39
    %p42 = scmp.ne.s32.totalorder %s25, %s41
    %p43 = scmp.eq.s32.totalorder %s17, 0
    %p44 = por %p42, %p43
    %s45 = ssub.s32 %s11, %s18
    %p46 = scmp.eq.s32.totalorder %s45, 0
    %s48 = sadd.s32 %s47, 1
    %s49 = scalar_select %p46, %s47, %s48
    %p52 = pneg %p46
    %p53 = scmp.eq.s32.totalorder %s11, 1
    %p54 = por %p52, %p53
    %p55 = scmp.ne.s32.totalorder %s47, %s50
    %p56 = scmp.eq.s32.totalorder %s11, 0
    %p57 = por %p55, %p56
    %p58 = scmp.ne.s32.totalorder %s47, %s50
    %p59 = scmp.eq.s32.totalorder %s16, 1
    %p60 = por %p58, %p59
    %p61 = scmp.ne.s32.totalorder %s50, %s51
    %p62 = scmp.eq.s32.totalorder %s16, 0
    %p63 = por %p61, %p62
    %p64 = scmp.ne.s32.totalorder %s50, %s51
    %p65 = scmp.eq.s32.totalorder %s17, 1
    %p66 = por %p64, %p65
    %p68 = scmp.ne.s32.totalorder %s51, %s67
    %p69 = scmp.eq.s32.totalorder %s17, 0
    %p70 = por %p68, %p69
    %s71 = ssub.s32 %s11, %s18
    %p72 = scmp.eq.s32.totalorder %s71, 0
    %s74 = sadd.s32 %s73, 1
    %s75 = scalar_select %p72, %s73, %s74
    %p78 = pneg %p72
    %p79 = scmp.eq.s32.totalorder %s11, 1
    %p80 = por %p78, %p79
    %p81 = scmp.ne.s32.totalorder %s73, %s76
    %p82 = scmp.eq.s32.totalorder %s11, 0
    %p83 = por %p81, %p82
    %p84 = scmp.ne.s32.totalorder %s73, %s76
    %p85 = scmp.eq.s32.totalorder %s16, 1
    %p86 = por %p84, %p85
    %p87 = scmp.ne.s32.totalorder %s76, %s77
    %p88 = scmp.eq.s32.totalorder %s16, 0
    %p89 = por %p87, %p88
    %p90 = scmp.ne.s32.totalorder %s76, %s77
    %p91 = scmp.eq.s32.totalorder %s17, 1
    %p92 = por %p90, %p91
    %p94 = scmp.ne.s32.totalorder %s77, %s93
    %p95 = scmp.eq.s32.totalorder %s17, 0
    %p96 = por %p94, %p95
    %s98 = sadd.s32 %s97, 1
    %p101 = scmp.eq.s32.totalorder %s11, 1
    %p102 = scmp.ne.s32.totalorder %s97, %s99
    %p103 = scmp.eq.s32.totalorder %s11, 0
    %p104 = por %p102, %p103
    %p105 = scmp.ne.s32.totalorder %s97, %s99
    %p106 = scmp.eq.s32.totalorder %s16, 1
    %p107 = por %p105, %p106
    %p108 = scmp.ne.s32.totalorder %s99, %s100
    %p109 = scmp.eq.s32.totalorder %s16, 0
    %p110 = por %p108, %p109
    %p111 = scmp.ne.s32.totalorder %s99, %s100
    %p112 = scmp.eq.s32.totalorder %s17, 1
    %p113 = por %p111, %p112
    %p115 = scmp.ne.s32.totalorder %s100, %s114
    %p116 = scmp.eq.s32.totalorder %s17, 0
    %p117 = por %p115, %p116
    %s119 = sadd.s32 %s118, 1
    %p122 = scmp.eq.s32.totalorder %s11, 1
    %p123 = scmp.ne.s32.totalorder %s118, %s120
    %p124 = scmp.eq.s32.totalorder %s11, 0
    %p125 = por %p123, %p124
    %p126 = scmp.ne.s32.totalorder %s118, %s120
    %p127 = scmp.eq.s32.totalorder %s16, 1
    %p128 = por %p126, %p127
    %p129 = scmp.ne.s32.totalorder %s120, %s121
    %p130 = scmp.eq.s32.totalorder %s16, 0
    %p131 = por %p129, %p130
    %p132 = scmp.ne.s32.totalorder %s120, %s121
    %p133 = scmp.eq.s32.totalorder %s17, 1
    %p134 = por %p132, %p133
    %p136 = scmp.ne.s32.totalorder %s121, %s135
    %p137 = scmp.eq.s32.totalorder %s17, 0
    %p138 = por %p136, %p137
    %s139 = ssub.s32 %s11, %s18
    %p140 = scmp.eq.s32.totalorder %s139, 0
    %s142 = sadd.s32 %s141, 1
    %s143 = scalar_select %p140, %s141, %s142
    %p146 = pneg %p140
    %p147 = scmp.eq.s32.totalorder %s11, 1
    %p148 = por %p146, %p147
    %p149 = scmp.ne.s32.totalorder %s141, %s144
    %p150 = scmp.eq.s32.totalorder %s11, 0
    %p151 = por %p149, %p150
    %p152 = scmp.ne.s32.totalorder %s141, %s144
    %p153 = scmp.eq.s32.totalorder %s16, 1
    %p154 = por %p152, %p153
    %p155 = scmp.ne.s32.totalorder %s144, %s145
    %p156 = scmp.eq.s32.totalorder %s16, 0
    %p157 = por %p155, %p156
    %p158 = scmp.ne.s32.totalorder %s144, %s145
    %p159 = scmp.eq.s32.totalorder %s17, 1
    %p160 = por %p158, %p159
    %p162 = scmp.ne.s32.totalorder %s145, %s161
    %p163 = scmp.eq.s32.totalorder %s17, 0
    %p164 = por %p162, %p163
    %p165 = scmp.le.s32.totalorder 1, %s11
    %p166 = scmp.lt.s32.totalorder %s11, 3
    %p167 = pnand %p165, %p166
    %p168 = pneg %p167
    // Predicated region
    $region9: #{attn_net_forward.4} parent=5 // pred_check
      _
    $region10: #{attn_net_forward.4} parent=5 // pred_check_branch
      %170 = sbr.rel (%p167) target = $region12
    $region11: #{attn_net_forward.4} parent=5 // pred_region
      %s171 = ssub.s32 %s11, 1
      // Predicated region
      $region13: #{attn_net_forward.4} parent=11 // pred_check
        %p172 = pneg %p110
      $region14: #{attn_net_forward.4} parent=11 // pred_check_branch
        %174 = sbr.rel (%p172) target = $region16
      $region15: #{attn_net_forward.4} parent=11 // pred_region
        _
      $region16: #{attn_net_forward.4} parent=11 // pred_fallthru
        _
      // Predicated region
      $region17: #{attn_net_forward.4} parent=11 // pred_check
        %p175 = pneg %p131
      $region18: #{attn_net_forward.4} parent=11 // pred_check_branch
        %177 = sbr.rel (%p175) target = $region20
      $region19: #{attn_net_forward.4} parent=11 // pred_region
        _
      $region20: #{attn_net_forward.4} parent=11 // pred_fallthru
        _
    $region12: #{attn_net_forward.4} parent=5 // pred_fallthru
      _
    %p178 = scmp.lt.s32.totalorder %s11, 2
    // Predicated region
    $region21: #{attn_net_forward.4} parent=5 // pred_check
      %p179 = pneg %p178
    $region22: #{attn_net_forward.4} parent=5 // pred_check_branch
      %181 = sbr.rel (%p179) target = $region24
    $region23: #{attn_net_forward.4} parent=5 // pred_region
      // Predicated region
      $region25: #{attn_net_forward.4} parent=23 // pred_check
        %p182 = pneg %p31
      $region26: #{attn_net_forward.4} parent=23 // pred_check_branch
        %184 = sbr.rel (%p182) target = $region28
      $region27: #{attn_net_forward.4} parent=23 // pred_region
        %p185 = scmp.lt.s32.totalorder %s11, 1
        %s186 = scalar_select %p185, %s11, 1
        %s187 = smul.addr %s186, 8
        %s188 = scalar_lea.vmem %s0, %s187
      $region28: #{attn_net_forward.4} parent=23 // pred_fallthru
        _
      // Predicated region
      $region29: #{attn_net_forward.4} parent=23 // pred_check
        %p189 = pneg %p57
      $region30: #{attn_net_forward.4} parent=23 // pred_check_branch
        %191 = sbr.rel (%p189) target = $region32
      $region31: #{attn_net_forward.4} parent=23 // pred_region
        %p192 = scmp.lt.s32.totalorder %s11, 1
        %s193 = scalar_select %p192, %s11, 1
        %s194 = smul.addr %s193, 8
        %s195 = scalar_lea.vmem %s1, %s194
      $region32: #{attn_net_forward.4} parent=23 // pred_fallthru
        _
      // Predicated region
      $region33: #{attn_net_forward.4} parent=23 // pred_check
        %p196 = pneg %p83
      $region34: #{attn_net_forward.4} parent=23 // pred_check_branch
        %198 = sbr.rel (%p196) target = $region36
      $region35: #{attn_net_forward.4} parent=23 // pred_region
        %p199 = scmp.lt.s32.totalorder %s11, 1
        %s200 = scalar_select %p199, %s11, 1
        %s201 = smul.addr %s200, 8
        %s202 = scalar_lea.vmem %s2, %s201
      $region36: #{attn_net_forward.4} parent=23 // pred_fallthru
        _
    $region24: #{attn_net_forward.4} parent=5 // pred_fallthru
      _
    %p203 = scmp.le.s32.totalorder 1, %s11
    %p204 = scmp.lt.s32.totalorder %s11, 3
    %p205 = pnand %p203, %p204
    %p206 = pneg %p205
    // Predicated region
    $region37: #{attn_net_forward.4} parent=5 // pred_check
      _
    $region38: #{attn_net_forward.4} parent=5 // pred_check_branch
      %208 = sbr.rel (%p205) target = $region40
    $region39: #{attn_net_forward.4} parent=5 // pred_region
      %s209 = ssub.s32 %s11, 1
      %p210 = scmp.lt.s32.totalorder %s16, 1
      %s211 = scalar_select %p210, %s16, 1
      %s212 = smul.addr %s211, 8
      %s213 = scalar_lea.vmem %s0, %s212
      %p214 = pneg %p37
      %p215 = pneg %p34
      %p216 = scmp.lt.s32.totalorder %s16, 1
      %s217 = scalar_select %p216, %s16, 1
      %s218 = smul.addr %s217, 8
      %s219 = scalar_lea.vmem %s1, %s218
      %p220 = pneg %p63
      %p221 = pneg %p60
      %p222 = scmp.lt.s32.totalorder %s16, 1
      %s223 = scalar_select %p222, %s16, 1
      %s224 = smul.addr %s223, 8
      %s225 = scalar_lea.vmem %s2, %s224
      %p226 = pneg %p89
      %p227 = pneg %p86
      %p228 = pneg %p110
      %p229 = pneg %p107
      %p230 = pneg %p131
      %p231 = pneg %p128
      %p232 = pneg %p157
      %p233 = pneg %p154
      %p234 = scmp.lt.s32.totalorder %s16, 1
      %s235 = scalar_select %p234, %s16, 1
      %s236 = smul.addr %s235, 8
      %s237 = scalar_lea.vmem %s5, %s236
      %p238 = scmp.lt.s32.totalorder %s16, 1
      %s239 = scalar_select %p238, %s16, 1
      %s240 = smul.addr %s239, 8
      %s241 = scalar_lea.vmem %s0, %s240
      %p242 = scmp.lt.s32.totalorder %s16, 1
      %s243 = scalar_select %p242, %s16, 1
      %s244 = smul.addr %s243, 8
      %s245 = scalar_lea.vmem %s1, %s244
      %p246 = scmp.lt.s32.totalorder %s16, 1
      %s247 = scalar_select %p246, %s16, 1
      %s248 = smul.addr %s247, 8
      %s249 = scalar_lea.vmem %s2, %s248
      %p250 = scmp.lt.s32.totalorder %s16, 1
      %s251 = scalar_select %p250, %s16, 1
      %s252 = smul.addr %s251, 8
      %s253 = scalar_lea.vmem %s5, %s252
      %v254 = vld [vmem:[%s241] sm:$0xff]
      %v255 = vld [vmem:[%s245] sm:$0xff]
      %v256 = vld [vmem:[%s249] sm:$0xff]
      %v257 = vld [vmem:[%s3] sm:$0xff]
      %v258 = vld [vmem:[%s3 + $0x8] sm:$0xff]
      %v259 = vld [vmem:[%s3 + $0x10] sm:$0xff]
      %v260 = vld [vmem:[%s3 + $0x18] sm:$0xff]
      %vm261 = vcmask 64512
      %v263 = vsel %vm261, %v254, 0
      %v266 = vsel %vm261, %v255, 0
      %268 = vmatprep.subr.mxu0 0.0
      %269 = vmatpush1.xpose.msra.mxu0 %v266
      %270 = vmatprep.subr.mxu0 0.0
      %271 = vmatpush1.xpose.msra.mxu0 0.0
      %272 = vmatprep.subr.mxu0 0.0
      %273 = vmatpush1.xpose.msra.mxu0 0.0
      %274 = vmatprep.subr.mxu0 0.0
      %275 = vmatpush1.xpose.msra.mxu0 0.0
      %276 = vmatprep.subr.mxu0 0.0
      %277 = vmatpush1.xpose.msra.mxu0 0.0
      %278 = vmatprep.subr.mxu0 0.0
      %279 = vmatpush1.xpose.msra.mxu0 0.0
      %280 = vmatprep.subr.mxu0 0.0
      %281 = vmatpush1.xpose.msra.mxu0 0.0
      %282 = vmatprep.subr.mxu0 0.0
      %283 = vmatpush1.xpose.msra.mxu0 0.0
      %284 = vmatprep.subr.mxu0 0.0
      %285 = vmatpush1.xpose.msra.mxu0 0.0
      %286 = vmatprep.subr.mxu0 0.0
      %287 = vmatpush1.xpose.msra.mxu0 0.0
      %288 = vmatprep.subr.mxu0 0.0
      %289 = vmatpush1.xpose.msra.mxu0 0.0
      %290 = vmatprep.subr.mxu0 0.0
      %291 = vmatpush1.xpose.msra.mxu0 0.0
      %292 = vmatprep.subr.mxu0 0.0
      %293 = vmatpush1.xpose.msra.mxu0 0.0
      %294 = vmatprep.subr.mxu0 0.0
      %295 = vmatpush1.xpose.msra.mxu0 0.0
      %296 = vmatprep.subr.mxu0 0.0
      %297 = vmatpush1.xpose.msra.mxu0 0.0
      %298 = vmatprep.subr.mxu0 0.0
      %299 = vmatpush1.xpose.msra.mxu0 0.0
      %300 = vmatprep.subr.mxu0 0.0
      %301 = vmatpush1.xpose.msra.mxu0 0.0
      %302 = vmatprep.subr.mxu0 0.0
      %303 = vmatpush1.xpose.msra.mxu0 0.0
      %304 = vmatprep.subr.mxu0 0.0
      %305 = vmatpush1.xpose.msra.mxu0 0.0
      %306 = vmatprep.subr.mxu0 0.0
      %307 = vmatpush1.xpose.msra.mxu0 0.0
      %308 = vmatprep.subr.mxu0 0.0
      %309 = vmatpush1.xpose.msra.mxu0 0.0
      %310 = vmatprep.subr.mxu0 0.0
      %311 = vmatpush1.xpose.msra.mxu0 0.0
      %312 = vmatprep.subr.mxu0 0.0
      %313 = vmatpush1.xpose.msra.mxu0 0.0
      %314 = vmatprep.subr.mxu0 0.0
      %315 = vmatpush1.xpose.msra.mxu0 0.0
      %316 = vmatprep.subr.mxu0 0.0
      %317 = vmatpush1.xpose.msra.mxu0 0.0
      %318 = vmatprep.subr.mxu0 0.0
      %319 = vmatpush1.xpose.msra.mxu0 0.0
      %320 = vmatprep.subr.mxu0 0.0
      %321 = vmatpush1.xpose.msra.mxu0 0.0
      %322 = vmatprep.subr.mxu0 0.0
      %323 = vmatpush1.xpose.msra.mxu0 0.0
      %324 = vmatprep.subr.mxu0 0.0
      %325 = vmatpush1.xpose.msra.mxu0 0.0
      %326 = vmatprep.subr.mxu0 0.0
      %327 = vmatpush1.xpose.msra.mxu0 0.0
      %328 = vmatprep.subr.mxu0 0.0
      %329 = vmatpush1.xpose.msra.mxu0 0.0
      %330 = vmatprep.subr.mxu0 0.0
      %331 = vmatpush1.xpose.msra.mxu0 0.0
      %332 = vmatprep.mubr.f32.mxu0 0.0
      %333 = vmatmul.mubr.f32.gmra.mrb[0].mxu0 %v263
      %v334 = vpop.f32.mrb[0].mxu0
      %v335 = vadd.f32 0.0, %v334
      %v336 = vpop.f32.mrb[0].mxu0
      %337 = vdwg.mxu0
      %v338 = vsel %vm261, %v335, -inf
      %339 = vmax.xlane.f32.xlu0 %v338
      %v340 = vpop.xlane.xlu0 %339
      %v341 = vsub.f32 %v335, %v340
      %v342 = vmul.f32 %v341, 1.442695
      %v343 = vpow.pop %v342
      %v344 = vsel %vm261, %v343, 0.0
      %345 = vadd.xlane.f32.xlu0 %v344
      %v346 = vpop.xlane.xlu0 %345
      %v347 = vrcp.pop %v346
      %v348 = vmul.f32 %v343, %v347
      %v350 = vsel %vm261, %v348, 0
      %352 = vmatprep.subr.mxu0 0.0
      %353 = vmatpush1.msra.mxu0 %v256
      %354 = vmatprep.subr.mxu0 0.0
      %355 = vmatpush1.msra.mxu0 0.0
      %356 = vmatprep.subr.mxu0 0.0
      %357 = vmatpush1.msra.mxu0 0.0
      %358 = vmatprep.subr.mxu0 0.0
      %359 = vmatpush1.msra.mxu0 0.0
      %360 = vmatprep.subr.mxu0 0.0
      %361 = vmatpush1.msra.mxu0 0.0
      %362 = vmatprep.subr.mxu0 0.0
      %363 = vmatpush1.msra.mxu0 0.0
      %364 = vmatprep.subr.mxu0 0.0
      %365 = vmatpush1.msra.mxu0 0.0
      %366 = vmatprep.subr.mxu0 0.0
      %367 = vmatpush1.msra.mxu0 0.0
      %368 = vmatprep.subr.mxu0 0.0
      %369 = vmatpush1.msra.mxu0 0.0
      %370 = vmatprep.subr.mxu0 0.0
      %371 = vmatpush1.msra.mxu0 0.0
      %372 = vmatprep.subr.mxu0 0.0
      %373 = vmatpush1.msra.mxu0 0.0
      %374 = vmatprep.subr.mxu0 0.0
      %375 = vmatpush1.msra.mxu0 0.0
      %376 = vmatprep.subr.mxu0 0.0
      %377 = vmatpush1.msra.mxu0 0.0
      %378 = vmatprep.subr.mxu0 0.0
      %379 = vmatpush1.msra.mxu0 0.0
      %380 = vmatprep.subr.mxu0 0.0
      %381 = vmatpush1.msra.mxu0 0.0
      %382 = vmatprep.subr.mxu0 0.0
      %383 = vmatpush1.msra.mxu0 0.0
      %384 = vmatprep.subr.mxu0 0.0
      %385 = vmatpush1.msra.mxu0 0.0
      %386 = vmatprep.subr.mxu0 0.0
      %387 = vmatpush1.msra.mxu0 0.0
      %388 = vmatprep.subr.mxu0 0.0
      %389 = vmatpush1.msra.mxu0 0.0
      %390 = vmatprep.subr.mxu0 0.0
      %391 = vmatpush1.msra.mxu0 0.0
      %392 = vmatprep.subr.mxu0 0.0
      %393 = vmatpush1.msra.mxu0 0.0
      %394 = vmatprep.subr.mxu0 0.0
      %395 = vmatpush1.msra.mxu0 0.0
      %396 = vmatprep.subr.mxu0 0.0
      %397 = vmatpush1.msra.mxu0 0.0
      %398 = vmatprep.subr.mxu0 0.0
      %399 = vmatpush1.msra.mxu0 0.0
      %400 = vmatprep.subr.mxu0 0.0
      %401 = vmatpush1.msra.mxu0 0.0
      %402 = vmatprep.subr.mxu0 0.0
      %403 = vmatpush1.msra.mxu0 0.0
      %404 = vmatprep.subr.mxu0 0.0
      %405 = vmatpush1.msra.mxu0 0.0
      %406 = vmatprep.subr.mxu0 0.0
      %407 = vmatpush1.msra.mxu0 0.0
      %408 = vmatprep.subr.mxu0 0.0
      %409 = vmatpush1.msra.mxu0 0.0
      %410 = vmatprep.subr.mxu0 0.0
      %411 = vmatpush1.msra.mxu0 0.0
      %412 = vmatprep.subr.mxu0 0.0
      %413 = vmatpush1.msra.mxu0 0.0
      %414 = vmatprep.subr.mxu0 0.0
      %415 = vmatpush1.msra.mxu0 0.0
      %416 = vmatprep.mubr.f32.mxu0 0.0
      %417 = vmatmul.mubr.f32.gmra.mrb[0].mxu0 %v350
      %v418 = vpop.f32.mrb[0].mxu0
      %v419 = vadd.f32 0.0, %v418
      %v420 = vpop.f32.mrb[0].mxu0
      %421 = vdwg.mxu0
      %422 = vrot.lane.b32.xlu0 %v254, 120
      %v423 = vpop.permute.xlu0 %422
      %424 = vrot.lane.b32.xlu0 %v255, 120
      %v425 = vpop.permute.xlu0 %424
      %v426 = vsel %vm261, %v423, 0
      %v428 = vsel %vm261, %v425, 0
      %430 = vmatprep.subr.mxu0 0.0
      %431 = vmatpush1.xpose.msra.mxu0 %v428
      %432 = vmatprep.subr.mxu0 0.0
      %433 = vmatpush1.xpose.msra.mxu0 0.0
      %434 = vmatprep.subr.mxu0 0.0
      %435 = vmatpush1.xpose.msra.mxu0 0.0
      %436 = vmatprep.subr.mxu0 0.0
      %437 = vmatpush1.xpose.msra.mxu0 0.0
      %438 = vmatprep.subr.mxu0 0.0
      %439 = vmatpush1.xpose.msra.mxu0 0.0
      %440 = vmatprep.subr.mxu0 0.0
      %441 = vmatpush1.xpose.msra.mxu0 0.0
      %442 = vmatprep.subr.mxu0 0.0
      %443 = vmatpush1.xpose.msra.mxu0 0.0
      %444 = vmatprep.subr.mxu0 0.0
      %445 = vmatpush1.xpose.msra.mxu0 0.0
      %446 = vmatprep.subr.mxu0 0.0
      %447 = vmatpush1.xpose.msra.mxu0 0.0
      %448 = vmatprep.subr.mxu0 0.0
      %449 = vmatpush1.xpose.msra.mxu0 0.0
      %450 = vmatprep.subr.mxu0 0.0
      %451 = vmatpush1.xpose.msra.mxu0 0.0
      %452 = vmatprep.subr.mxu0 0.0
      %453 = vmatpush1.xpose.msra.mxu0 0.0
      %454 = vmatprep.subr.mxu0 0.0
      %455 = vmatpush1.xpose.msra.mxu0 0.0
      %456 = vmatprep.subr.mxu0 0.0
      %457 = vmatpush1.xpose.msra.mxu0 0.0
      %458 = vmatprep.subr.mxu0 0.0
      %459 = vmatpush1.xpose.msra.mxu0 0.0
      %460 = vmatprep.subr.mxu0 0.0
      %461 = vmatpush1.xpose.msra.mxu0 0.0
      %462 = vmatprep.subr.mxu0 0.0
      %463 = vmatpush1.xpose.msra.mxu0 0.0
      %464 = vmatprep.subr.mxu0 0.0
      %465 = vmatpush1.xpose.msra.mxu0 0.0
      %466 = vmatprep.subr.mxu0 0.0
      %467 = vmatpush1.xpose.msra.mxu0 0.0
      %468 = vmatprep.subr.mxu0 0.0
      %469 = vmatpush1.xpose.msra.mxu0 0.0
      %470 = vmatprep.subr.mxu0 0.0
      %471 = vmatpush1.xpose.msra.mxu0 0.0
      %472 = vmatprep.subr.mxu0 0.0
      %473 = vmatpush1.xpose.msra.mxu0 0.0
      %474 = vmatprep.subr.mxu0 0.0
      %475 = vmatpush1.xpose.msra.mxu0 0.0
      %476 = vmatprep.subr.mxu0 0.0
      %477 = vmatpush1.xpose.msra.mxu0 0.0
      %478 = vmatprep.subr.mxu0 0.0
      %479 = vmatpush1.xpose.msra.mxu0 0.0
      %480 = vmatprep.subr.mxu0 0.0
      %481 = vmatpush1.xpose.msra.mxu0 0.0
      %482 = vmatprep.subr.mxu0 0.0
      %483 = vmatpush1.xpose.msra.mxu0 0.0
      %484 = vmatprep.subr.mxu0 0.0
      %485 = vmatpush1.xpose.msra.mxu0 0.0
      %486 = vmatprep.subr.mxu0 0.0
      %487 = vmatpush1.xpose.msra.mxu0 0.0
      %488 = vmatprep.subr.mxu0 0.0
      %489 = vmatpush1.xpose.msra.mxu0 0.0
      %490 = vmatprep.subr.mxu0 0.0
      %491 = vmatpush1.xpose.msra.mxu0 0.0
      %492 = vmatprep.subr.mxu0 0.0
      %493 = vmatpush1.xpose.msra.mxu0 0.0
      %494 = vmatprep.mubr.f32.mxu0 0.0
      %495 = vmatmul.mubr.f32.gmra.mrb[0].mxu0 %v426
      %v496 = vpop.f32.mrb[0].mxu0
      %v497 = vadd.f32 0.0, %v496
      %v498 = vpop.f32.mrb[0].mxu0
      %499 = vdwg.mxu0
      %v500 = vsel %vm261, %v497, -inf
      %501 = vmax.xlane.f32.xlu0 %v500
      %v502 = vpop.xlane.xlu0 %501
      %v503 = vsub.f32 %v497, %v502
      %v504 = vmul.f32 %v503, 1.442695
      %v505 = vpow.pop %v504
      %v506 = vsel %vm261, %v505, 0.0
      %507 = vadd.xlane.f32.xlu0 %v506
      %v508 = vpop.xlane.xlu0 %507
      %v509 = vrcp.pop %v508
      %v510 = vmul.f32 %v505, %v509
      %512 = vrot.lane.b32.xlu0 %v256, 120
      %v513 = vpop.permute.xlu0 %512
      %v516 = vsel %vm261, %v510, 0
      %518 = vmatprep.subr.mxu0 0.0
      %519 = vmatpush1.msra.mxu0 %v513
      %520 = vmatprep.subr.mxu0 0.0
      %521 = vmatpush1.msra.mxu0 0.0
      %522 = vmatprep.subr.mxu0 0.0
      %523 = vmatpush1.msra.mxu0 0.0
      %524 = vmatprep.subr.mxu0 0.0
      %525 = vmatpush1.msra.mxu0 0.0
      %526 = vmatprep.subr.mxu0 0.0
      %527 = vmatpush1.msra.mxu0 0.0
      %528 = vmatprep.subr.mxu0 0.0
      %529 = vmatpush1.msra.mxu0 0.0
      %530 = vmatprep.subr.mxu0 0.0
      %531 = vmatpush1.msra.mxu0 0.0
      %532 = vmatprep.subr.mxu0 0.0
      %533 = vmatpush1.msra.mxu0 0.0
      %534 = vmatprep.subr.mxu0 0.0
      %535 = vmatpush1.msra.mxu0 0.0
      %536 = vmatprep.subr.mxu0 0.0
      %537 = vmatpush1.msra.mxu0 0.0
      %538 = vmatprep.subr.mxu0 0.0
      %539 = vmatpush1.msra.mxu0 0.0
      %540 = vmatprep.subr.mxu0 0.0
      %541 = vmatpush1.msra.mxu0 0.0
      %542 = vmatprep.subr.mxu0 0.0
      %543 = vmatpush1.msra.mxu0 0.0
      %544 = vmatprep.subr.mxu0 0.0
      %545 = vmatpush1.msra.mxu0 0.0
      %546 = vmatprep.subr.mxu0 0.0
      %547 = vmatpush1.msra.mxu0 0.0
      %548 = vmatprep.subr.mxu0 0.0
      %549 = vmatpush1.msra.mxu0 0.0
      %550 = vmatprep.subr.mxu0 0.0
      %551 = vmatpush1.msra.mxu0 0.0
      %552 = vmatprep.subr.mxu0 0.0
      %553 = vmatpush1.msra.mxu0 0.0
      %554 = vmatprep.subr.mxu0 0.0
      %555 = vmatpush1.msra.mxu0 0.0
      %556 = vmatprep.subr.mxu0 0.0
      %557 = vmatpush1.msra.mxu0 0.0
      %558 = vmatprep.subr.mxu0 0.0
      %559 = vmatpush1.msra.mxu0 0.0
      %560 = vmatprep.subr.mxu0 0.0
      %561 = vmatpush1.msra.mxu0 0.0
      %562 = vmatprep.subr.mxu0 0.0
      %563 = vmatpush1.msra.mxu0 0.0
      %564 = vmatprep.subr.mxu0 0.0
      %565 = vmatpush1.msra.mxu0 0.0
      %566 = vmatprep.subr.mxu0 0.0
      %567 = vmatpush1.msra.mxu0 0.0
      %568 = vmatprep.subr.mxu0 0.0
      %569 = vmatpush1.msra.mxu0 0.0
      %570 = vmatprep.subr.mxu0 0.0
      %571 = vmatpush1.msra.mxu0 0.0
      %572 = vmatprep.subr.mxu0 0.0
      %573 = vmatpush1.msra.mxu0 0.0
      %574 = vmatprep.subr.mxu0 0.0
      %575 = vmatpush1.msra.mxu0 0.0
      %576 = vmatprep.subr.mxu0 0.0
      %577 = vmatpush1.msra.mxu0 0.0
      %578 = vmatprep.subr.mxu0 0.0
      %579 = vmatpush1.msra.mxu0 0.0
      %580 = vmatprep.subr.mxu0 0.0
      %581 = vmatpush1.msra.mxu0 0.0
      %582 = vmatprep.mubr.f32.mxu0 0.0
      %583 = vmatmul.mubr.f32.gmra.mrb[0].mxu0 %v516
      %v584 = vpop.f32.mrb[0].mxu0
      %v585 = vadd.f32 0.0, %v584
      %v586 = vpop.f32.mrb[0].mxu0
      %587 = vdwg.mxu0
      %v589 = vsel %vm261, %v585, 0
      %591 = vmatprep.subr.mxu0 0.0
      %592 = vmatpush1.msra.mxu0 %v258
      %593 = vmatprep.subr.mxu0 0.0
      %594 = vmatpush1.msra.mxu0 0.0
      %595 = vmatprep.subr.mxu0 0.0
      %596 = vmatpush1.msra.mxu0 0.0
      %597 = vmatprep.subr.mxu0 0.0
      %598 = vmatpush1.msra.mxu0 0.0
      %599 = vmatprep.subr.mxu0 0.0
      %600 = vmatpush1.msra.mxu0 0.0
      %601 = vmatprep.subr.mxu0 0.0
      %602 = vmatpush1.msra.mxu0 0.0
      %603 = vmatprep.subr.mxu0 0.0
      %604 = vmatpush1.msra.mxu0 0.0
      %605 = vmatprep.subr.mxu0 0.0
      %606 = vmatpush1.msra.mxu0 0.0
      %607 = vmatprep.subr.mxu0 0.0
      %608 = vmatpush1.msra.mxu0 0.0
      %609 = vmatprep.subr.mxu0 0.0
      %610 = vmatpush1.msra.mxu0 0.0
      %611 = vmatprep.subr.mxu0 0.0
      %612 = vmatpush1.msra.mxu0 0.0
      %613 = vmatprep.subr.mxu0 0.0
      %614 = vmatpush1.msra.mxu0 0.0
      %615 = vmatprep.subr.mxu0 0.0
      %616 = vmatpush1.msra.mxu0 0.0
      %617 = vmatprep.subr.mxu0 0.0
      %618 = vmatpush1.msra.mxu0 0.0
      %619 = vmatprep.subr.mxu0 0.0
      %620 = vmatpush1.msra.mxu0 0.0
      %621 = vmatprep.subr.mxu0 0.0
      %622 = vmatpush1.msra.mxu0 0.0
      %623 = vmatprep.subr.mxu0 0.0
      %624 = vmatpush1.msra.mxu0 0.0
      %625 = vmatprep.subr.mxu0 0.0
      %626 = vmatpush1.msra.mxu0 0.0
      %627 = vmatprep.subr.mxu0 0.0
      %628 = vmatpush1.msra.mxu0 0.0
      %629 = vmatprep.subr.mxu0 0.0
      %630 = vmatpush1.msra.mxu0 0.0
      %631 = vmatprep.subr.mxu0 0.0
      %632 = vmatpush1.msra.mxu0 0.0
      %633 = vmatprep.subr.mxu0 0.0
      %634 = vmatpush1.msra.mxu0 0.0
      %635 = vmatprep.subr.mxu0 0.0
      %636 = vmatpush1.msra.mxu0 0.0
      %637 = vmatprep.subr.mxu0 0.0
      %638 = vmatpush1.msra.mxu0 0.0
      %639 = vmatprep.subr.mxu0 0.0
      %640 = vmatpush1.msra.mxu0 0.0
      %641 = vmatprep.subr.mxu0 0.0
      %642 = vmatpush1.msra.mxu0 0.0
      %643 = vmatprep.subr.mxu0 0.0
      %644 = vmatpush1.msra.mxu0 0.0
      %645 = vmatprep.subr.mxu0 0.0
      %646 = vmatpush1.msra.mxu0 0.0
      %647 = vmatprep.subr.mxu0 0.0
      %648 = vmatpush1.msra.mxu0 0.0
      %649 = vmatprep.subr.mxu0 0.0
      %650 = vmatpush1.msra.mxu0 0.0
      %651 = vmatprep.subr.mxu0 0.0
      %652 = vmatpush1.msra.mxu0 0.0
      %653 = vmatprep.subr.mxu0 0.0
      %654 = vmatpush1.msra.mxu0 0.0
      %655 = vmatprep.mubr.f32.mxu0 0.0
      %656 = vmatmul.mubr.f32.gmra.mrb[0].mxu0 %v589
      %v657 = vpop.f32.mrb[0].mxu0
      %v658 = vadd.f32 0.0, %v657
      %v659 = vpop.f32.mrb[0].mxu0
      %660 = vdwg.mxu0
      %v662 = vsel %vm261, %v419, 0
      %664 = vmatprep.subr.mxu0 0.0
      %665 = vmatpush1.msra.mxu0 %v257
      %666 = vmatprep.subr.mxu0 0.0
      %667 = vmatpush1.msra.mxu0 0.0
      %668 = vmatprep.subr.mxu0 0.0
      %669 = vmatpush1.msra.mxu0 0.0
      %670 = vmatprep.subr.mxu0 0.0
      %671 = vmatpush1.msra.mxu0 0.0
      %672 = vmatprep.subr.mxu0 0.0
      %673 = vmatpush1.msra.mxu0 0.0
      %674 = vmatprep.subr.mxu0 0.0
      %675 = vmatpush1.msra.mxu0 0.0
      %676 = vmatprep.subr.mxu0 0.0
      %677 = vmatpush1.msra.mxu0 0.0
      %678 = vmatprep.subr.mxu0 0.0
      %679 = vmatpush1.msra.mxu0 0.0
      %680 = vmatprep.subr.mxu0 0.0
      %681 = vmatpush1.msra.mxu0 0.0
      %682 = vmatprep.subr.mxu0 0.0
      %683 = vmatpush1.msra.mxu0 0.0
      %684 = vmatprep.subr.mxu0 0.0
      %685 = vmatpush1.msra.mxu0 0.0
      %686 = vmatprep.subr.mxu0 0.0
      %687 = vmatpush1.msra.mxu0 0.0
      %688 = vmatprep.subr.mxu0 0.0
      %689 = vmatpush1.msra.mxu0 0.0
      %690 = vmatprep.subr.mxu0 0.0
      %691 = vmatpush1.msra.mxu0 0.0
      %692 = vmatprep.subr.mxu0 0.0
      %693 = vmatpush1.msra.mxu0 0.0
      %694 = vmatprep.subr.mxu0 0.0
      %695 = vmatpush1.msra.mxu0 0.0
      %696 = vmatprep.subr.mxu0 0.0
      %697 = vmatpush1.msra.mxu0 0.0
      %698 = vmatprep.subr.mxu0 0.0
      %699 = vmatpush1.msra.mxu0 0.0
      %700 = vmatprep.subr.mxu0 0.0
      %701 = vmatpush1.msra.mxu0 0.0
      %702 = vmatprep.subr.mxu0 0.0
      %703 = vmatpush1.msra.mxu0 0.0
      %704 = vmatprep.subr.mxu0 0.0
      %705 = vmatpush1.msra.mxu0 0.0
      %706 = vmatprep.subr.mxu0 0.0
      %707 = vmatpush1.msra.mxu0 0.0
      %708 = vmatprep.subr.mxu0 0.0
      %709 = vmatpush1.msra.mxu0 0.0
      %710 = vmatprep.subr.mxu0 0.0
      %711 = vmatpush1.msra.mxu0 0.0
      %712 = vmatprep.subr.mxu0 0.0
      %713 = vmatpush1.msra.mxu0 0.0
      %714 = vmatprep.subr.mxu0 0.0
      %715 = vmatpush1.msra.mxu0 0.0
      %716 = vmatprep.subr.mxu0 0.0
      %717 = vmatpush1.msra.mxu0 0.0
      %718 = vmatprep.subr.mxu0 0.0
      %719 = vmatpush1.msra.mxu0 0.0
      %720 = vmatprep.subr.mxu0 0.0
      %721 = vmatpush1.msra.mxu0 0.0
      %722 = vmatprep.subr.mxu0 0.0
      %723 = vmatpush1.msra.mxu0 0.0
      %724 = vmatprep.subr.mxu0 0.0
      %725 = vmatpush1.msra.mxu0 0.0
      %726 = vmatprep.subr.mxu0 0.0
      %727 = vmatpush1.msra.mxu0 0.0
      %728 = vmatprep.mubr.f32.mxu0 0.0
      %729 = vmatmul.mubr.f32.gmra.mrb[0].mxu0 %v662
      %v730 = vpop.f32.mrb[0].mxu0
      %v731 = vadd.f32 %v658, %v730
      %v732 = vpop.f32.mrb[0].mxu0
      %733 = vdwg.mxu0
      %734 = vrot.lane.b32.xlu0 %v254, 112
      %v735 = vpop.permute.xlu0 %734
      %736 = vrot.lane.b32.xlu0 %v255, 112
      %v737 = vpop.permute.xlu0 %736
      %v738 = vsel %vm261, %v735, 0
      %v740 = vsel %vm261, %v737, 0
      %742 = vmatprep.subr.mxu0 0.0
      %743 = vmatpush1.xpose.msra.mxu0 %v740
      %744 = vmatprep.subr.mxu0 0.0
      %745 = vmatpush1.xpose.msra.mxu0 0.0
      %746 = vmatprep.subr.mxu0 0.0
      %747 = vmatpush1.xpose.msra.mxu0 0.0
      %748 = vmatprep.subr.mxu0 0.0
      %749 = vmatpush1.xpose.msra.mxu0 0.0
      %750 = vmatprep.subr.mxu0 0.0
      %751 = vmatpush1.xpose.msra.mxu0 0.0
      %752 = vmatprep.subr.mxu0 0.0
      %753 = vmatpush1.xpose.msra.mxu0 0.0
      %754 = vmatprep.subr.mxu0 0.0
      %755 = vmatpush1.xpose.msra.mxu0 0.0
      %756 = vmatprep.subr.mxu0 0.0
      %757 = vmatpush1.xpose.msra.mxu0 0.0
      %758 = vmatprep.subr.mxu0 0.0
      %759 = vmatpush1.xpose.msra.mxu0 0.0
      %760 = vmatprep.subr.mxu0 0.0
      %761 = vmatpush1.xpose.msra.mxu0 0.0
      %762 = vmatprep.subr.mxu0 0.0
      %763 = vmatpush1.xpose.msra.mxu0 0.0
      %764 = vmatprep.subr.mxu0 0.0
      %765 = vmatpush1.xpose.msra.mxu0 0.0
      %766 = vmatprep.subr.mxu0 0.0
      %767 = vmatpush1.xpose.msra.mxu0 0.0
      %768 = vmatprep.subr.mxu0 0.0
      %769 = vmatpush1.xpose.msra.mxu0 0.0
      %770 = vmatprep.subr.mxu0 0.0
      %771 = vmatpush1.xpose.msra.mxu0 0.0
      %772 = vmatprep.subr.mxu0 0.0
      %773 = vmatpush1.xpose.msra.mxu0 0.0
      %774 = vmatprep.subr.mxu0 0.0
      %775 = vmatpush1.xpose.msra.mxu0 0.0
      %776 = vmatprep.subr.mxu0 0.0
      %777 = vmatpush1.xpose.msra.mxu0 0.0
      %778 = vmatprep.subr.mxu0 0.0
      %779 = vmatpush1.xpose.msra.mxu0 0.0
      %780 = vmatprep.subr.mxu0 0.0
      %781 = vmatpush1.xpose.msra.mxu0 0.0
      %782 = vmatprep.subr.mxu0 0.0
      %783 = vmatpush1.xpose.msra.mxu0 0.0
      %784 = vmatprep.subr.mxu0 0.0
      %785 = vmatpush1.xpose.msra.mxu0 0.0
      %786 = vmatprep.subr.mxu0 0.0
      %787 = vmatpush1.xpose.msra.mxu0 0.0
      %788 = vmatprep.subr.mxu0 0.0
      %789 = vmatpush1.xpose.msra.mxu0 0.0
      %790 = vmatprep.subr.mxu0 0.0
      %791 = vmatpush1.xpose.msra.mxu0 0.0
      %792 = vmatprep.subr.mxu0 0.0
      %793 = vmatpush1.xpose.msra.mxu0 0.0
      %794 = vmatprep.subr.mxu0 0.0
      %795 = vmatpush1.xpose.msra.mxu0 0.0
      %796 = vmatprep.subr.mxu0 0.0
      %797 = vmatpush1.xpose.msra.mxu0 0.0
      %798 = vmatprep.subr.mxu0 0.0
      %799 = vmatpush1.xpose.msra.mxu0 0.0
      %800 = vmatprep.subr.mxu0 0.0
      %801 = vmatpush1.xpose.msra.mxu0 0.0
      %802 = vmatprep.subr.mxu0 0.0
      %803 = vmatpush1.xpose.msra.mxu0 0.0
      %804 = vmatprep.subr.mxu0 0.0
      %805 = vmatpush1.xpose.msra.mxu0 0.0
      %806 = vmatprep.mubr.f32.mxu0 0.0
      %807 = vmatmul.mubr.f32.gmra.mrb[0].mxu0 %v738
      %v808 = vpop.f32.mrb[0].mxu0
      %v809 = vadd.f32 0.0, %v808
      %v810 = vpop.f32.mrb[0].mxu0
      %811 = vdwg.mxu0
      %v812 = vsel %vm261, %v809, -inf
      %813 = vmax.xlane.f32.xlu0 %v812
      %v814 = vpop.xlane.xlu0 %813
      %v815 = vsub.f32 %v809, %v814
      %v816 = vmul.f32 %v815, 1.442695
      %v817 = vpow.pop %v816
      %v818 = vsel %vm261, %v817, 0.0
      %819 = vadd.xlane.f32.xlu0 %v818
      %v820 = vpop.xlane.xlu0 %819
      %v821 = vrcp.pop %v820
      %v822 = vmul.f32 %v817, %v821
      %823 = vrot.lane.b32.xlu0 %v256, 112
      %v824 = vpop.permute.xlu0 %823
      %v827 = vsel %vm261, %v822, 0
      %829 = vmatprep.subr.mxu0 0.0
      %830 = vmatpush1.msra.mxu0 %v824
      %831 = vmatprep.subr.mxu0 0.0
      %832 = vmatpush1.msra.mxu0 0.0
      %833 = vmatprep.subr.mxu0 0.0
      %834 = vmatpush1.msra.mxu0 0.0
      %835 = vmatprep.subr.mxu0 0.0
      %836 = vmatpush1.msra.mxu0 0.0
      %837 = vmatprep.subr.mxu0 0.0
      %838 = vmatpush1.msra.mxu0 0.0
      %839 = vmatprep.subr.mxu0 0.0
      %840 = vmatpush1.msra.mxu0 0.0
      %841 = vmatprep.subr.mxu0 0.0
      %842 = vmatpush1.msra.mxu0 0.0
      %843 = vmatprep.subr.mxu0 0.0
      %844 = vmatpush1.msra.mxu0 0.0
      %845 = vmatprep.subr.mxu0 0.0
      %846 = vmatpush1.msra.mxu0 0.0
      %847 = vmatprep.subr.mxu0 0.0
      %848 = vmatpush1.msra.mxu0 0.0
      %849 = vmatprep.subr.mxu0 0.0
      %850 = vmatpush1.msra.mxu0 0.0
      %851 = vmatprep.subr.mxu0 0.0
      %852 = vmatpush1.msra.mxu0 0.0
      %853 = vmatprep.subr.mxu0 0.0
      %854 = vmatpush1.msra.mxu0 0.0
      %855 = vmatprep.subr.mxu0 0.0
      %856 = vmatpush1.msra.mxu0 0.0
      %857 = vmatprep.subr.mxu0 0.0
      %858 = vmatpush1.msra.mxu0 0.0
      %859 = vmatprep.subr.mxu0 0.0
      %860 = vmatpush1.msra.mxu0 0.0
      %861 = vmatprep.subr.mxu0 0.0
      %862 = vmatpush1.msra.mxu0 0.0
      %863 = vmatprep.subr.mxu0 0.0
      %864 = vmatpush1.msra.mxu0 0.0
      %865 = vmatprep.subr.mxu0 0.0
      %866 = vmatpush1.msra.mxu0 0.0
      %867 = vmatprep.subr.mxu0 0.0
      %868 = vmatpush1.msra.mxu0 0.0
      %869 = vmatprep.subr.mxu0 0.0
      %870 = vmatpush1.msra.mxu0 0.0
      %871 = vmatprep.subr.mxu0 0.0
      %872 = vmatpush1.msra.mxu0 0.0
      %873 = vmatprep.subr.mxu0 0.0
      %874 = vmatpush1.msra.mxu0 0.0
      %875 = vmatprep.subr.mxu0 0.0
      %876 = vmatpush1.msra.mxu0 0.0
      %877 = vmatprep.subr.mxu0 0.0
      %878 = vmatpush1.msra.mxu0 0.0
      %879 = vmatprep.subr.mxu0 0.0
      %880 = vmatpush1.msra.mxu0 0.0
      %881 = vmatprep.subr.mxu0 0.0
      %882 = vmatpush1.msra.mxu0 0.0
      %883 = vmatprep.subr.mxu0 0.0
      %884 = vmatpush1.msra.mxu0 0.0
      %885 = vmatprep.subr.mxu0 0.0
      %886 = vmatpush1.msra.mxu0 0.0
      %887 = vmatprep.subr.mxu0 0.0
      %888 = vmatpush1.msra.mxu0 0.0
      %889 = vmatprep.subr.mxu0 0.0
      %890 = vmatpush1.msra.mxu0 0.0
      %891 = vmatprep.subr.mxu0 0.0
      %892 = vmatpush1.msra.mxu0 0.0
      %893 = vmatprep.mubr.f32.mxu0 0.0
      %894 = vmatmul.mubr.f32.gmra.mrb[0].mxu0 %v827
      %v895 = vpop.f32.mrb[0].mxu0
      %v896 = vadd.f32 0.0, %v895
      %v897 = vpop.f32.mrb[0].mxu0
      %898 = vdwg.mxu0
      %v900 = vsel %vm261, %v896, 0
      %902 = vmatprep.subr.mxu0 0.0
      %903 = vmatpush1.msra.mxu0 %v259
      %904 = vmatprep.subr.mxu0 0.0
      %905 = vmatpush1.msra.mxu0 0.0
      %906 = vmatprep.subr.mxu0 0.0
      %907 = vmatpush1.msra.mxu0 0.0
      %908 = vmatprep.subr.mxu0 0.0
      %909 = vmatpush1.msra.mxu0 0.0
      %910 = vmatprep.subr.mxu0 0.0
      %911 = vmatpush1.msra.mxu0 0.0
      %912 = vmatprep.subr.mxu0 0.0
      %913 = vmatpush1.msra.mxu0 0.0
      %914 = vmatprep.subr.mxu0 0.0
      %915 = vmatpush1.msra.mxu0 0.0
      %916 = vmatprep.subr.mxu0 0.0
      %917 = vmatpush1.msra.mxu0 0.0
      %918 = vmatprep.subr.mxu0 0.0
      %919 = vmatpush1.msra.mxu0 0.0
      %920 = vmatprep.subr.mxu0 0.0
      %921 = vmatpush1.msra.mxu0 0.0
      %922 = vmatprep.subr.mxu0 0.0
      %923 = vmatpush1.msra.mxu0 0.0
      %924 = vmatprep.subr.mxu0 0.0
      %925 = vmatpush1.msra.mxu0 0.0
      %926 = vmatprep.subr.mxu0 0.0
      %927 = vmatpush1.msra.mxu0 0.0
      %928 = vmatprep.subr.mxu0 0.0
      %929 = vmatpush1.msra.mxu0 0.0
      %930 = vmatprep.subr.mxu0 0.0
      %931 = vmatpush1.msra.mxu0 0.0
      %932 = vmatprep.subr.mxu0 0.0
      %933 = vmatpush1.msra.mxu0 0.0
      %934 = vmatprep.subr.mxu0 0.0
      %935 = vmatpush1.msra.mxu0 0.0
      %936 = vmatprep.subr.mxu0 0.0
      %937 = vmatpush1.msra.mxu0 0.0
      %938 = vmatprep.subr.mxu0 0.0
      %939 = vmatpush1.msra.mxu0 0.0
      %940 = vmatprep.subr.mxu0 0.0
      %941 = vmatpush1.msra.mxu0 0.0
      %942 = vmatprep.subr.mxu0 0.0
      %943 = vmatpush1.msra.mxu0 0.0
      %944 = vmatprep.subr.mxu0 0.0
      %945 = vmatpush1.msra.mxu0 0.0
      %946 = vmatprep.subr.mxu0 0.0
      %947 = vmatpush1.msra.mxu0 0.0
      %948 = vmatprep.subr.mxu0 0.0
      %949 = vmatpush1.msra.mxu0 0.0
      %950 = vmatprep.subr.mxu0 0.0
      %951 = vmatpush1.msra.mxu0 0.0
      %952 = vmatprep.subr.mxu0 0.0
      %953 = vmatpush1.msra.mxu0 0.0
      %954 = vmatprep.subr.mxu0 0.0
      %955 = vmatpush1.msra.mxu0 0.0
      %956 = vmatprep.subr.mxu0 0.0
      %957 = vmatpush1.msra.mxu0 0.0
      %958 = vmatprep.subr.mxu0 0.0
      %959 = vmatpush1.msra.mxu0 0.0
      %960 = vmatprep.subr.mxu0 0.0
      %961 = vmatpush1.msra.mxu0 0.0
      %962 = vmatprep.subr.mxu0 0.0
      %963 = vmatpush1.msra.mxu0 0.0
      %964 = vmatprep.subr.mxu0 0.0
      %965 = vmatpush1.msra.mxu0 0.0
      %966 = vmatprep.mubr.f32.mxu0 0.0
      %967 = vmatmul.mubr.f32.gmra.mrb[0].mxu0 %v900
      %v968 = vpop.f32.mrb[0].mxu0
      %v969 = vadd.f32 0.0, %v968
      %v970 = vpop.f32.mrb[0].mxu0
      %971 = vdwg.mxu0
      %v972 = vadd.f32 %v731, %v969
      %973 = vrot.lane.b32.xlu0 %v254, 104
      %v974 = vpop.permute.xlu0 %973
      %975 = vrot.lane.b32.xlu0 %v255, 104
      %v976 = vpop.permute.xlu0 %975
      %v977 = vsel %vm261, %v974, 0
      %v979 = vsel %vm261, %v976, 0
      %981 = vmatprep.subr.mxu0 0.0
      %982 = vmatpush1.xpose.msra.mxu0 %v979
      %983 = vmatprep.subr.mxu0 0.0
      %984 = vmatpush1.xpose.msra.mxu0 0.0
      %985 = vmatprep.subr.mxu0 0.0
      %986 = vmatpush1.xpose.msra.mxu0 0.0
      %987 = vmatprep.subr.mxu0 0.0
      %988 = vmatpush1.xpose.msra.mxu0 0.0
      %989 = vmatprep.subr.mxu0 0.0
      %990 = vmatpush1.xpose.msra.mxu0 0.0
      %991 = vmatprep.subr.mxu0 0.0
      %992 = vmatpush1.xpose.msra.mxu0 0.0
      %993 = vmatprep.subr.mxu0 0.0
      %994 = vmatpush1.xpose.msra.mxu0 0.0
      %995 = vmatprep.subr.mxu0 0.0
      %996 = vmatpush1.xpose.msra.mxu0 0.0
      %997 = vmatprep.subr.mxu0 0.0
      %998 = vmatpush1.xpose.msra.mxu0 0.0
      %999 = vmatprep.subr.mxu0 0.0
      %1000 = vmatpush1.xpose.msra.mxu0 0.0
      %1001 = vmatprep.subr.mxu0 0.0
      %1002 = vmatpush1.xpose.msra.mxu0 0.0
      %1003 = vmatprep.subr.mxu0 0.0
      %1004 = vmatpush1.xpose.msra.mxu0 0.0
      %1005 = vmatprep.subr.mxu0 0.0
      %1006 = vmatpush1.xpose.msra.mxu0 0.0
      %1007 = vmatprep.subr.mxu0 0.0
      %1008 = vmatpush1.xpose.msra.mxu0 0.0
      %1009 = vmatprep.subr.mxu0 0.0
      %1010 = vmatpush1.xpose.msra.mxu0 0.0
      %1011 = vmatprep.subr.mxu0 0.0
      %1012 = vmatpush1.xpose.msra.mxu0 0.0
      %1013 = vmatprep.subr.mxu0 0.0
      %1014 = vmatpush1.xpose.msra.mxu0 0.0
      %1015 = vmatprep.subr.mxu0 0.0
      %1016 = vmatpush1.xpose.msra.mxu0 0.0
      %1017 = vmatprep.subr.mxu0 0.0
      %1018 = vmatpush1.xpose.msra.mxu0 0.0
      %1019 = vmatprep.subr.mxu0 0.0
      %1020 = vmatpush1.xpose.msra.mxu0 0.0
      %1021 = vmatprep.subr.mxu0 0.0
      %1022 = vmatpush1.xpose.msra.mxu0 0.0
      %1023 = vmatprep.subr.mxu0 0.0
      %1024 = vmatpush1.xpose.msra.mxu0 0.0
      %1025 = vmatprep.subr.mxu0 0.0
      %1026 = vmatpush1.xpose.msra.mxu0 0.0
      %1027 = vmatprep.subr.mxu0 0.0
      %1028 = vmatpush1.xpose.msra.mxu0 0.0
      %1029 = vmatprep.subr.mxu0 0.0
      %1030 = vmatpush1.xpose.msra.mxu0 0.0
      %1031 = vmatprep.subr.mxu0 0.0
      %1032 = vmatpush1.xpose.msra.mxu0 0.0
      %1033 = vmatprep.subr.mxu0 0.0
      %1034 = vmatpush1.xpose.msra.mxu0 0.0
      %1035 = vmatprep.subr.mxu0 0.0
      %1036 = vmatpush1.xpose.msra.mxu0 0.0
      %1037 = vmatprep.subr.mxu0 0.0
      %1038 = vmatpush1.xpose.msra.mxu0 0.0
      %1039 = vmatprep.subr.mxu0 0.0
      %1040 = vmatpush1.xpose.msra.mxu0 0.0
      %1041 = vmatprep.subr.mxu0 0.0
      %1042 = vmatpush1.xpose.msra.mxu0 0.0
      %1043 = vmatprep.subr.mxu0 0.0
      %1044 = vmatpush1.xpose.msra.mxu0 0.0
      %1045 = vmatprep.mubr.f32.mxu0 0.0
      %1046 = vmatmul.mubr.f32.gmra.mrb[0].mxu0 %v977
      %v1047 = vpop.f32.mrb[0].mxu0
      %v1048 = vadd.f32 0.0, %v1047
      %v1049 = vpop.f32.mrb[0].mxu0
      %1050 = vdwg.mxu0
      %v1051 = vsel %vm261, %v1048, -inf
      %1052 = vmax.xlane.f32.xlu0 %v1051
      %v1053 = vpop.xlane.xlu0 %1052
      %v1054 = vsub.f32 %v1048, %v1053
      %v1055 = vmul.f32 %v1054, 1.442695
      %v1056 = vpow.pop %v1055
      %v1057 = vsel %vm261, %v1056, 0.0
      %1058 = vadd.xlane.f32.xlu0 %v1057
      %v1059 = vpop.xlane.xlu0 %1058
      %v1060 = vrcp.pop %v1059
      %v1061 = vmul.f32 %v1056, %v1060
      %1062 = vrot.lane.b32.xlu0 %v256, 104
      %v1063 = vpop.permute.xlu0 %1062
      %v1066 = vsel %vm261, %v1061, 0
      %1068 = vmatprep.subr.mxu0 0.0
      %1069 = vmatpush1.msra.mxu0 %v1063
      %1070 = vmatprep.subr.mxu0 0.0
      %1071 = vmatpush1.msra.mxu0 0.0
      %1072 = vmatprep.subr.mxu0 0.0
      %1073 = vmatpush1.msra.mxu0 0.0
      %1074 = vmatprep.subr.mxu0 0.0
      %1075 = vmatpush1.msra.mxu0 0.0
      %1076 = vmatprep.subr.mxu0 0.0
      %1077 = vmatpush1.msra.mxu0 0.0
      %1078 = vmatprep.subr.mxu0 0.0
      %1079 = vmatpush1.msra.mxu0 0.0
      %1080 = vmatprep.subr.mxu0 0.0
      %1081 = vmatpush1.msra.mxu0 0.0
      %1082 = vmatprep.subr.mxu0 0.0
      %1083 = vmatpush1.msra.mxu0 0.0
      %1084 = vmatprep.subr.mxu0 0.0
      %1085 = vmatpush1.msra.mxu0 0.0
      %1086 = vmatprep.subr.mxu0 0.0
      %1087 = vmatpush1.msra.mxu0 0.0
      %1088 = vmatprep.subr.mxu0 0.0
      %1089 = vmatpush1.msra.mxu0 0.0
      %1090 = vmatprep.subr.mxu0 0.0
      %1091 = vmatpush1.msra.mxu0 0.0
      %1092 = vmatprep.subr.mxu0 0.0
      %1093 = vmatpush1.msra.mxu0 0.0
      %1094 = vmatprep.subr.mxu0 0.0
      %1095 = vmatpush1.msra.mxu0 0.0
      %1096 = vmatprep.subr.mxu0 0.0
      %1097 = vmatpush1.msra.mxu0 0.0
      %1098 = vmatprep.subr.mxu0 0.0
      %1099 = vmatpush1.msra.mxu0 0.0
      %1100 = vmatprep.subr.mxu0 0.0
      %1101 = vmatpush1.msra.mxu0 0.0
      %1102 = vmatprep.subr.mxu0 0.0
      %1103 = vmatpush1.msra.mxu0 0.0
      %1104 = vmatprep.subr.mxu0 0.0
      %1105 = vmatpush1.msra.mxu0 0.0
      %1106 = vmatprep.subr.mxu0 0.0
      %1107 = vmatpush1.msra.mxu0 0.0
      %1108 = vmatprep.subr.mxu0 0.0
      %1109 = vmatpush1.msra.mxu0 0.0
      %1110 = vmatprep.subr.mxu0 0.0
      %1111 = vmatpush1.msra.mxu0 0.0
      %1112 = vmatprep.subr.mxu0 0.0
      %1113 = vmatpush1.msra.mxu0 0.0
      %1114 = vmatprep.subr.mxu0 0.0
      %1115 = vmatpush1.msra.mxu0 0.0
      %1116 = vmatprep.subr.mxu0 0.0
      %1117 = vmatpush1.msra.mxu0 0.0
      %1118 = vmatprep.subr.mxu0 0.0
      %1119 = vmatpush1.msra.mxu0 0.0
      %1120 = vmatprep.subr.mxu0 0.0
      %1121 = vmatpush1.msra.mxu0 0.0
      %1122 = vmatprep.subr.mxu0 0.0
      %1123 = vmatpush1.msra.mxu0 0.0
      %1124 = vmatprep.subr.mxu0 0.0
      %1125 = vmatpush1.msra.mxu0 0.0
      %1126 = vmatprep.subr.mxu0 0.0
      %1127 = vmatpush1.msra.mxu0 0.0
      %1128 = vmatprep.subr.mxu0 0.0
      %1129 = vmatpush1.msra.mxu0 0.0
      %1130 = vmatprep.subr.mxu0 0.0
      %1131 = vmatpush1.msra.mxu0 0.0
      %1132 = vmatprep.mubr.f32.mxu0 0.0
      %1133 = vmatmul.mubr.f32.gmra.mrb[0].mxu0 %v1066
      %v1134 = vpop.f32.mrb[0].mxu0
      %v1135 = vadd.f32 0.0, %v1134
      %v1136 = vpop.f32.mrb[0].mxu0
      %1137 = vdwg.mxu0
      %v1139 = vsel %vm261, %v1135, 0
      %1141 = vmatprep.subr.mxu0 0.0
      %1142 = vmatpush1.msra.mxu0 %v260
      %1143 = vmatprep.subr.mxu0 0.0
      %1144 = vmatpush1.msra.mxu0 0.0
      %1145 = vmatprep.subr.mxu0 0.0
      %1146 = vmatpush1.msra.mxu0 0.0
      %1147 = vmatprep.subr.mxu0 0.0
      %1148 = vmatpush1.msra.mxu0 0.0
      %1149 = vmatprep.subr.mxu0 0.0
      %1150 = vmatpush1.msra.mxu0 0.0
      %1151 = vmatprep.subr.mxu0 0.0
      %1152 = vmatpush1.msra.mxu0 0.0
      %1153 = vmatprep.subr.mxu0 0.0
      %1154 = vmatpush1.msra.mxu0 0.0
      %1155 = vmatprep.subr.mxu0 0.0
      %1156 = vmatpush1.msra.mxu0 0.0
      %1157 = vmatprep.subr.mxu0 0.0
      %1158 = vmatpush1.msra.mxu0 0.0
      %1159 = vmatprep.subr.mxu0 0.0
      %1160 = vmatpush1.msra.mxu0 0.0
      %1161 = vmatprep.subr.mxu0 0.0
      %1162 = vmatpush1.msra.mxu0 0.0
      %1163 = vmatprep.subr.mxu0 0.0
      %1164 = vmatpush1.msra.mxu0 0.0
      %1165 = vmatprep.subr.mxu0 0.0
      %1166 = vmatpush1.msra.mxu0 0.0
      %1167 = vmatprep.subr.mxu0 0.0
      %1168 = vmatpush1.msra.mxu0 0.0
      %1169 = vmatprep.subr.mxu0 0.0
      %1170 = vmatpush1.msra.mxu0 0.0
      %1171 = vmatprep.subr.mxu0 0.0
      %1172 = vmatpush1.msra.mxu0 0.0
      %1173 = vmatprep.subr.mxu0 0.0
      %1174 = vmatpush1.msra.mxu0 0.0
      %1175 = vmatprep.subr.mxu0 0.0
      %1176 = vmatpush1.msra.mxu0 0.0
      %1177 = vmatprep.subr.mxu0 0.0
      %1178 = vmatpush1.msra.mxu0 0.0
      %1179 = vmatprep.subr.mxu0 0.0
      %1180 = vmatpush1.msra.mxu0 0.0
      %1181 = vmatprep.subr.mxu0 0.0
      %1182 = vmatpush1.msra.mxu0 0.0
      %1183 = vmatprep.subr.mxu0 0.0
      %1184 = vmatpush1.msra.mxu0 0.0
      %1185 = vmatprep.subr.mxu0 0.0
      %1186 = vmatpush1.msra.mxu0 0.0
      %1187 = vmatprep.subr.mxu0 0.0
      %1188 = vmatpush1.msra.mxu0 0.0
      %1189 = vmatprep.subr.mxu0 0.0
      %1190 = vmatpush1.msra.mxu0 0.0
      %1191 = vmatprep.subr.mxu0 0.0
      %1192 = vmatpush1.msra.mxu0 0.0
      %1193 = vmatprep.subr.mxu0 0.0
      %1194 = vmatpush1.msra.mxu0 0.0
      %1195 = vmatprep.subr.mxu0 0.0
      %1196 = vmatpush1.msra.mxu0 0.0
      %1197 = vmatprep.subr.mxu0 0.0
      %1198 = vmatpush1.msra.mxu0 0.0
      %1199 = vmatprep.subr.mxu0 0.0
      %1200 = vmatpush1.msra.mxu0 0.0
      %1201 = vmatprep.subr.mxu0 0.0
      %1202 = vmatpush1.msra.mxu0 0.0
      %1203 = vmatprep.subr.mxu0 0.0
      %1204 = vmatpush1.msra.mxu0 0.0
      %1205 = vmatprep.mubr.f32.mxu0 0.0
      %1206 = vmatmul.mubr.f32.gmra.mrb[0].mxu0 %v1139
      %v1207 = vpop.f32.mrb[0].mxu0
      %v1208 = vadd.f32 0.0, %v1207
      %v1209 = vpop.f32.mrb[0].mxu0
      %1210 = vdwg.mxu0
      %v1211 = vadd.f32 %v972, %v1208
      %v1212 = vld [vmem:[%s4] sm:$0x1]
      %v1214 = vlaneseq
      %v1215 = vshrl.u32 %v1214, 7
      %v1216 = vsub.s32 0, %v1215
      %v1217 = vrot.slane %v1212, %v1216
      %v1219 = vadd.f32 %v1211, %v1217
      %vm1220 = vcmask 261120
      %1221 = vst.msk [vmem:[%s253] sm:$0xff] %vm1220, %v1219
      %p1222 = scmp.lt.s32.totalorder %s16, 1
      %s1223 = scalar_select %p1222, %s16, 1
      %s1224 = smul.addr %s1223, 8
      %s1225 = scalar_lea.vmem %s5, %s1224
      // Predicated region
      $region41: #{attn_net_forward.4} parent=39 // pred_check
        %p1226 = pneg %p154
      $region42: #{attn_net_forward.4} parent=39 // pred_check_branch
        %1228 = sbr.rel (%p1226) target = $region44
      $region43: #{attn_net_forward.4} parent=39 // pred_region
        _
      $region44: #{attn_net_forward.4} parent=39 // pred_fallthru
        _
    $region40: #{attn_net_forward.4} parent=5 // pred_fallthru
      _
    %p1229 = scmp.le.s32.totalorder 2, %s11
    // Predicated region
    $region45: #{attn_net_forward.4} parent=5 // pred_check
      %p1230 = pneg %p1229
    $region46: #{attn_net_forward.4} parent=5 // pred_check_branch
      %1232 = sbr.rel (%p1230) target = $region48
    $region47: #{attn_net_forward.4} parent=5 // pred_region
      %s1233 = ssub.s32 %s11, 2
      // Predicated region
      $region49: #{attn_net_forward.4} parent=47 // pred_check
        %p1234 = pneg %p160
      $region50: #{attn_net_forward.4} parent=47 // pred_check_branch
        %1236 = sbr.rel (%p1234) target = $region52
      $region51: #{attn_net_forward.4} parent=47 // pred_region
        %p1237 = scmp.lt.s32.totalorder %s17, 1
        %s1238 = scalar_select %p1237, %s17, 1
        %s1239 = smul.addr %s1238, 8
        %s1240 = scalar_lea.vmem %s5, %s1239
      $region52: #{attn_net_forward.4} parent=47 // pred_fallthru
        _
    $region48: #{attn_net_forward.4} parent=5 // pred_fallthru
      _
  $region6: #{attn_net_forward.4} parent=0 // loop_footer
    %s15 = sadd.s32 1, %s11
  $region7: #{attn_net_forward.4} parent=0 // loop_footer_branch
    %10 = sbr.rel target = $region3
  $region8: #{attn_net_forward.4} parent=0 // loop_exit
    _

// kernel: attn_net_forward.3
$region0: #{attn_net_forward.3}
  #allocation0 [shape = 'u32[]', space=smem, size = 0x4, offset = 0x4, fixed_abs, tag = 'smem constant byte address 0x4 - core index']
  #allocation1 [shape = 'u32[144,128]{1,0:T(1,128)}', space=vmem, size = 0x12000, scoped, tag = 'internal scratch']
  %s0 = inlined_call_operand.vmem [shape: f32[2,1024], index: 0, kind: input, shape index: {}]
  %s1 = inlined_call_operand.vmem [shape: f32[2,1024], index: 1, kind: input, shape index: {}]
  %s2 = inlined_call_operand.vmem [shape: bf16[1024,256], index: 2, kind: input, shape index: {}]
  %s3 = inlined_call_operand.vmem [shape: f32[1,256], index: 3, kind: input, shape index: {}]
  %s4 = inlined_call_operand.vmem [shape: bf16[1024,512], index: 4, kind: input, shape index: {}]
  %s5 = inlined_call_operand.vmem [shape: f32[1,512], index: 5, kind: input, shape index: {}]
  %s6 = inlined_call_operand.vmem [shape: f32[2,256], index: 6, kind: output, shape index: {0}]
  %s7 = inlined_call_operand.vmem [shape: f32[2,512], index: 7, kind: output, shape index: {1}]
  %8 = xla_tuple %s6, %s7
  %s9 = sld [smem:[#allocation0]]
  $region144: #{attn_net_forward.3} parent=0
    _
  %s11 = ssub.s32 1, %s9
  %s12 = scalar_select 0, %s11, %s9
  $region1: #{attn_net_forward.3} parent=0
    #allocation2 [shape = 'u8[524288]{0}', space=vmem, size = 0x80000, scoped, tag = 'input window, operand 2']
    #allocation3 [shape = 'u8[1048576]{0}', space=vmem, size = 0x100000, scoped, tag = 'input window, operand 4']
    loop: start=0, step=1, limit=4
    $region2: #{attn_net_forward.3} parent=1 // loop_pre_header
      _
    $region3: #{attn_net_forward.3} parent=1 // loop_header
      %s14 = sphi 0, %s18
      %p15 = scmp.ge.s32.totalorder %s14, 4
      %s22 = sphi 0, %s22
      %s24 = sphi 0, %s22
      %s25 = sphi 0, %s24
      %s39 = sphi 0, %s25
      %s43 = sphi 0, %s43
      %s45 = sphi 0, %s43
      %s46 = sphi 0, %s45
      %s60 = sphi 0, %s46
      %s66 = sphi 0, %s68
      %s69 = sphi 0, %s66
      %s70 = sphi 0, %s69
      %s86 = sphi 0, %s70
      %s92 = sphi 0, %s94
      %s95 = sphi 0, %s92
      %s96 = sphi 0, %s95
      %s112 = sphi 0, %s96
      %s118 = sphi 0, %s120
      %s121 = sphi 0, %s118
      %s122 = sphi 0, %s121
      %s138 = sphi 0, %s122
      %s144 = sphi 0, %s146
      %s147 = sphi 0, %s144
      %s148 = sphi 0, %s147
      %s164 = sphi 0, %s148
      %s170 = sphi 0, %s172
      %s173 = sphi 0, %s170
      %s174 = sphi 0, %s173
      %s190 = sphi 0, %s174
      %s196 = sphi 0, %s198
      %s199 = sphi 0, %s196
      %s200 = sphi 0, %s199
      %s216 = sphi 0, %s200
    $region4: #{attn_net_forward.3} parent=1 // loop_header_branch
      %17 = sbr.rel (%p15) target = $region8
    $region5: #{attn_net_forward.3} parent=1 // loop_body
      %s19 = ssub.s32 %s14, 1
      %s20 = ssub.s32 %s14, 2
      %s21 = sadd.s32 %s14, 1
      %s23 = sadd.s32 %s22, 1
      %p26 = scmp.eq.s32.totalorder %s14, 1
      %p27 = scmp.ne.s32.totalorder %s22, %s24
      %p28 = scmp.eq.s32.totalorder %s14, 0
      %p29 = por %p27, %p28
      %p30 = scmp.ne.s32.totalorder %s22, %s24
      %p31 = scmp.eq.s32.totalorder %s19, 1
      %p32 = por %p30, %p31
      %p33 = scmp.ne.s32.totalorder %s24, %s25
      %p34 = scmp.eq.s32.totalorder %s19, 0
      %p35 = por %p33, %p34
      %p36 = scmp.ne.s32.totalorder %s24, %s25
      %p37 = scmp.eq.s32.totalorder %s20, 1
      %p38 = por %p36, %p37
      %p40 = scmp.ne.s32.totalorder %s25, %s39
      %p41 = scmp.eq.s32.totalorder %s20, 0
      %p42 = por %p40, %p41
      %s44 = sadd.s32 %s43, 1
      %p47 = scmp.eq.s32.totalorder %s14, 1
      %p48 = scmp.ne.s32.totalorder %s43, %s45
      %p49 = scmp.eq.s32.totalorder %s14, 0
      %p50 = por %p48, %p49
      %p51 = scmp.ne.s32.totalorder %s43, %s45
      %p52 = scmp.eq.s32.totalorder %s19, 1
      %p53 = por %p51, %p52
      %p54 = scmp.ne.s32.totalorder %s45, %s46
      %p55 = scmp.eq.s32.totalorder %s19, 0
      %p56 = por %p54, %p55
      %p57 = scmp.ne.s32.totalorder %s45, %s46
      %p58 = scmp.eq.s32.totalorder %s20, 1
      %p59 = por %p57, %p58
      %p61 = scmp.ne.s32.totalorder %s46, %s60
      %p62 = scmp.eq.s32.totalorder %s20, 0
      %p63 = por %p61, %p62
      %s64 = ssub.s32 %s14, %s21
      %p65 = scmp.eq.s32.totalorder %s64, 0
      %s67 = sadd.s32 %s66, 1
      %s68 = scalar_select %p65, %s66, %s67
      %p71 = pneg %p65
      %p72 = scmp.eq.s32.totalorder %s14, 1
      %p73 = por %p71, %p72
      %p74 = scmp.ne.s32.totalorder %s66, %s69
      %p75 = scmp.eq.s32.totalorder %s14, 0
      %p76 = por %p74, %p75
      %p77 = scmp.ne.s32.totalorder %s66, %s69
      %p78 = scmp.eq.s32.totalorder %s19, 1
      %p79 = por %p77, %p78
      %p80 = scmp.ne.s32.totalorder %s69, %s70
      %p81 = scmp.eq.s32.totalorder %s19, 0
      %p82 = por %p80, %p81
      %p83 = scmp.ne.s32.totalorder %s69, %s70
      %p84 = scmp.eq.s32.totalorder %s20, 1
      %p85 = por %p83, %p84
      %p87 = scmp.ne.s32.totalorder %s70, %s86
      %p88 = scmp.eq.s32.totalorder %s20, 0
      %p89 = por %p87, %p88
      %s90 = ssub.s32 %s14, %s21
      %p91 = scmp.eq.s32.totalorder %s90, 0
      %s93 = sadd.s32 %s92, 1
      %s94 = scalar_select %p91, %s92, %s93
      %p97 = pneg %p91
      %p98 = scmp.eq.s32.totalorder %s14, 1
      %p99 = por %p97, %p98
      %p100 = scmp.ne.s32.totalorder %s92, %s95
      %p101 = scmp.eq.s32.totalorder %s14, 0
      %p102 = por %p100, %p101
      %p103 = scmp.ne.s32.totalorder %s92, %s95
      %p104 = scmp.eq.s32.totalorder %s19, 1
      %p105 = por %p103, %p104
      %p106 = scmp.ne.s32.totalorder %s95, %s96
      %p107 = scmp.eq.s32.totalorder %s19, 0
      %p108 = por %p106, %p107
      %p109 = scmp.ne.s32.totalorder %s95, %s96
      %p110 = scmp.eq.s32.totalorder %s20, 1
      %p111 = por %p109, %p110
      %p113 = scmp.ne.s32.totalorder %s96, %s112
      %p114 = scmp.eq.s32.totalorder %s20, 0
      %p115 = por %p113, %p114
      %s116 = ssub.s32 %s14, %s21
      %p117 = scmp.eq.s32.totalorder %s116, 0
      %s119 = sadd.s32 %s118, 1
      %s120 = scalar_select %p117, %s118, %s119
      %p123 = pneg %p117
      %p124 = scmp.eq.s32.totalorder %s14, 1
      %p125 = por %p123, %p124
      %p126 = scmp.ne.s32.totalorder %s118, %s121
      %p127 = scmp.eq.s32.totalorder %s14, 0
      %p128 = por %p126, %p127
      %p129 = scmp.ne.s32.totalorder %s118, %s121
      %p130 = scmp.eq.s32.totalorder %s19, 1
      %p131 = por %p129, %p130
      %p132 = scmp.ne.s32.totalorder %s121, %s122
      %p133 = scmp.eq.s32.totalorder %s19, 0
      %p134 = por %p132, %p133
      %p135 = scmp.ne.s32.totalorder %s121, %s122
      %p136 = scmp.eq.s32.totalorder %s20, 1
      %p137 = por %p135, %p136
      %p139 = scmp.ne.s32.totalorder %s122, %s138
      %p140 = scmp.eq.s32.totalorder %s20, 0
      %p141 = por %p139, %p140
      %s142 = ssub.s32 %s14, %s21
      %p143 = scmp.eq.s32.totalorder %s142, 0
      %s145 = sadd.s32 %s144, 1
      %s146 = scalar_select %p143, %s144, %s145
      %p149 = pneg %p143
      %p150 = scmp.eq.s32.totalorder %s14, 1
      %p151 = por %p149, %p150
      %p152 = scmp.ne.s32.totalorder %s144, %s147
      %p153 = scmp.eq.s32.totalorder %s14, 0
      %p154 = por %p152, %p153
      %p155 = scmp.ne.s32.totalorder %s144, %s147
      %p156 = scmp.eq.s32.totalorder %s19, 1
      %p157 = por %p155, %p156
      %p158 = scmp.ne.s32.totalorder %s147, %s148
      %p159 = scmp.eq.s32.totalorder %s19, 0
      %p160 = por %p158, %p159
      %p161 = scmp.ne.s32.totalorder %s147, %s148
      %p162 = scmp.eq.s32.totalorder %s20, 1
      %p163 = por %p161, %p162
      %p165 = scmp.ne.s32.totalorder %s148, %s164
      %p166 = scmp.eq.s32.totalorder %s20, 0
      %p167 = por %p165, %p166
      %s168 = ssub.s32 %s14, %s21
      %p169 = scmp.eq.s32.totalorder %s168, 0
      %s171 = sadd.s32 %s170, 1
      %s172 = scalar_select %p169, %s170, %s171
      %p175 = pneg %p169
      %p176 = scmp.eq.s32.totalorder %s14, 1
      %p177 = por %p175, %p176
      %p178 = scmp.ne.s32.totalorder %s170, %s173
      %p179 = scmp.eq.s32.totalorder %s14, 0
      %p180 = por %p178, %p179
      %p181 = scmp.ne.s32.totalorder %s170, %s173
      %p182 = scmp.eq.s32.totalorder %s19, 1
      %p183 = por %p181, %p182
      %p184 = scmp.ne.s32.totalorder %s173, %s174
      %p185 = scmp.eq.s32.totalorder %s19, 0
      %p186 = por %p184, %p185
      %p187 = scmp.ne.s32.totalorder %s173, %s174
      %p188 = scmp.eq.s32.totalorder %s20, 1
      %p189 = por %p187, %p188
      %p191 = scmp.ne.s32.totalorder %s174, %s190
      %p192 = scmp.eq.s32.totalorder %s20, 0
      %p193 = por %p191, %p192
      %s194 = ssub.s32 %s14, %s21
      %p195 = scmp.eq.s32.totalorder %s194, 0
      %s197 = sadd.s32 %s196, 1
      %s198 = scalar_select %p195, %s196, %s197
      %p201 = pneg %p195
      %p202 = scmp.eq.s32.totalorder %s14, 1
      %p203 = por %p201, %p202
      %p204 = scmp.ne.s32.totalorder %s196, %s199
      %p205 = scmp.eq.s32.totalorder %s14, 0
      %p206 = por %p204, %p205
      %p207 = scmp.ne.s32.totalorder %s196, %s199
      %p208 = scmp.eq.s32.totalorder %s19, 1
      %p209 = por %p207, %p208
      %p210 = scmp.ne.s32.totalorder %s199, %s200
      %p211 = scmp.eq.s32.totalorder %s19, 0
      %p212 = por %p210, %p211
      %p213 = scmp.ne.s32.totalorder %s199, %s200
      %p214 = scmp.eq.s32.totalorder %s20, 1
      %p215 = por %p213, %p214
      %p217 = scmp.ne.s32.totalorder %s200, %s216
      %p218 = scmp.eq.s32.totalorder %s20, 0
      %p219 = por %p217, %p218
      %p220 = scmp.le.s32.totalorder 1, %s14
      %p221 = scmp.lt.s32.totalorder %s14, 3
      %p222 = pnand %p220, %p221
      %p223 = pneg %p222
      // Predicated region
      $region9: #{attn_net_forward.3} parent=5 // pred_check
        _
      $region10: #{attn_net_forward.3} parent=5 // pred_check_branch
        %225 = sbr.rel (%p222) target = $region12
      $region11: #{attn_net_forward.3} parent=5 // pred_region
        %s226 = ssub.s32 %s14, 1
        // Predicated region
        $region13: #{attn_net_forward.3} parent=11 // pred_check
          %p227 = pneg %p35
        $region14: #{attn_net_forward.3} parent=11 // pred_check_branch
          %229 = sbr.rel (%p227) target = $region16
        $region15: #{attn_net_forward.3} parent=11 // pred_region
          _
        $region16: #{attn_net_forward.3} parent=11 // pred_fallthru
          _
        // Predicated region
        $region17: #{attn_net_forward.3} parent=11 // pred_check
          %p230 = pneg %p56
        $region18: #{attn_net_forward.3} parent=11 // pred_check_branch
          %232 = sbr.rel (%p230) target = $region20
        $region19: #{attn_net_forward.3} parent=11 // pred_region
          _
        $region20: #{attn_net_forward.3} parent=11 // pred_fallthru
          _
      $region12: #{attn_net_forward.3} parent=5 // pred_fallthru
        _
      %p233 = scmp.lt.s32.totalorder %s14, 2
      // Predicated region
      $region21: #{attn_net_forward.3} parent=5 // pred_check
        %p234 = pneg %p233
      $region22: #{attn_net_forward.3} parent=5 // pred_check_branch
        %236 = sbr.rel (%p234) target = $region24
      $region23: #{attn_net_forward.3} parent=5 // pred_region
        // Predicated region
        $region25: #{attn_net_forward.3} parent=23 // pred_check
          %p237 = pneg %p76
        $region26: #{attn_net_forward.3} parent=23 // pred_check_branch
          %239 = sbr.rel (%p237) target = $region28
        $region27: #{attn_net_forward.3} parent=23 // pred_region
          %s240 = sand.u32 %s66, 1
          %s241 = sand.u32 %s66, 1
          %s242 = smul.addr %s241, 512
          %s243 = scalar_lea.vmem [#allocation2], %s242
          %s244 = smul.addr %s14, 4
          %s245 = scalar_lea.vmem %s2, %s244
          // Predicated region
          $region29: #{attn_net_forward.3} parent=27 // pred_check
            _
          $region30: #{attn_net_forward.3} parent=27 // pred_check_branch
            %247 = sbr.rel (0) target = $region32
          $region31: #{attn_net_forward.3} parent=27 // pred_region
            // Predicated region
            $region33: #{attn_net_forward.3} parent=31 // pred_check
              _
            $region34: #{attn_net_forward.3} parent=31 // pred_check_branch
              %249 = sbr.rel target = $region36
            $region35: #{attn_net_forward.3} parent=31 // pred_region
              // Predicated region
              $region48: #{attn_net_forward.3} parent=35 // pred_check
                _
              $region49: #{attn_net_forward.3} parent=35 // pred_check_branch
                %518 = sbr.rel (0) target = $region51
              $region50: #{attn_net_forward.3} parent=35 // pred_region
                loop: start=0, step=1, limit=1
                $region52: #{attn_net_forward.3} parent=50 // loop_pre_header
                  _
                $region53: #{attn_net_forward.3} parent=50 // loop_header
                  %s520 = sphi 0, %s524
                  %p521 = scmp.ge.s32.totalorder %s520, 1
                  %s525 = sphi %s245, %s245
                  %s526 = sphi %s243, %s243
                $region54: #{attn_net_forward.3} parent=50 // loop_header_branch
                  %523 = sbr.rel (%p521) target = $region58
                $region55: #{attn_net_forward.3} parent=50 // loop_body
                  _
                $region56: #{attn_net_forward.3} parent=50 // loop_footer
                  %s524 = sadd.s32 1, %s520
                $region57: #{attn_net_forward.3} parent=50 // loop_footer_branch
                  %519 = sbr.rel target = $region53
                $region58: #{attn_net_forward.3} parent=50 // loop_exit
                  _
                loop: start=0, step=1, limit=1
                $region59: #{attn_net_forward.3} parent=50 // loop_pre_header
                  _
                $region60: #{attn_net_forward.3} parent=50 // loop_header
                  %s529 = sphi 0, %s533
                  %p530 = scmp.ge.s32.totalorder %s529, 1
                  %s534 = sphi %s245, %s245
                  %s535 = sphi %s243, %s243
                $region61: #{attn_net_forward.3} parent=50 // loop_header_branch
                  %532 = sbr.rel (%p530) target = $region65
                $region62: #{attn_net_forward.3} parent=50 // loop_body
                  %v536 = vld [vmem:[%s534] sm:$0xf]
                  %537 = vst [vmem:[%s535] sm:$0xf] %v536
                  %v538 = vld [vmem:[%s534 + $0x8] sm:$0xf]
                  %539 = vst [vmem:[%s535 + $0x4] sm:$0xf] %v538
                  %v540 = vld [vmem:[%s534 + $0x10] sm:$0xf]
                  %541 = vst [vmem:[%s535 + $0x8] sm:$0xf] %v540
                  %v542 = vld [vmem:[%s534 + $0x18] sm:$0xf]
                  %543 = vst [vmem:[%s535 + $0xc] sm:$0xf] %v542
                  %v544 = vld [vmem:[%s534 + $0x20] sm:$0xf]
                  %545 = vst [vmem:[%s535 + $0x10] sm:$0xf] %v544
                  %v546 = vld [vmem:[%s534 + $0x28] sm:$0xf]
                  %547 = vst [vmem:[%s535 + $0x14] sm:$0xf] %v546
                  %v548 = vld [vmem:[%s534 + $0x30] sm:$0xf]
                  %549 = vst [vmem:[%s535 + $0x18] sm:$0xf] %v548
                  %v550 = vld [vmem:[%s534 + $0x38] sm:$0xf]
                  %551 = vst [vmem:[%s535 + $0x1c] sm:$0xf] %v550
                  %v552 = vld [vmem:[%s534 + $0x40] sm:$0xf]
                  %553 = vst [vmem:[%s535 + $0x20] sm:$0xf] %v552
                  %v554 = vld [vmem:[%s534 + $0x48] sm:$0xf]
                  %555 = vst [vmem:[%s535 + $0x24] sm:$0xf] %v554
                  %v556 = vld [vmem:[%s534 + $0x50] sm:$0xf]
                  %557 = vst [vmem:[%s535 + $0x28] sm:$0xf] %v556
                  %v558 = vld [vmem:[%s534 + $0x58] sm:$0xf]
                  %559 = vst [vmem:[%s535 + $0x2c] sm:$0xf] %v558
                  %v560 = vld [vmem:[%s534 + $0x60] sm:$0xf]
                  %561 = vst [vmem:[%s535 + $0x30] sm:$0xf] %v560
                  %v562 = vld [vmem:[%s534 + $0x68] sm:$0xf]
                  %563 = vst [vmem:[%s535 + $0x34] sm:$0xf] %v562
                  %v564 = vld [vmem:[%s534 + $0x70] sm:$0xf]
                  %565 = vst [vmem:[%s535 + $0x38] sm:$0xf] %v564
                  %v566 = vld [vmem:[%s534 + $0x78] sm:$0xf]
                  %567 = vst [vmem:[%s535 + $0x3c] sm:$0xf] %v566
                  %v568 = vld [vmem:[%s534 + $0x80] sm:$0xf]
                  %569 = vst [vmem:[%s535 + $0x40] sm:$0xf] %v568
                  %v570 = vld [vmem:[%s534 + $0x88] sm:$0xf]
                  %571 = vst [vmem:[%s535 + $0x44] sm:$0xf] %v570
                  %v572 = vld [vmem:[%s534 + $0x90] sm:$0xf]
                  %573 = vst [vmem:[%s535 + $0x48] sm:$0xf] %v572
                  %v574 = vld [vmem:[%s534 + $0x98] sm:$0xf]
                  %575 = vst [vmem:[%s535 + $0x4c] sm:$0xf] %v574
                  %v576 = vld [vmem:[%s534 + $0xa0] sm:$0xf]
                  %577 = vst [vmem:[%s535 + $0x50] sm:$0xf] %v576
                  %v578 = vld [vmem:[%s534 + $0xa8] sm:$0xf]
                  %579 = vst [vmem:[%s535 + $0x54] sm:$0xf] %v578
                  %v580 = vld [vmem:[%s534 + $0xb0] sm:$0xf]
                  %581 = vst [vmem:[%s535 + $0x58] sm:$0xf] %v580
                  %v582 = vld [vmem:[%s534 + $0xb8] sm:$0xf]
                  %583 = vst [vmem:[%s535 + $0x5c] sm:$0xf] %v582
                  %v584 = vld [vmem:[%s534 + $0xc0] sm:$0xf]
                  %585 = vst [vmem:[%s535 + $0x60] sm:$0xf] %v584
                  %v586 = vld [vmem:[%s534 + $0xc8] sm:$0xf]
                  %587 = vst [vmem:[%s535 + $0x64] sm:$0xf] %v586
                  %v588 = vld [vmem:[%s534 + $0xd0] sm:$0xf]
                  %589 = vst [vmem:[%s535 + $0x68] sm:$0xf] %v588
                  %v590 = vld [vmem:[%s534 + $0xd8] sm:$0xf]
                  %591 = vst [vmem:[%s535 + $0x6c] sm:$0xf] %v590
                  %v592 = vld [vmem:[%s534 + $0xe0] sm:$0xf]
                  %593 = vst [vmem:[%s535 + $0x70] sm:$0xf] %v592
                  %v594 = vld [vmem:[%s534 + $0xe8] sm:$0xf]
                  %595 = vst [vmem:[%s535 + $0x74] sm:$0xf] %v594
                  %v596 = vld [vmem:[%s534 + $0xf0] sm:$0xf]
                  %597 = vst [vmem:[%s535 + $0x78] sm:$0xf] %v596
                  %v598 = vld [vmem:[%s534 + $0xf8] sm:$0xf]
                  %599 = vst [vmem:[%s535 + $0x7c] sm:$0xf] %v598
                  %v600 = vld [vmem:[%s534 + $0x100] sm:$0xf]
                  %601 = vst [vmem:[%s535 + $0x80] sm:$0xf] %v600
                  %v602 = vld [vmem:[%s534 + $0x108] sm:$0xf]
                  %603 = vst [vmem:[%s535 + $0x84] sm:$0xf] %v602
                  %v604 = vld [vmem:[%s534 + $0x110] sm:$0xf]
                  %605 = vst [vmem:[%s535 + $0x88] sm:$0xf] %v604
                  %v606 = vld [vmem:[%s534 + $0x118] sm:$0xf]
                  %607 = vst [vmem:[%s535 + $0x8c] sm:$0xf] %v606
                  %v608 = vld [vmem:[%s534 + $0x120] sm:$0xf]
                  %609 = vst [vmem:[%s535 + $0x90] sm:$0xf] %v608
                  %v610 = vld [vmem:[%s534 + $0x128] sm:$0xf]
                  %611 = vst [vmem:[%s535 + $0x94] sm:$0xf] %v610
                  %v612 = vld [vmem:[%s534 + $0x130] sm:$0xf]
                  %613 = vst [vmem:[%s535 + $0x98] sm:$0xf] %v612
                  %v614 = vld [vmem:[%s534 + $0x138] sm:$0xf]
                  %615 = vst [vmem:[%s535 + $0x9c] sm:$0xf] %v614
                  %v616 = vld [vmem:[%s534 + $0x140] sm:$0xf]
                  %617 = vst [vmem:[%s535 + $0xa0] sm:$0xf] %v616
                  %v618 = vld [vmem:[%s534 + $0x148] sm:$0xf]
                  %619 = vst [vmem:[%s535 + $0xa4] sm:$0xf] %v618
                  %v620 = vld [vmem:[%s534 + $0x150] sm:$0xf]
                  %621 = vst [vmem:[%s535 + $0xa8] sm:$0xf] %v620
                  %v622 = vld [vmem:[%s534 + $0x158] sm:$0xf]
                  %623 = vst [vmem:[%s535 + $0xac] sm:$0xf] %v622
                  %v624 = vld [vmem:[%s534 + $0x160] sm:$0xf]
                  %625 = vst [vmem:[%s535 + $0xb0] sm:$0xf] %v624
                  %v626 = vld [vmem:[%s534 + $0x168] sm:$0xf]
                  %627 = vst [vmem:[%s535 + $0xb4] sm:$0xf] %v626
                  %v628 = vld [vmem:[%s534 + $0x170] sm:$0xf]
                  %629 = vst [vmem:[%s535 + $0xb8] sm:$0xf] %v628
                  %v630 = vld [vmem:[%s534 + $0x178] sm:$0xf]
                  %631 = vst [vmem:[%s535 + $0xbc] sm:$0xf] %v630
                  %v632 = vld [vmem:[%s534 + $0x180] sm:$0xf]
                  %633 = vst [vmem:[%s535 + $0xc0] sm:$0xf] %v632
                  %v634 = vld [vmem:[%s534 + $0x188] sm:$0xf]
                  %635 = vst [vmem:[%s535 + $0xc4] sm:$0xf] %v634
                  %v636 = vld [vmem:[%s534 + $0x190] sm:$0xf]
                  %637 = vst [vmem:[%s535 + $0xc8] sm:$0xf] %v636
                  %v638 = vld [vmem:[%s534 + $0x198] sm:$0xf]
                  %639 = vst [vmem:[%s535 + $0xcc] sm:$0xf] %v638
                  %v640 = vld [vmem:[%s534 + $0x1a0] sm:$0xf]
                  %641 = vst [vmem:[%s535 + $0xd0] sm:$0xf] %v640
                  %v642 = vld [vmem:[%s534 + $0x1a8] sm:$0xf]
                  %643 = vst [vmem:[%s535 + $0xd4] sm:$0xf] %v642
                  %v644 = vld [vmem:[%s534 + $0x1b0] sm:$0xf]
                  %645 = vst [vmem:[%s535 + $0xd8] sm:$0xf] %v644
                  %v646 = vld [vmem:[%s534 + $0x1b8] sm:$0xf]
                  %647 = vst [vmem:[%s535 + $0xdc] sm:$0xf] %v646
                  %v648 = vld [vmem:[%s534 + $0x1c0] sm:$0xf]
                  %649 = vst [vmem:[%s535 + $0xe0] sm:$0xf] %v648
                  %v650 = vld [vmem:[%s534 + $0x1c8] sm:$0xf]
                  %651 = vst [vmem:[%s535 + $0xe4] sm:$0xf] %v650
                  %v652 = vld [vmem:[%s534 + $0x1d0] sm:$0xf]
                  %653 = vst [vmem:[%s535 + $0xe8] sm:$0xf] %v652
                  %v654 = vld [vmem:[%s534 + $0x1d8] sm:$0xf]
                  %655 = vst [vmem:[%s535 + $0xec] sm:$0xf] %v654
                  %v656 = vld [vmem:[%s534 + $0x1e0] sm:$0xf]
                  %657 = vst [vmem:[%s535 + $0xf0] sm:$0xf] %v656
                  %v658 = vld [vmem:[%s534 + $0x1e8] sm:$0xf]
                  %659 = vst [vmem:[%s535 + $0xf4] sm:$0xf] %v658
                  %v660 = vld [vmem:[%s534 + $0x1f0] sm:$0xf]
                  %661 = vst [vmem:[%s535 + $0xf8] sm:$0xf] %v660
                  %v662 = vld [vmem:[%s534 + $0x1f8] sm:$0xf]
                  %663 = vst [vmem:[%s535 + $0xfc] sm:$0xf] %v662
                  %v664 = vld [vmem:[%s534 + $0x200] sm:$0xf]
                  %665 = vst [vmem:[%s535 + $0x100] sm:$0xf] %v664
                  %v666 = vld [vmem:[%s534 + $0x208] sm:$0xf]
                  %667 = vst [vmem:[%s535 + $0x104] sm:$0xf] %v666
                  %v668 = vld [vmem:[%s534 + $0x210] sm:$0xf]
                  %669 = vst [vmem:[%s535 + $0x108] sm:$0xf] %v668
                  %v670 = vld [vmem:[%s534 + $0x218] sm:$0xf]
                  %671 = vst [vmem:[%s535 + $0x10c] sm:$0xf] %v670
                  %v672 = vld [vmem:[%s534 + $0x220] sm:$0xf]
                  %673 = vst [vmem:[%s535 + $0x110] sm:$0xf] %v672
                  %v674 = vld [vmem:[%s534 + $0x228] sm:$0xf]
                  %675 = vst [vmem:[%s535 + $0x114] sm:$0xf] %v674
                  %v676 = vld [vmem:[%s534 + $0x230] sm:$0xf]
                  %677 = vst [vmem:[%s535 + $0x118] sm:$0xf] %v676
                  %v678 = vld [vmem:[%s534 + $0x238] sm:$0xf]
                  %679 = vst [vmem:[%s535 + $0x11c] sm:$0xf] %v678
                  %v680 = vld [vmem:[%s534 + $0x240] sm:$0xf]
                  %681 = vst [vmem:[%s535 + $0x120] sm:$0xf] %v680
                  %v682 = vld [vmem:[%s534 + $0x248] sm:$0xf]
                  %683 = vst [vmem:[%s535 + $0x124] sm:$0xf] %v682
                  %v684 = vld [vmem:[%s534 + $0x250] sm:$0xf]
                  %685 = vst [vmem:[%s535 + $0x128] sm:$0xf] %v684
                  %v686 = vld [vmem:[%s534 + $0x258] sm:$0xf]
                  %687 = vst [vmem:[%s535 + $0x12c] sm:$0xf] %v686
                  %v688 = vld [vmem:[%s534 + $0x260] sm:$0xf]
                  %689 = vst [vmem:[%s535 + $0x130] sm:$0xf] %v688
                  %v690 = vld [vmem:[%s534 + $0x268] sm:$0xf]
                  %691 = vst [vmem:[%s535 + $0x134] sm:$0xf] %v690
                  %v692 = vld [vmem:[%s534 + $0x270] sm:$0xf]
                  %693 = vst [vmem:[%s535 + $0x138] sm:$0xf] %v692
                  %v694 = vld [vmem:[%s534 + $0x278] sm:$0xf]
                  %695 = vst [vmem:[%s535 + $0x13c] sm:$0xf] %v694
                  %v696 = vld [vmem:[%s534 + $0x280] sm:$0xf]
                  %697 = vst [vmem:[%s535 + $0x140] sm:$0xf] %v696
                  %v698 = vld [vmem:[%s534 + $0x288] sm:$0xf]
                  %699 = vst [vmem:[%s535 + $0x144] sm:$0xf] %v698
                  %v700 = vld [vmem:[%s534 + $0x290] sm:$0xf]
                  %701 = vst [vmem:[%s535 + $0x148] sm:$0xf] %v700
                  %v702 = vld [vmem:[%s534 + $0x298] sm:$0xf]
                  %703 = vst [vmem:[%s535 + $0x14c] sm:$0xf] %v702
                  %v704 = vld [vmem:[%s534 + $0x2a0] sm:$0xf]
                  %705 = vst [vmem:[%s535 + $0x150] sm:$0xf] %v704
                  %v706 = vld [vmem:[%s534 + $0x2a8] sm:$0xf]
                  %707 = vst [vmem:[%s535 + $0x154] sm:$0xf] %v706
                  %v708 = vld [vmem:[%s534 + $0x2b0] sm:$0xf]
                  %709 = vst [vmem:[%s535 + $0x158] sm:$0xf] %v708
                  %v710 = vld [vmem:[%s534 + $0x2b8] sm:$0xf]
                  %711 = vst [vmem:[%s535 + $0x15c] sm:$0xf] %v710
                  %v712 = vld [vmem:[%s534 + $0x2c0] sm:$0xf]
                  %713 = vst [vmem:[%s535 + $0x160] sm:$0xf] %v712
                  %v714 = vld [vmem:[%s534 + $0x2c8] sm:$0xf]
                  %715 = vst [vmem:[%s535 + $0x164] sm:$0xf] %v714
                  %v716 = vld [vmem:[%s534 + $0x2d0] sm:$0xf]
                  %717 = vst [vmem:[%s535 + $0x168] sm:$0xf] %v716
                  %v718 = vld [vmem:[%s534 + $0x2d8] sm:$0xf]
                  %719 = vst [vmem:[%s535 + $0x16c] sm:$0xf] %v718
                  %v720 = vld [vmem:[%s534 + $0x2e0] sm:$0xf]
                  %721 = vst [vmem:[%s535 + $0x170] sm:$0xf] %v720
                  %v722 = vld [vmem:[%s534 + $0x2e8] sm:$0xf]
                  %723 = vst [vmem:[%s535 + $0x174] sm:$0xf] %v722
                  %v724 = vld [vmem:[%s534 + $0x2f0] sm:$0xf]
                  %725 = vst [vmem:[%s535 + $0x178] sm:$0xf] %v724
                  %v726 = vld [vmem:[%s534 + $0x2f8] sm:$0xf]
                  %727 = vst [vmem:[%s535 + $0x17c] sm:$0xf] %v726
                  %v728 = vld [vmem:[%s534 + $0x300] sm:$0xf]
                  %729 = vst [vmem:[%s535 + $0x180] sm:$0xf] %v728
                  %v730 = vld [vmem:[%s534 + $0x308] sm:$0xf]
                  %731 = vst [vmem:[%s535 + $0x184] sm:$0xf] %v730
                  %v732 = vld [vmem:[%s534 + $0x310] sm:$0xf]
                  %733 = vst [vmem:[%s535 + $0x188] sm:$0xf] %v732
                  %v734 = vld [vmem:[%s534 + $0x318] sm:$0xf]
                  %735 = vst [vmem:[%s535 + $0x18c] sm:$0xf] %v734
                  %v736 = vld [vmem:[%s534 + $0x320] sm:$0xf]
                  %737 = vst [vmem:[%s535 + $0x190] sm:$0xf] %v736
                  %v738 = vld [vmem:[%s534 + $0x328] sm:$0xf]
                  %739 = vst [vmem:[%s535 + $0x194] sm:$0xf] %v738
                  %v740 = vld [vmem:[%s534 + $0x330] sm:$0xf]
                  %741 = vst [vmem:[%s535 + $0x198] sm:$0xf] %v740
                  %v742 = vld [vmem:[%s534 + $0x338] sm:$0xf]
                  %743 = vst [vmem:[%s535 + $0x19c] sm:$0xf] %v742
                  %v744 = vld [vmem:[%s534 + $0x340] sm:$0xf]
                  %745 = vst [vmem:[%s535 + $0x1a0] sm:$0xf] %v744
                  %v746 = vld [vmem:[%s534 + $0x348] sm:$0xf]
                  %747 = vst [vmem:[%s535 + $0x1a4] sm:$0xf] %v746
                  %v748 = vld [vmem:[%s534 + $0x350] sm:$0xf]
                  %749 = vst [vmem:[%s535 + $0x1a8] sm:$0xf] %v748
                  %v750 = vld [vmem:[%s534 + $0x358] sm:$0xf]
                  %751 = vst [vmem:[%s535 + $0x1ac] sm:$0xf] %v750
                  %v752 = vld [vmem:[%s534 + $0x360] sm:$0xf]
                  %753 = vst [vmem:[%s535 + $0x1b0] sm:$0xf] %v752
                  %v754 = vld [vmem:[%s534 + $0x368] sm:$0xf]
                  %755 = vst [vmem:[%s535 + $0x1b4] sm:$0xf] %v754
                  %v756 = vld [vmem:[%s534 + $0x370] sm:$0xf]
                  %757 = vst [vmem:[%s535 + $0x1b8] sm:$0xf] %v756
                  %v758 = vld [vmem:[%s534 + $0x378] sm:$0xf]
                  %759 = vst [vmem:[%s535 + $0x1bc] sm:$0xf] %v758
                  %v760 = vld [vmem:[%s534 + $0x380] sm:$0xf]
                  %761 = vst [vmem:[%s535 + $0x1c0] sm:$0xf] %v760
                  %v762 = vld [vmem:[%s534 + $0x388] sm:$0xf]
                  %763 = vst [vmem:[%s535 + $0x1c4] sm:$0xf] %v762
                  %v764 = vld [vmem:[%s534 + $0x390] sm:$0xf]
                  %765 = vst [vmem:[%s535 + $0x1c8] sm:$0xf] %v764
                  %v766 = vld [vmem:[%s534 + $0x398] sm:$0xf]
                  %767 = vst [vmem:[%s535 + $0x1cc] sm:$0xf] %v766
                  %v768 = vld [vmem:[%s534 + $0x3a0] sm:$0xf]
                  %769 = vst [vmem:[%s535 + $0x1d0] sm:$0xf] %v768
                  %v770 = vld [vmem:[%s534 + $0x3a8] sm:$0xf]
                  %771 = vst [vmem:[%s535 + $0x1d4] sm:$0xf] %v770
                  %v772 = vld [vmem:[%s534 + $0x3b0] sm:$0xf]
                  %773 = vst [vmem:[%s535 + $0x1d8] sm:$0xf] %v772
                  %v774 = vld [vmem:[%s534 + $0x3b8] sm:$0xf]
                  %775 = vst [vmem:[%s535 + $0x1dc] sm:$0xf] %v774
                  %v776 = vld [vmem:[%s534 + $0x3c0] sm:$0xf]
                  %777 = vst [vmem:[%s535 + $0x1e0] sm:$0xf] %v776
                  %v778 = vld [vmem:[%s534 + $0x3c8] sm:$0xf]
                  %779 = vst [vmem:[%s535 + $0x1e4] sm:$0xf] %v778
                  %v780 = vld [vmem:[%s534 + $0x3d0] sm:$0xf]
                  %781 = vst [vmem:[%s535 + $0x1e8] sm:$0xf] %v780
                  %v782 = vld [vmem:[%s534 + $0x3d8] sm:$0xf]
                  %783 = vst [vmem:[%s535 + $0x1ec] sm:$0xf] %v782
                  %v784 = vld [vmem:[%s534 + $0x3e0] sm:$0xf]
                  %785 = vst [vmem:[%s535 + $0x1f0] sm:$0xf] %v784
                  %v786 = vld [vmem:[%s534 + $0x3e8] sm:$0xf]
                  %787 = vst [vmem:[%s535 + $0x1f4] sm:$0xf] %v786
                  %v788 = vld [vmem:[%s534 + $0x3f0] sm:$0xf]
                  %789 = vst [vmem:[%s535 + $0x1f8] sm:$0xf] %v788
                  %v790 = vld [vmem:[%s534 + $0x3f8] sm:$0xf]
                  %791 = vst [vmem:[%s535 + $0x1fc] sm:$0xf] %v790
                $region63: #{attn_net_forward.3} parent=50 // loop_footer
                  %s533 = sadd.s32 1, %s529
                $region64: #{attn_net_forward.3} parent=50 // loop_footer_branch
                  %528 = sbr.rel target = $region60
                $region65: #{attn_net_forward.3} parent=50 // loop_exit
                  _
              $region51: #{attn_net_forward.3} parent=35 // pred_fallthru
                _
            $region36: #{attn_net_forward.3} parent=31 // pred_fallthru
              _
            // Predicated region
            $region37: #{attn_net_forward.3} parent=31 // pred_check
              _
            $region38: #{attn_net_forward.3} parent=31 // pred_check_branch
              %251 = sbr.rel (0) target = $region40
            $region39: #{attn_net_forward.3} parent=31 // pred_region
              loop: start=0, step=1, limit=1
              $region41: #{attn_net_forward.3} parent=39 // loop_pre_header
                _
              $region42: #{attn_net_forward.3} parent=39 // loop_header
                %s254 = sphi 0, %s258
                %p255 = scmp.ge.s32.totalorder %s254, 1
                %s259 = sphi %s245, %s245
                %s260 = sphi %s243, %s243
              $region43: #{attn_net_forward.3} parent=39 // loop_header_branch
                %257 = sbr.rel (%p255) target = $region47
              $region44: #{attn_net_forward.3} parent=39 // loop_body
                %v261 = vld [vmem:[%s259] sm:$0xf]
                %262 = vst [vmem:[%s260] sm:$0xf] %v261
                %v263 = vld [vmem:[%s259 + $0x8] sm:$0xf]
                %264 = vst [vmem:[%s260 + $0x4] sm:$0xf] %v263
                %v265 = vld [vmem:[%s259 + $0x10] sm:$0xf]
                %266 = vst [vmem:[%s260 + $0x8] sm:$0xf] %v265
                %v267 = vld [vmem:[%s259 + $0x18] sm:$0xf]
                %268 = vst [vmem:[%s260 + $0xc] sm:$0xf] %v267
                %v269 = vld [vmem:[%s259 + $0x20] sm:$0xf]
                %270 = vst [vmem:[%s260 + $0x10] sm:$0xf] %v269
                %v271 = vld [vmem:[%s259 + $0x28] sm:$0xf]
                %272 = vst [vmem:[%s260 + $0x14] sm:$0xf] %v271
                %v273 = vld [vmem:[%s259 + $0x30] sm:$0xf]
                %274 = vst [vmem:[%s260 + $0x18] sm:$0xf] %v273
                %v275 = vld [vmem:[%s259 + $0x38] sm:$0xf]
                %276 = vst [vmem:[%s260 + $0x1c] sm:$0xf] %v275
                %v277 = vld [vmem:[%s259 + $0x40] sm:$0xf]
                %278 = vst [vmem:[%s260 + $0x20] sm:$0xf] %v277
                %v279 = vld [vmem:[%s259 + $0x48] sm:$0xf]
                %280 = vst [vmem:[%s260 + $0x24] sm:$0xf] %v279
                %v281 = vld [vmem:[%s259 + $0x50] sm:$0xf]
                %282 = vst [vmem:[%s260 + $0x28] sm:$0xf] %v281
                %v283 = vld [vmem:[%s259 + $0x58] sm:$0xf]
                %284 = vst [vmem:[%s260 + $0x2c] sm:$0xf] %v283
                %v285 = vld [vmem:[%s259 + $0x60] sm:$0xf]
                %286 = vst [vmem:[%s260 + $0x30] sm:$0xf] %v285
                %v287 = vld [vmem:[%s259 + $0x68] sm:$0xf]
                %288 = vst [vmem:[%s260 + $0x34] sm:$0xf] %v287
                %v289 = vld [vmem:[%s259 + $0x70] sm:$0xf]
                %290 = vst [vmem:[%s260 + $0x38] sm:$0xf] %v289
                %v291 = vld [vmem:[%s259 + $0x78] sm:$0xf]
                %292 = vst [vmem:[%s260 + $0x3c] sm:$0xf] %v291
                %v293 = vld [vmem:[%s259 + $0x80] sm:$0xf]
                %294 = vst [vmem:[%s260 + $0x40] sm:$0xf] %v293
                %v295 = vld [vmem:[%s259 + $0x88] sm:$0xf]
                %296 = vst [vmem:[%s260 + $0x44] sm:$0xf] %v295
                %v297 = vld [vmem:[%s259 + $0x90] sm:$0xf]
                %298 = vst [vmem:[%s260 + $0x48] sm:$0xf] %v297
                %v299 = vld [vmem:[%s259 + $0x98] sm:$0xf]
                %300 = vst [vmem:[%s260 + $0x4c] sm:$0xf] %v299
                %v301 = vld [vmem:[%s259 + $0xa0] sm:$0xf]
                %302 = vst [vmem:[%s260 + $0x50] sm:$0xf] %v301
                %v303 = vld [vmem:[%s259 + $0xa8] sm:$0xf]
                %304 = vst [vmem:[%s260 + $0x54] sm:$0xf] %v303
                %v305 = vld [vmem:[%s259 + $0xb0] sm:$0xf]
                %306 = vst [vmem:[%s260 + $0x58] sm:$0xf] %v305
                %v307 = vld [vmem:[%s259 + $0xb8] sm:$0xf]
                %308 = vst [vmem:[%s260 + $0x5c] sm:$0xf] %v307
                %v309 = vld [vmem:[%s259 + $0xc0] sm:$0xf]
                %310 = vst [vmem:[%s260 + $0x60] sm:$0xf] %v309
                %v311 = vld [vmem:[%s259 + $0xc8] sm:$0xf]
                %312 = vst [vmem:[%s260 + $0x64] sm:$0xf] %v311
                %v313 = vld [vmem:[%s259 + $0xd0] sm:$0xf]
                %314 = vst [vmem:[%s260 + $0x68] sm:$0xf] %v313
                %v315 = vld [vmem:[%s259 + $0xd8] sm:$0xf]
                %316 = vst [vmem:[%s260 + $0x6c] sm:$0xf] %v315
                %v317 = vld [vmem:[%s259 + $0xe0] sm:$0xf]
                %318 = vst [vmem:[%s260 + $0x70] sm:$0xf] %v317
                %v319 = vld [vmem:[%s259 + $0xe8] sm:$0xf]
                %320 = vst [vmem:[%s260 + $0x74] sm:$0xf] %v319
                %v321 = vld [vmem:[%s259 + $0xf0] sm:$0xf]
                %322 = vst [vmem:[%s260 + $0x78] sm:$0xf] %v321
                %v323 = vld [vmem:[%s259 + $0xf8] sm:$0xf]
                %324 = vst [vmem:[%s260 + $0x7c] sm:$0xf] %v323
                %v325 = vld [vmem:[%s259 + $0x100] sm:$0xf]
                %326 = vst [vmem:[%s260 + $0x80] sm:$0xf] %v325
                %v327 = vld [vmem:[%s259 + $0x108] sm:$0xf]
                %328 = vst [vmem:[%s260 + $0x84] sm:$0xf] %v327
                %v329 = vld [vmem:[%s259 + $0x110] sm:$0xf]
                %330 = vst [vmem:[%s260 + $0x88] sm:$0xf] %v329
                %v331 = vld [vmem:[%s259 + $0x118] sm:$0xf]
                %332 = vst [vmem:[%s260 + $0x8c] sm:$0xf] %v331
                %v333 = vld [vmem:[%s259 + $0x120] sm:$0xf]
                %334 = vst [vmem:[%s260 + $0x90] sm:$0xf] %v333
                %v335 = vld [vmem:[%s259 + $0x128] sm:$0xf]
                %336 = vst [vmem:[%s260 + $0x94] sm:$0xf] %v335
                %v337 = vld [vmem:[%s259 + $0x130] sm:$0xf]
                %338 = vst [vmem:[%s260 + $0x98] sm:$0xf] %v337
                %v339 = vld [vmem:[%s259 + $0x138] sm:$0xf]
                %340 = vst [vmem:[%s260 + $0x9c] sm:$0xf] %v339
                %v341 = vld [vmem:[%s259 + $0x140] sm:$0xf]
                %342 = vst [vmem:[%s260 + $0xa0] sm:$0xf] %v341
                %v343 = vld [vmem:[%s259 + $0x148] sm:$0xf]
                %344 = vst [vmem:[%s260 + $0xa4] sm:$0xf] %v343
                %v345 = vld [vmem:[%s259 + $0x150] sm:$0xf]
                %346 = vst [vmem:[%s260 + $0xa8] sm:$0xf] %v345
                %v347 = vld [vmem:[%s259 + $0x158] sm:$0xf]
                %348 = vst [vmem:[%s260 + $0xac] sm:$0xf] %v347
                %v349 = vld [vmem:[%s259 + $0x160] sm:$0xf]
                %350 = vst [vmem:[%s260 + $0xb0] sm:$0xf] %v349
                %v351 = vld [vmem:[%s259 + $0x168] sm:$0xf]
                %352 = vst [vmem:[%s260 + $0xb4] sm:$0xf] %v351
                %v353 = vld [vmem:[%s259 + $0x170] sm:$0xf]
                %354 = vst [vmem:[%s260 + $0xb8] sm:$0xf] %v353
                %v355 = vld [vmem:[%s259 + $0x178] sm:$0xf]
                %356 = vst [vmem:[%s260 + $0xbc] sm:$0xf] %v355
                %v357 = vld [vmem:[%s259 + $0x180] sm:$0xf]
                %358 = vst [vmem:[%s260 + $0xc0] sm:$0xf] %v357
                %v359 = vld [vmem:[%s259 + $0x188] sm:$0xf]
                %360 = vst [vmem:[%s260 + $0xc4] sm:$0xf] %v359
                %v361 = vld [vmem:[%s259 + $0x190] sm:$0xf]
                %362 = vst [vmem:[%s260 + $0xc8] sm:$0xf] %v361
                %v363 = vld [vmem:[%s259 + $0x198] sm:$0xf]
                %364 = vst [vmem:[%s260 + $0xcc] sm:$0xf] %v363
                %v365 = vld [vmem:[%s259 + $0x1a0] sm:$0xf]
                %366 = vst [vmem:[%s260 + $0xd0] sm:$0xf] %v365
                %v367 = vld [vmem:[%s259 + $0x1a8] sm:$0xf]
                %368 = vst [vmem:[%s260 + $0xd4] sm:$0xf] %v367
                %v369 = vld [vmem:[%s259 + $0x1b0] sm:$0xf]
                %370 = vst [vmem:[%s260 + $0xd8] sm:$0xf] %v369
                %v371 = vld [vmem:[%s259 + $0x1b8] sm:$0xf]
                %372 = vst [vmem:[%s260 + $0xdc] sm:$0xf] %v371
                %v373 = vld [vmem:[%s259 + $0x1c0] sm:$0xf]
                %374 = vst [vmem:[%s260 + $0xe0] sm:$0xf] %v373
                %v375 = vld [vmem:[%s259 + $0x1c8] sm:$0xf]
                %376 = vst [vmem:[%s260 + $0xe4] sm:$0xf] %v375
                %v377 = vld [vmem:[%s259 + $0x1d0] sm:$0xf]
                %378 = vst [vmem:[%s260 + $0xe8] sm:$0xf] %v377
                %v379 = vld [vmem:[%s259 + $0x1d8] sm:$0xf]
                %380 = vst [vmem:[%s260 + $0xec] sm:$0xf] %v379
                %v381 = vld [vmem:[%s259 + $0x1e0] sm:$0xf]
                %382 = vst [vmem:[%s260 + $0xf0] sm:$0xf] %v381
                %v383 = vld [vmem:[%s259 + $0x1e8] sm:$0xf]
                %384 = vst [vmem:[%s260 + $0xf4] sm:$0xf] %v383
                %v385 = vld [vmem:[%s259 + $0x1f0] sm:$0xf]
                %386 = vst [vmem:[%s260 + $0xf8] sm:$0xf] %v385
                %v387 = vld [vmem:[%s259 + $0x1f8] sm:$0xf]
                %388 = vst [vmem:[%s260 + $0xfc] sm:$0xf] %v387
                %v389 = vld [vmem:[%s259 + $0x200] sm:$0xf]
                %390 = vst [vmem:[%s260 + $0x100] sm:$0xf] %v389
                %v391 = vld [vmem:[%s259 + $0x208] sm:$0xf]
                %392 = vst [vmem:[%s260 + $0x104] sm:$0xf] %v391
                %v393 = vld [vmem:[%s259 + $0x210] sm:$0xf]
                %394 = vst [vmem:[%s260 + $0x108] sm:$0xf] %v393
                %v395 = vld [vmem:[%s259 + $0x218] sm:$0xf]
                %396 = vst [vmem:[%s260 + $0x10c] sm:$0xf] %v395
                %v397 = vld [vmem:[%s259 + $0x220] sm:$0xf]
                %398 = vst [vmem:[%s260 + $0x110] sm:$0xf] %v397
                %v399 = vld [vmem:[%s259 + $0x228] sm:$0xf]
                %400 = vst [vmem:[%s260 + $0x114] sm:$0xf] %v399
                %v401 = vld [vmem:[%s259 + $0x230] sm:$0xf]
                %402 = vst [vmem:[%s260 + $0x118] sm:$0xf] %v401
                %v403 = vld [vmem:[%s259 + $0x238] sm:$0xf]
                %404 = vst [vmem:[%s260 + $0x11c] sm:$0xf] %v403
                %v405 = vld [vmem:[%s259 + $0x240] sm:$0xf]
                %406 = vst [vmem:[%s260 + $0x120] sm:$0xf] %v405
                %v407 = vld [vmem:[%s259 + $0x248] sm:$0xf]
                %408 = vst [vmem:[%s260 + $0x124] sm:$0xf] %v407
                %v409 = vld [vmem:[%s259 + $0x250] sm:$0xf]
                %410 = vst [vmem:[%s260 + $0x128] sm:$0xf] %v409
                %v411 = vld [vmem:[%s259 + $0x258] sm:$0xf]
                %412 = vst [vmem:[%s260 + $0x12c] sm:$0xf] %v411
                %v413 = vld [vmem:[%s259 + $0x260] sm:$0xf]
                %414 = vst [vmem:[%s260 + $0x130] sm:$0xf] %v413
                %v415 = vld [vmem:[%s259 + $0x268] sm:$0xf]
                %416 = vst [vmem:[%s260 + $0x134] sm:$0xf] %v415
                %v417 = vld [vmem:[%s259 + $0x270] sm:$0xf]
                %418 = vst [vmem:[%s260 + $0x138] sm:$0xf] %v417
                %v419 = vld [vmem:[%s259 + $0x278] sm:$0xf]
                %420 = vst [vmem:[%s260 + $0x13c] sm:$0xf] %v419
                %v421 = vld [vmem:[%s259 + $0x280] sm:$0xf]
                %422 = vst [vmem:[%s260 + $0x140] sm:$0xf] %v421
                %v423 = vld [vmem:[%s259 + $0x288] sm:$0xf]
                %424 = vst [vmem:[%s260 + $0x144] sm:$0xf] %v423
                %v425 = vld [vmem:[%s259 + $0x290] sm:$0xf]
                %426 = vst [vmem:[%s260 + $0x148] sm:$0xf] %v425
                %v427 = vld [vmem:[%s259 + $0x298] sm:$0xf]
                %428 = vst [vmem:[%s260 + $0x14c] sm:$0xf] %v427
                %v429 = vld [vmem:[%s259 + $0x2a0] sm:$0xf]
                %430 = vst [vmem:[%s260 + $0x150] sm:$0xf] %v429
                %v431 = vld [vmem:[%s259 + $0x2a8] sm:$0xf]
                %432 = vst [vmem:[%s260 + $0x154] sm:$0xf] %v431
                %v433 = vld [vmem:[%s259 + $0x2b0] sm:$0xf]
                %434 = vst [vmem:[%s260 + $0x158] sm:$0xf] %v433
                %v435 = vld [vmem:[%s259 + $0x2b8] sm:$0xf]
                %436 = vst [vmem:[%s260 + $0x15c] sm:$0xf] %v435
                %v437 = vld [vmem:[%s259 + $0x2c0] sm:$0xf]
                %438 = vst [vmem:[%s260 + $0x160] sm:$0xf] %v437
                %v439 = vld [vmem:[%s259 + $0x2c8] sm:$0xf]
                %440 = vst [vmem:[%s260 + $0x164] sm:$0xf] %v439
                %v441 = vld [vmem:[%s259 + $0x2d0] sm:$0xf]
                %442 = vst [vmem:[%s260 + $0x168] sm:$0xf] %v441
                %v443 = vld [vmem:[%s259 + $0x2d8] sm:$0xf]
                %444 = vst [vmem:[%s260 + $0x16c] sm:$0xf] %v443
                %v445 = vld [vmem:[%s259 + $0x2e0] sm:$0xf]
                %446 = vst [vmem:[%s260 + $0x170] sm:$0xf] %v445
                %v447 = vld [vmem:[%s259 + $0x2e8] sm:$0xf]
                %448 = vst [vmem:[%s260 + $0x174] sm:$0xf] %v447
                %v449 = vld [vmem:[%s259 + $0x2f0] sm:$0xf]
                %450 = vst [vmem:[%s260 + $0x178] sm:$0xf] %v449
                %v451 = vld [vmem:[%s259 + $0x2f8] sm:$0xf]
                %452 = vst [vmem:[%s260 + $0x17c] sm:$0xf] %v451
                %v453 = vld [vmem:[%s259 + $0x300] sm:$0xf]
                %454 = vst [vmem:[%s260 + $0x180] sm:$0xf] %v453
                %v455 = vld [vmem:[%s259 + $0x308] sm:$0xf]
                %456 = vst [vmem:[%s260 + $0x184] sm:$0xf] %v455
                %v457 = vld [vmem:[%s259 + $0x310] sm:$0xf]
                %458 = vst [vmem:[%s260 + $0x188] sm:$0xf] %v457
                %v459 = vld [vmem:[%s259 + $0x318] sm:$0xf]
                %460 = vst [vmem:[%s260 + $0x18c] sm:$0xf] %v459
                %v461 = vld [vmem:[%s259 + $0x320] sm:$0xf]
                %462 = vst [vmem:[%s260 + $0x190] sm:$0xf] %v461
                %v463 = vld [vmem:[%s259 + $0x328] sm:$0xf]
                %464 = vst [vmem:[%s260 + $0x194] sm:$0xf] %v463
                %v465 = vld [vmem:[%s259 + $0x330] sm:$0xf]
                %466 = vst [vmem:[%s260 + $0x198] sm:$0xf] %v465
                %v467 = vld [vmem:[%s259 + $0x338] sm:$0xf]
                %468 = vst [vmem:[%s260 + $0x19c] sm:$0xf] %v467
                %v469 = vld [vmem:[%s259 + $0x340] sm:$0xf]
                %470 = vst [vmem:[%s260 + $0x1a0] sm:$0xf] %v469
                %v471 = vld [vmem:[%s259 + $0x348] sm:$0xf]
                %472 = vst [vmem:[%s260 + $0x1a4] sm:$0xf] %v471
                %v473 = vld [vmem:[%s259 + $0x350] sm:$0xf]
                %474 = vst [vmem:[%s260 + $0x1a8] sm:$0xf] %v473
                %v475 = vld [vmem:[%s259 + $0x358] sm:$0xf]
                %476 = vst [vmem:[%s260 + $0x1ac] sm:$0xf] %v475
                %v477 = vld [vmem:[%s259 + $0x360] sm:$0xf]
                %478 = vst [vmem:[%s260 + $0x1b0] sm:$0xf] %v477
                %v479 = vld [vmem:[%s259 + $0x368] sm:$0xf]
                %480 = vst [vmem:[%s260 + $0x1b4] sm:$0xf] %v479
                %v481 = vld [vmem:[%s259 + $0x370] sm:$0xf]
                %482 = vst [vmem:[%s260 + $0x1b8] sm:$0xf] %v481
                %v483 = vld [vmem:[%s259 + $0x378] sm:$0xf]
                %484 = vst [vmem:[%s260 + $0x1bc] sm:$0xf] %v483
                %v485 = vld [vmem:[%s259 + $0x380] sm:$0xf]
                %486 = vst [vmem:[%s260 + $0x1c0] sm:$0xf] %v485
                %v487 = vld [vmem:[%s259 + $0x388] sm:$0xf]
                %488 = vst [vmem:[%s260 + $0x1c4] sm:$0xf] %v487
                %v489 = vld [vmem:[%s259 + $0x390] sm:$0xf]
                %490 = vst [vmem:[%s260 + $0x1c8] sm:$0xf] %v489
                %v491 = vld [vmem:[%s259 + $0x398] sm:$0xf]
                %492 = vst [vmem:[%s260 + $0x1cc] sm:$0xf] %v491
                %v493 = vld [vmem:[%s259 + $0x3a0] sm:$0xf]
                %494 = vst [vmem:[%s260 + $0x1d0] sm:$0xf] %v493
                %v495 = vld [vmem:[%s259 + $0x3a8] sm:$0xf]
                %496 = vst [vmem:[%s260 + $0x1d4] sm:$0xf] %v495
                %v497 = vld [vmem:[%s259 + $0x3b0] sm:$0xf]
                %498 = vst [vmem:[%s260 + $0x1d8] sm:$0xf] %v497
                %v499 = vld [vmem:[%s259 + $0x3b8] sm:$0xf]
                %500 = vst [vmem:[%s260 + $0x1dc] sm:$0xf] %v499
                %v501 = vld [vmem:[%s259 + $0x3c0] sm:$0xf]
                %502 = vst [vmem:[%s260 + $0x1e0] sm:$0xf] %v501
                %v503 = vld [vmem:[%s259 + $0x3c8] sm:$0xf]
                %504 = vst [vmem:[%s260 + $0x1e4] sm:$0xf] %v503
                %v505 = vld [vmem:[%s259 + $0x3d0] sm:$0xf]
                %506 = vst [vmem:[%s260 + $0x1e8] sm:$0xf] %v505
                %v507 = vld [vmem:[%s259 + $0x3d8] sm:$0xf]
                %508 = vst [vmem:[%s260 + $0x1ec] sm:$0xf] %v507
                %v509 = vld [vmem:[%s259 + $0x3e0] sm:$0xf]
                %510 = vst [vmem:[%s260 + $0x1f0] sm:$0xf] %v509
                %v511 = vld [vmem:[%s259 + $0x3e8] sm:$0xf]
                %512 = vst [vmem:[%s260 + $0x1f4] sm:$0xf] %v511
                %v513 = vld [vmem:[%s259 + $0x3f0] sm:$0xf]
                %514 = vst [vmem:[%s260 + $0x1f8] sm:$0xf] %v513
                %v515 = vld [vmem:[%s259 + $0x3f8] sm:$0xf]
                %516 = vst [vmem:[%s260 + $0x1fc] sm:$0xf] %v515
              $region45: #{attn_net_forward.3} parent=39 // loop_footer
                %s258 = sadd.s32 1, %s254
              $region46: #{attn_net_forward.3} parent=39 // loop_footer_branch
                %253 = sbr.rel target = $region42
              $region47: #{attn_net_forward.3} parent=39 // loop_exit
                _
            $region40: #{attn_net_forward.3} parent=31 // pred_fallthru
              _
          $region32: #{attn_net_forward.3} parent=27 // pred_fallthru
            _
          %792 = vnop
        $region28: #{attn_net_forward.3} parent=23 // pred_fallthru
          _
        // Predicated region
        $region66: #{attn_net_forward.3} parent=23 // pred_check
          %p793 = pneg %p102
        $region67: #{attn_net_forward.3} parent=23 // pred_check_branch
          %795 = sbr.rel (%p793) target = $region69
        $region68: #{attn_net_forward.3} parent=23 // pred_region
          %p796 = scmp.lt.s32.totalorder %s14, 1
          %s797 = scalar_select %p796, %s14, 1
          %s798 = scalar_lea.vmem %s3, %s797
        $region69: #{attn_net_forward.3} parent=23 // pred_fallthru
          _
        // Predicated region
        $region70: #{attn_net_forward.3} parent=23 // pred_check
          %p799 = pneg %p128
        $region71: #{attn_net_forward.3} parent=23 // pred_check_branch
          %801 = sbr.rel (%p799) target = $region73
        $region72: #{attn_net_forward.3} parent=23 // pred_region
          %s802 = sand.u32 %s118, 1
          %s803 = sand.u32 %s118, 1
          %s804 = smul.addr %s803, 1024
          %s805 = scalar_lea.vmem [#allocation3], %s804
          %s806 = smul.u32 2, %s14
          %s807 = smul.addr %s806, 4
          %s808 = scalar_lea.vmem %s4, %s807
          // Predicated region
          $region74: #{attn_net_forward.3} parent=72 // pred_check
            _
          $region75: #{attn_net_forward.3} parent=72 // pred_check_branch
            %810 = sbr.rel (0) target = $region77
          $region76: #{attn_net_forward.3} parent=72 // pred_region
            // Predicated region
            $region78: #{attn_net_forward.3} parent=76 // pred_check
              _
            $region79: #{attn_net_forward.3} parent=76 // pred_check_branch
              %812 = sbr.rel (0) target = $region81
            $region80: #{attn_net_forward.3} parent=76 // pred_region
              // Predicated region
              $region93: #{attn_net_forward.3} parent=80 // pred_check
                _
              $region94: #{attn_net_forward.3} parent=80 // pred_check_branch
                %1081 = sbr.rel (0) target = $region96
              $region95: #{attn_net_forward.3} parent=80 // pred_region
                loop: start=0, step=1, limit=1
                $region97: #{attn_net_forward.3} parent=95 // loop_pre_header
                  _
                $region98: #{attn_net_forward.3} parent=95 // loop_header
                  %s1083 = sphi 0, %s1087
                  %p1084 = scmp.ge.s32.totalorder %s1083, 1
                  %s1088 = sphi %s808, %s808
                  %s1089 = sphi %s805, %s805
                $region99: #{attn_net_forward.3} parent=95 // loop_header_branch
                  %1086 = sbr.rel (%p1084) target = $region103
                $region100: #{attn_net_forward.3} parent=95 // loop_body
                  %v1090 = vld [vmem:[%s1088] sm:$0xff]
                  %1091 = vst [vmem:[%s1089] sm:$0xff] %v1090
                  %v1092 = vld [vmem:[%s1088 + $0x10] sm:$0xff]
                  %1093 = vst [vmem:[%s1089 + $0x8] sm:$0xff] %v1092
                  %v1094 = vld [vmem:[%s1088 + $0x20] sm:$0xff]
                  %1095 = vst [vmem:[%s1089 + $0x10] sm:$0xff] %v1094
                  %v1096 = vld [vmem:[%s1088 + $0x30] sm:$0xff]
                  %1097 = vst [vmem:[%s1089 + $0x18] sm:$0xff] %v1096
                  %v1098 = vld [vmem:[%s1088 + $0x40] sm:$0xff]
                  %1099 = vst [vmem:[%s1089 + $0x20] sm:$0xff] %v1098
                  %v1100 = vld [vmem:[%s1088 + $0x50] sm:$0xff]
                  %1101 = vst [vmem:[%s1089 + $0x28] sm:$0xff] %v1100
                  %v1102 = vld [vmem:[%s1088 + $0x60] sm:$0xff]
                  %1103 = vst [vmem:[%s1089 + $0x30] sm:$0xff] %v1102
                  %v1104 = vld [vmem:[%s1088 + $0x70] sm:$0xff]
                  %1105 = vst [vmem:[%s1089 + $0x38] sm:$0xff] %v1104
                  %v1106 = vld [vmem:[%s1088 + $0x80] sm:$0xff]
                  %1107 = vst [vmem:[%s1089 + $0x40] sm:$0xff] %v1106
                  %v1108 = vld [vmem:[%s1088 + $0x90] sm:$0xff]
                  %1109 = vst [vmem:[%s1089 + $0x48] sm:$0xff] %v1108
                  %v1110 = vld [vmem:[%s1088 + $0xa0] sm:$0xff]
                  %1111 = vst [vmem:[%s1089 + $0x50] sm:$0xff] %v1110
                  %v1112 = vld [vmem:[%s1088 + $0xb0] sm:$0xff]
                  %1113 = vst [vmem:[%s1089 + $0x58] sm:$0xff] %v1112
                  %v1114 = vld [vmem:[%s1088 + $0xc0] sm:$0xff]
                  %1115 = vst [vmem:[%s1089 + $0x60] sm:$0xff] %v1114
                  %v1116 = vld [vmem:[%s1088 + $0xd0] sm:$0xff]
                  %1117 = vst [vmem:[%s1089 + $0x68] sm:$0xff] %v1116
                  %v1118 = vld [vmem:[%s1088 + $0xe0] sm:$0xff]
                  %1119 = vst [vmem:[%s1089 + $0x70] sm:$0xff] %v1118
                  %v1120 = vld [vmem:[%s1088 + $0xf0] sm:$0xff]
                  %1121 = vst [vmem:[%s1089 + $0x78] sm:$0xff] %v1120
                  %v1122 = vld [vmem:[%s1088 + $0x100] sm:$0xff]
                  %1123 = vst [vmem:[%s1089 + $0x80] sm:$0xff] %v1122
                  %v1124 = vld [vmem:[%s1088 + $0x110] sm:$0xff]
                  %1125 = vst [vmem:[%s1089 + $0x88] sm:$0xff] %v1124
                  %v1126 = vld [vmem:[%s1088 + $0x120] sm:$0xff]
                  %1127 = vst [vmem:[%s1089 + $0x90] sm:$0xff] %v1126
                  %v1128 = vld [vmem:[%s1088 + $0x130] sm:$0xff]
                  %1129 = vst [vmem:[%s1089 + $0x98] sm:$0xff] %v1128
                  %v1130 = vld [vmem:[%s1088 + $0x140] sm:$0xff]
                  %1131 = vst [vmem:[%s1089 + $0xa0] sm:$0xff] %v1130
                  %v1132 = vld [vmem:[%s1088 + $0x150] sm:$0xff]
                  %1133 = vst [vmem:[%s1089 + $0xa8] sm:$0xff] %v1132
                  %v1134 = vld [vmem:[%s1088 + $0x160] sm:$0xff]
                  %1135 = vst [vmem:[%s1089 + $0xb0] sm:$0xff] %v1134
                  %v1136 = vld [vmem:[%s1088 + $0x170] sm:$0xff]
                  %1137 = vst [vmem:[%s1089 + $0xb8] sm:$0xff] %v1136
                  %v1138 = vld [vmem:[%s1088 + $0x180] sm:$0xff]
                  %1139 = vst [vmem:[%s1089 + $0xc0] sm:$0xff] %v1138
                  %v1140 = vld [vmem:[%s1088 + $0x190] sm:$0xff]
                  %1141 = vst [vmem:[%s1089 + $0xc8] sm:$0xff] %v1140
                  %v1142 = vld [vmem:[%s1088 + $0x1a0] sm:$0xff]
                  %1143 = vst [vmem:[%s1089 + $0xd0] sm:$0xff] %v1142
                  %v1144 = vld [vmem:[%s1088 + $0x1b0] sm:$0xff]
                  %1145 = vst [vmem:[%s1089 + $0xd8] sm:$0xff] %v1144
                  %v1146 = vld [vmem:[%s1088 + $0x1c0] sm:$0xff]
                  %1147 = vst [vmem:[%s1089 + $0xe0] sm:$0xff] %v1146
                  %v1148 = vld [vmem:[%s1088 + $0x1d0] sm:$0xff]
                  %1149 = vst [vmem:[%s1089 + $0xe8] sm:$0xff] %v1148
                  %v1150 = vld [vmem:[%s1088 + $0x1e0] sm:$0xff]
                  %1151 = vst [vmem:[%s1089 + $0xf0] sm:$0xff] %v1150
                  %v1152 = vld [vmem:[%s1088 + $0x1f0] sm:$0xff]
                  %1153 = vst [vmem:[%s1089 + $0xf8] sm:$0xff] %v1152
                  %v1154 = vld [vmem:[%s1088 + $0x200] sm:$0xff]
                  %1155 = vst [vmem:[%s1089 + $0x100] sm:$0xff] %v1154
                  %v1156 = vld [vmem:[%s1088 + $0x210] sm:$0xff]
                  %1157 = vst [vmem:[%s1089 + $0x108] sm:$0xff] %v1156
                  %v1158 = vld [vmem:[%s1088 + $0x220] sm:$0xff]
                  %1159 = vst [vmem:[%s1089 + $0x110] sm:$0xff] %v1158
                  %v1160 = vld [vmem:[%s1088 + $0x230] sm:$0xff]
                  %1161 = vst [vmem:[%s1089 + $0x118] sm:$0xff] %v1160
                  %v1162 = vld [vmem:[%s1088 + $0x240] sm:$0xff]
                  %1163 = vst [vmem:[%s1089 + $0x120] sm:$0xff] %v1162
                  %v1164 = vld [vmem:[%s1088 + $0x250] sm:$0xff]
                  %1165 = vst [vmem:[%s1089 + $0x128] sm:$0xff] %v1164
                  %v1166 = vld [vmem:[%s1088 + $0x260] sm:$0xff]
                  %1167 = vst [vmem:[%s1089 + $0x130] sm:$0xff] %v1166
                  %v1168 = vld [vmem:[%s1088 + $0x270] sm:$0xff]
                  %1169 = vst [vmem:[%s1089 + $0x138] sm:$0xff] %v1168
                  %v1170 = vld [vmem:[%s1088 + $0x280] sm:$0xff]
                  %1171 = vst [vmem:[%s1089 + $0x140] sm:$0xff] %v1170
                  %v1172 = vld [vmem:[%s1088 + $0x290] sm:$0xff]
                  %1173 = vst [vmem:[%s1089 + $0x148] sm:$0xff] %v1172
                  %v1174 = vld [vmem:[%s1088 + $0x2a0] sm:$0xff]
                  %1175 = vst [vmem:[%s1089 + $0x150] sm:$0xff] %v1174
                  %v1176 = vld [vmem:[%s1088 + $0x2b0] sm:$0xff]
                  %1177 = vst [vmem:[%s1089 + $0x158] sm:$0xff] %v1176
                  %v1178 = vld [vmem:[%s1088 + $0x2c0] sm:$0xff]
                  %1179 = vst [vmem:[%s1089 + $0x160] sm:$0xff] %v1178
                  %v1180 = vld [vmem:[%s1088 + $0x2d0] sm:$0xff]
                  %1181 = vst [vmem:[%s1089 + $0x168] sm:$0xff] %v1180
                  %v1182 = vld [vmem:[%s1088 + $0x2e0] sm:$0xff]
                  %1183 = vst [vmem:[%s1089 + $0x170] sm:$0xff] %v1182
                  %v1184 = vld [vmem:[%s1088 + $0x2f0] sm:$0xff]
                  %1185 = vst [vmem:[%s1089 + $0x178] sm:$0xff] %v1184
                  %v1186 = vld [vmem:[%s1088 + $0x300] sm:$0xff]
                  %1187 = vst [vmem:[%s1089 + $0x180] sm:$0xff] %v1186
                  %v1188 = vld [vmem:[%s1088 + $0x310] sm:$0xff]
                  %1189 = vst [vmem:[%s1089 + $0x188] sm:$0xff] %v1188
                  %v1190 = vld [vmem:[%s1088 + $0x320] sm:$0xff]
                  %1191 = vst [vmem:[%s1089 + $0x190] sm:$0xff] %v1190
                  %v1192 = vld [vmem:[%s1088 + $0x330] sm:$0xff]
                  %1193 = vst [vmem:[%s1089 + $0x198] sm:$0xff] %v1192
                  %v1194 = vld [vmem:[%s1088 + $0x340] sm:$0xff]
                  %1195 = vst [vmem:[%s1089 + $0x1a0] sm:$0xff] %v1194
                  %v1196 = vld [vmem:[%s1088 + $0x350] sm:$0xff]
                  %1197 = vst [vmem:[%s1089 + $0x1a8] sm:$0xff] %v1196
                  %v1198 = vld [vmem:[%s1088 + $0x360] sm:$0xff]
                  %1199 = vst [vmem:[%s1089 + $0x1b0] sm:$0xff] %v1198
                  %v1200 = vld [vmem:[%s1088 + $0x370] sm:$0xff]
                  %1201 = vst [vmem:[%s1089 + $0x1b8] sm:$0xff] %v1200
                  %v1202 = vld [vmem:[%s1088 + $0x380] sm:$0xff]
                  %1203 = vst [vmem:[%s1089 + $0x1c0] sm:$0xff] %v1202
                  %v1204 = vld [vmem:[%s1088 + $0x390] sm:$0xff]
                  %1205 = vst [vmem:[%s1089 + $0x1c8] sm:$0xff] %v1204
                  %v1206 = vld [vmem:[%s1088 + $0x3a0] sm:$0xff]
                  %1207 = vst [vmem:[%s1089 + $0x1d0] sm:$0xff] %v1206
                  %v1208 = vld [vmem:[%s1088 + $0x3b0] sm:$0xff]
                  %1209 = vst [vmem:[%s1089 + $0x1d8] sm:$0xff] %v1208
                  %v1210 = vld [vmem:[%s1088 + $0x3c0] sm:$0xff]
                  %1211 = vst [vmem:[%s1089 + $0x1e0] sm:$0xff] %v1210
                  %v1212 = vld [vmem:[%s1088 + $0x3d0] sm:$0xff]
                  %1213 = vst [vmem:[%s1089 + $0x1e8] sm:$0xff] %v1212
                  %v1214 = vld [vmem:[%s1088 + $0x3e0] sm:$0xff]
                  %1215 = vst [vmem:[%s1089 + $0x1f0] sm:$0xff] %v1214
                  %v1216 = vld [vmem:[%s1088 + $0x3f0] sm:$0xff]
                  %1217 = vst [vmem:[%s1089 + $0x1f8] sm:$0xff] %v1216
                  %v1218 = vld [vmem:[%s1088 + $0x400] sm:$0xff]
                  %1219 = vst [vmem:[%s1089 + $0x200] sm:$0xff] %v1218
                  %v1220 = vld [vmem:[%s1088 + $0x410] sm:$0xff]
                  %1221 = vst [vmem:[%s1089 + $0x208] sm:$0xff] %v1220
                  %v1222 = vld [vmem:[%s1088 + $0x420] sm:$0xff]
                  %1223 = vst [vmem:[%s1089 + $0x210] sm:$0xff] %v1222
                  %v1224 = vld [vmem:[%s1088 + $0x430] sm:$0xff]
                  %1225 = vst [vmem:[%s1089 + $0x218] sm:$0xff] %v1224
                  %v1226 = vld [vmem:[%s1088 + $0x440] sm:$0xff]
                  %1227 = vst [vmem:[%s1089 + $0x220] sm:$0xff] %v1226
                  %v1228 = vld [vmem:[%s1088 + $0x450] sm:$0xff]
                  %1229 = vst [vmem:[%s1089 + $0x228] sm:$0xff] %v1228
                  %v1230 = vld [vmem:[%s1088 + $0x460] sm:$0xff]
                  %1231 = vst [vmem:[%s1089 + $0x230] sm:$0xff] %v1230
                  %v1232 = vld [vmem:[%s1088 + $0x470] sm:$0xff]
                  %1233 = vst [vmem:[%s1089 + $0x238] sm:$0xff] %v1232
                  %v1234 = vld [vmem:[%s1088 + $0x480] sm:$0xff]
                  %1235 = vst [vmem:[%s1089 + $0x240] sm:$0xff] %v1234
                  %v1236 = vld [vmem:[%s1088 + $0x490] sm:$0xff]
                  %1237 = vst [vmem:[%s1089 + $0x248] sm:$0xff] %v1236
                  %v1238 = vld [vmem:[%s1088 + $0x4a0] sm:$0xff]
                  %1239 = vst [vmem:[%s1089 + $0x250] sm:$0xff] %v1238
                  %v1240 = vld [vmem:[%s1088 + $0x4b0] sm:$0xff]
                  %1241 = vst [vmem:[%s1089 + $0x258] sm:$0xff] %v1240
                  %v1242 = vld [vmem:[%s1088 + $0x4c0] sm:$0xff]
                  %1243 = vst [vmem:[%s1089 + $0x260] sm:$0xff] %v1242
                  %v1244 = vld [vmem:[%s1088 + $0x4d0] sm:$0xff]
                  %1245 = vst [vmem:[%s1089 + $0x268] sm:$0xff] %v1244
                  %v1246 = vld [vmem:[%s1088 + $0x4e0] sm:$0xff]
                  %1247 = vst [vmem:[%s1089 + $0x270] sm:$0xff] %v1246
                  %v1248 = vld [vmem:[%s1088 + $0x4f0] sm:$0xff]
                  %1249 = vst [vmem:[%s1089 + $0x278] sm:$0xff] %v1248
                  %v1250 = vld [vmem:[%s1088 + $0x500] sm:$0xff]
                  %1251 = vst [vmem:[%s1089 + $0x280] sm:$0xff] %v1250
                  %v1252 = vld [vmem:[%s1088 + $0x510] sm:$0xff]
                  %1253 = vst [vmem:[%s1089 + $0x288] sm:$0xff] %v1252
                  %v1254 = vld [vmem:[%s1088 + $0x520] sm:$0xff]
                  %1255 = vst [vmem:[%s1089 + $0x290] sm:$0xff] %v1254
                  %v1256 = vld [vmem:[%s1088 + $0x530] sm:$0xff]
                  %1257 = vst [vmem:[%s1089 + $0x298] sm:$0xff] %v1256
                  %v1258 = vld [vmem:[%s1088 + $0x540] sm:$0xff]
                  %1259 = vst [vmem:[%s1089 + $0x2a0] sm:$0xff] %v1258
                  %v1260 = vld [vmem:[%s1088 + $0x550] sm:$0xff]
                  %1261 = vst [vmem:[%s1089 + $0x2a8] sm:$0xff] %v1260
                  %v1262 = vld [vmem:[%s1088 + $0x560] sm:$0xff]
                  %1263 = vst [vmem:[%s1089 + $0x2b0] sm:$0xff] %v1262
                  %v1264 = vld [vmem:[%s1088 + $0x570] sm:$0xff]
                  %1265 = vst [vmem:[%s1089 + $0x2b8] sm:$0xff] %v1264
                  %v1266 = vld [vmem:[%s1088 + $0x580] sm:$0xff]
                  %1267 = vst [vmem:[%s1089 + $0x2c0] sm:$0xff] %v1266
                  %v1268 = vld [vmem:[%s1088 + $0x590] sm:$0xff]
                  %1269 = vst [vmem:[%s1089 + $0x2c8] sm:$0xff] %v1268
                  %v1270 = vld [vmem:[%s1088 + $0x5a0] sm:$0xff]
                  %1271 = vst [vmem:[%s1089 + $0x2d0] sm:$0xff] %v1270
                  %v1272 = vld [vmem:[%s1088 + $0x5b0] sm:$0xff]
                  %1273 = vst [vmem:[%s1089 + $0x2d8] sm:$0xff] %v1272
                  %v1274 = vld [vmem:[%s1088 + $0x5c0] sm:$0xff]
                  %1275 = vst [vmem:[%s1089 + $0x2e0] sm:$0xff] %v1274
                  %v1276 = vld [vmem:[%s1088 + $0x5d0] sm:$0xff]
                  %1277 = vst [vmem:[%s1089 + $0x2e8] sm:$0xff] %v1276
                  %v1278 = vld [vmem:[%s1088 + $0x5e0] sm:$0xff]
                  %1279 = vst [vmem:[%s1089 + $0x2f0] sm:$0xff] %v1278
                  %v1280 = vld [vmem:[%s1088 + $0x5f0] sm:$0xff]
                  %1281 = vst [vmem:[%s1089 + $0x2f8] sm:$0xff] %v1280
                  %v1282 = vld [vmem:[%s1088 + $0x600] sm:$0xff]
                  %1283 = vst [vmem:[%s1089 + $0x300] sm:$0xff] %v1282
                  %v1284 = vld [vmem:[%s1088 + $0x610] sm:$0xff]
                  %1285 = vst [vmem:[%s1089 + $0x308] sm:$0xff] %v1284
                  %v1286 = vld [vmem:[%s1088 + $0x620] sm:$0xff]
                  %1287 = vst [vmem:[%s1089 + $0x310] sm:$0xff] %v1286
                  %v1288 = vld [vmem:[%s1088 + $0x630] sm:$0xff]
                  %1289 = vst [vmem:[%s1089 + $0x318] sm:$0xff] %v1288
                  %v1290 = vld [vmem:[%s1088 + $0x640] sm:$0xff]
                  %1291 = vst [vmem:[%s1089 + $0x320] sm:$0xff] %v1290
                  %v1292 = vld [vmem:[%s1088 + $0x650] sm:$0xff]
                  %1293 = vst [vmem:[%s1089 + $0x328] sm:$0xff] %v1292
                  %v1294 = vld [vmem:[%s1088 + $0x660] sm:$0xff]
                  %1295 = vst [vmem:[%s1089 + $0x330] sm:$0xff] %v1294
                  %v1296 = vld [vmem:[%s1088 + $0x670] sm:$0xff]
                  %1297 = vst [vmem:[%s1089 + $0x338] sm:$0xff] %v1296
                  %v1298 = vld [vmem:[%s1088 + $0x680] sm:$0xff]
                  %1299 = vst [vmem:[%s1089 + $0x340] sm:$0xff] %v1298
                  %v1300 = vld [vmem:[%s1088 + $0x690] sm:$0xff]
                  %1301 = vst [vmem:[%s1089 + $0x348] sm:$0xff] %v1300
                  %v1302 = vld [vmem:[%s1088 + $0x6a0] sm:$0xff]
                  %1303 = vst [vmem:[%s1089 + $0x350] sm:$0xff] %v1302
                  %v1304 = vld [vmem:[%s1088 + $0x6b0] sm:$0xff]
                  %1305 = vst [vmem:[%s1089 + $0x358] sm:$0xff] %v1304
                  %v1306 = vld [vmem:[%s1088 + $0x6c0] sm:$0xff]
                  %1307 = vst [vmem:[%s1089 + $0x360] sm:$0xff] %v1306
                  %v1308 = vld [vmem:[%s1088 + $0x6d0] sm:$0xff]
                  %1309 = vst [vmem:[%s1089 + $0x368] sm:$0xff] %v1308
                  %v1310 = vld [vmem:[%s1088 + $0x6e0] sm:$0xff]
                  %1311 = vst [vmem:[%s1089 + $0x370] sm:$0xff] %v1310
                  %v1312 = vld [vmem:[%s1088 + $0x6f0] sm:$0xff]
                  %1313 = vst [vmem:[%s1089 + $0x378] sm:$0xff] %v1312
                  %v1314 = vld [vmem:[%s1088 + $0x700] sm:$0xff]
                  %1315 = vst [vmem:[%s1089 + $0x380] sm:$0xff] %v1314
                  %v1316 = vld [vmem:[%s1088 + $0x710] sm:$0xff]
                  %1317 = vst [vmem:[%s1089 + $0x388] sm:$0xff] %v1316
                  %v1318 = vld [vmem:[%s1088 + $0x720] sm:$0xff]
                  %1319 = vst [vmem:[%s1089 + $0x390] sm:$0xff] %v1318
                  %v1320 = vld [vmem:[%s1088 + $0x730] sm:$0xff]
                  %1321 = vst [vmem:[%s1089 + $0x398] sm:$0xff] %v1320
                  %v1322 = vld [vmem:[%s1088 + $0x740] sm:$0xff]
                  %1323 = vst [vmem:[%s1089 + $0x3a0] sm:$0xff] %v1322
                  %v1324 = vld [vmem:[%s1088 + $0x750] sm:$0xff]
                  %1325 = vst [vmem:[%s1089 + $0x3a8] sm:$0xff] %v1324
                  %v1326 = vld [vmem:[%s1088 + $0x760] sm:$0xff]
                  %1327 = vst [vmem:[%s1089 + $0x3b0] sm:$0xff] %v1326
                  %v1328 = vld [vmem:[%s1088 + $0x770] sm:$0xff]
                  %1329 = vst [vmem:[%s1089 + $0x3b8] sm:$0xff] %v1328
                  %v1330 = vld [vmem:[%s1088 + $0x780] sm:$0xff]
                  %1331 = vst [vmem:[%s1089 + $0x3c0] sm:$0xff] %v1330
                  %v1332 = vld [vmem:[%s1088 + $0x790] sm:$0xff]
                  %1333 = vst [vmem:[%s1089 + $0x3c8] sm:$0xff] %v1332
                  %v1334 = vld [vmem:[%s1088 + $0x7a0] sm:$0xff]
                  %1335 = vst [vmem:[%s1089 + $0x3d0] sm:$0xff] %v1334
                  %v1336 = vld [vmem:[%s1088 + $0x7b0] sm:$0xff]
                  %1337 = vst [vmem:[%s1089 + $0x3d8] sm:$0xff] %v1336
                  %v1338 = vld [vmem:[%s1088 + $0x7c0] sm:$0xff]
                  %1339 = vst [vmem:[%s1089 + $0x3e0] sm:$0xff] %v1338
                  %v1340 = vld [vmem:[%s1088 + $0x7d0] sm:$0xff]
                  %1341 = vst [vmem:[%s1089 + $0x3e8] sm:$0xff] %v1340
                  %v1342 = vld [vmem:[%s1088 + $0x7e0] sm:$0xff]
                  %1343 = vst [vmem:[%s1089 + $0x3f0] sm:$0xff] %v1342
                  %v1344 = vld [vmem:[%s1088 + $0x7f0] sm:$0xff]
                  %1345 = vst [vmem:[%s1089 + $0x3f8] sm:$0xff] %v1344
                $region101: #{attn_net_forward.3} parent=95 // loop_footer
                  %s1087 = sadd.s32 1, %s1083
                $region102: #{attn_net_forward.3} parent=95 // loop_footer_branch
                  %1082 = sbr.rel target = $region98
                $region103: #{attn_net_forward.3} parent=95 // loop_exit
                  _
              $region96: #{attn_net_forward.3} parent=80 // pred_fallthru
                _
              // Predicated region
              $region104: #{attn_net_forward.3} parent=80 // pred_check
                _
              $region105: #{attn_net_forward.3} parent=80 // pred_check_branch
                %1347 = sbr.rel target = $region107
              $region106: #{attn_net_forward.3} parent=80 // pred_region
                _
              $region107: #{attn_net_forward.3} parent=80 // pred_fallthru
                _
            $region81: #{attn_net_forward.3} parent=76 // pred_fallthru
              _
            // Predicated region
            $region82: #{attn_net_forward.3} parent=76 // pred_check
              _
            $region83: #{attn_net_forward.3} parent=76 // pred_check_branch
              %814 = sbr.rel target = $region85
            $region84: #{attn_net_forward.3} parent=76 // pred_region
              loop: start=0, step=1, limit=1
              $region86: #{attn_net_forward.3} parent=84 // loop_pre_header
                _
              $region87: #{attn_net_forward.3} parent=84 // loop_header
                %s817 = sphi 0, %s821
                %p818 = scmp.ge.s32.totalorder %s817, 1
                %s822 = sphi %s808, %s808
                %s823 = sphi %s805, %s805
              $region88: #{attn_net_forward.3} parent=84 // loop_header_branch
                %820 = sbr.rel (%p818) target = $region92
              $region89: #{attn_net_forward.3} parent=84 // loop_body
                %v824 = vld [vmem:[%s822] sm:$0xff]
                %825 = vst [vmem:[%s823] sm:$0xff] %v824
                %v826 = vld [vmem:[%s822 + $0x10] sm:$0xff]
                %827 = vst [vmem:[%s823 + $0x8] sm:$0xff] %v826
                %v828 = vld [vmem:[%s822 + $0x20] sm:$0xff]
                %829 = vst [vmem:[%s823 + $0x10] sm:$0xff] %v828
                %v830 = vld [vmem:[%s822 + $0x30] sm:$0xff]
                %831 = vst [vmem:[%s823 + $0x18] sm:$0xff] %v830
                %v832 = vld [vmem:[%s822 + $0x40] sm:$0xff]
                %833 = vst [vmem:[%s823 + $0x20] sm:$0xff] %v832
                %v834 = vld [vmem:[%s822 + $0x50] sm:$0xff]
                %835 = vst [vmem:[%s823 + $0x28] sm:$0xff] %v834
                %v836 = vld [vmem:[%s822 + $0x60] sm:$0xff]
                %837 = vst [vmem:[%s823 + $0x30] sm:$0xff] %v836
                %v838 = vld [vmem:[%s822 + $0x70] sm:$0xff]
                %839 = vst [vmem:[%s823 + $0x38] sm:$0xff] %v838
                %v840 = vld [vmem:[%s822 + $0x80] sm:$0xff]
                %841 = vst [vmem:[%s823 + $0x40] sm:$0xff] %v840
                %v842 = vld [vmem:[%s822 + $0x90] sm:$0xff]
                %843 = vst [vmem:[%s823 + $0x48] sm:$0xff] %v842
                %v844 = vld [vmem:[%s822 + $0xa0] sm:$0xff]
                %845 = vst [vmem:[%s823 + $0x50] sm:$0xff] %v844
                %v846 = vld [vmem:[%s822 + $0xb0] sm:$0xff]
                %847 = vst [vmem:[%s823 + $0x58] sm:$0xff] %v846
                %v848 = vld [vmem:[%s822 + $0xc0] sm:$0xff]
                %849 = vst [vmem:[%s823 + $0x60] sm:$0xff] %v848
                %v850 = vld [vmem:[%s822 + $0xd0] sm:$0xff]
                %851 = vst [vmem:[%s823 + $0x68] sm:$0xff] %v850
                %v852 = vld [vmem:[%s822 + $0xe0] sm:$0xff]
                %853 = vst [vmem:[%s823 + $0x70] sm:$0xff] %v852
                %v854 = vld [vmem:[%s822 + $0xf0] sm:$0xff]
                %855 = vst [vmem:[%s823 + $0x78] sm:$0xff] %v854
                %v856 = vld [vmem:[%s822 + $0x100] sm:$0xff]
                %857 = vst [vmem:[%s823 + $0x80] sm:$0xff] %v856
                %v858 = vld [vmem:[%s822 + $0x110] sm:$0xff]
                %859 = vst [vmem:[%s823 + $0x88] sm:$0xff] %v858
                %v860 = vld [vmem:[%s822 + $0x120] sm:$0xff]
                %861 = vst [vmem:[%s823 + $0x90] sm:$0xff] %v860
                %v862 = vld [vmem:[%s822 + $0x130] sm:$0xff]
                %863 = vst [vmem:[%s823 + $0x98] sm:$0xff] %v862
                %v864 = vld [vmem:[%s822 + $0x140] sm:$0xff]
                %865 = vst [vmem:[%s823 + $0xa0] sm:$0xff] %v864
                %v866 = vld [vmem:[%s822 + $0x150] sm:$0xff]
                %867 = vst [vmem:[%s823 + $0xa8] sm:$0xff] %v866
                %v868 = vld [vmem:[%s822 + $0x160] sm:$0xff]
                %869 = vst [vmem:[%s823 + $0xb0] sm:$0xff] %v868
                %v870 = vld [vmem:[%s822 + $0x170] sm:$0xff]
                %871 = vst [vmem:[%s823 + $0xb8] sm:$0xff] %v870
                %v872 = vld [vmem:[%s822 + $0x180] sm:$0xff]
                %873 = vst [vmem:[%s823 + $0xc0] sm:$0xff] %v872
                %v874 = vld [vmem:[%s822 + $0x190] sm:$0xff]
                %875 = vst [vmem:[%s823 + $0xc8] sm:$0xff] %v874
                %v876 = vld [vmem:[%s822 + $0x1a0] sm:$0xff]
                %877 = vst [vmem:[%s823 + $0xd0] sm:$0xff] %v876
                %v878 = vld [vmem:[%s822 + $0x1b0] sm:$0xff]
                %879 = vst [vmem:[%s823 + $0xd8] sm:$0xff] %v878
                %v880 = vld [vmem:[%s822 + $0x1c0] sm:$0xff]
                %881 = vst [vmem:[%s823 + $0xe0] sm:$0xff] %v880
                %v882 = vld [vmem:[%s822 + $0x1d0] sm:$0xff]
                %883 = vst [vmem:[%s823 + $0xe8] sm:$0xff] %v882
                %v884 = vld [vmem:[%s822 + $0x1e0] sm:$0xff]
                %885 = vst [vmem:[%s823 + $0xf0] sm:$0xff] %v884
                %v886 = vld [vmem:[%s822 + $0x1f0] sm:$0xff]
                %887 = vst [vmem:[%s823 + $0xf8] sm:$0xff] %v886
                %v888 = vld [vmem:[%s822 + $0x200] sm:$0xff]
                %889 = vst [vmem:[%s823 + $0x100] sm:$0xff] %v888
                %v890 = vld [vmem:[%s822 + $0x210] sm:$0xff]
                %891 = vst [vmem:[%s823 + $0x108] sm:$0xff] %v890
                %v892 = vld [vmem:[%s822 + $0x220] sm:$0xff]
                %893 = vst [vmem:[%s823 + $0x110] sm:$0xff] %v892
                %v894 = vld [vmem:[%s822 + $0x230] sm:$0xff]
                %895 = vst [vmem:[%s823 + $0x118] sm:$0xff] %v894
                %v896 = vld [vmem:[%s822 + $0x240] sm:$0xff]
                %897 = vst [vmem:[%s823 + $0x120] sm:$0xff] %v896
                %v898 = vld [vmem:[%s822 + $0x250] sm:$0xff]
                %899 = vst [vmem:[%s823 + $0x128] sm:$0xff] %v898
                %v900 = vld [vmem:[%s822 + $0x260] sm:$0xff]
                %901 = vst [vmem:[%s823 + $0x130] sm:$0xff] %v900
                %v902 = vld [vmem:[%s822 + $0x270] sm:$0xff]
                %903 = vst [vmem:[%s823 + $0x138] sm:$0xff] %v902
                %v904 = vld [vmem:[%s822 + $0x280] sm:$0xff]
                %905 = vst [vmem:[%s823 + $0x140] sm:$0xff] %v904
                %v906 = vld [vmem:[%s822 + $0x290] sm:$0xff]
                %907 = vst [vmem:[%s823 + $0x148] sm:$0xff] %v906
                %v908 = vld [vmem:[%s822 + $0x2a0] sm:$0xff]
                %909 = vst [vmem:[%s823 + $0x150] sm:$0xff] %v908
                %v910 = vld [vmem:[%s822 + $0x2b0] sm:$0xff]
                %911 = vst [vmem:[%s823 + $0x158] sm:$0xff] %v910
                %v912 = vld [vmem:[%s822 + $0x2c0] sm:$0xff]
                %913 = vst [vmem:[%s823 + $0x160] sm:$0xff] %v912
                %v914 = vld [vmem:[%s822 + $0x2d0] sm:$0xff]
                %915 = vst [vmem:[%s823 + $0x168] sm:$0xff] %v914
                %v916 = vld [vmem:[%s822 + $0x2e0] sm:$0xff]
                %917 = vst [vmem:[%s823 + $0x170] sm:$0xff] %v916
                %v918 = vld [vmem:[%s822 + $0x2f0] sm:$0xff]
                %919 = vst [vmem:[%s823 + $0x178] sm:$0xff] %v918
                %v920 = vld [vmem:[%s822 + $0x300] sm:$0xff]
                %921 = vst [vmem:[%s823 + $0x180] sm:$0xff] %v920
                %v922 = vld [vmem:[%s822 + $0x310] sm:$0xff]
                %923 = vst [vmem:[%s823 + $0x188] sm:$0xff] %v922
                %v924 = vld [vmem:[%s822 + $0x320] sm:$0xff]
                %925 = vst [vmem:[%s823 + $0x190] sm:$0xff] %v924
                %v926 = vld [vmem:[%s822 + $0x330] sm:$0xff]
                %927 = vst [vmem:[%s823 + $0x198] sm:$0xff] %v926
                %v928 = vld [vmem:[%s822 + $0x340] sm:$0xff]
                %929 = vst [vmem:[%s823 + $0x1a0] sm:$0xff] %v928
                %v930 = vld [vmem:[%s822 + $0x350] sm:$0xff]
                %931 = vst [vmem:[%s823 + $0x1a8] sm:$0xff] %v930
                %v932 = vld [vmem:[%s822 + $0x360] sm:$0xff]
                %933 = vst [vmem:[%s823 + $0x1b0] sm:$0xff] %v932
                %v934 = vld [vmem:[%s822 + $0x370] sm:$0xff]
                %935 = vst [vmem:[%s823 + $0x1b8] sm:$0xff] %v934
                %v936 = vld [vmem:[%s822 + $0x380] sm:$0xff]
                %937 = vst [vmem:[%s823 + $0x1c0] sm:$0xff] %v936
                %v938 = vld [vmem:[%s822 + $0x390] sm:$0xff]
                %939 = vst [vmem:[%s823 + $0x1c8] sm:$0xff] %v938
                %v940 = vld [vmem:[%s822 + $0x3a0] sm:$0xff]
                %941 = vst [vmem:[%s823 + $0x1d0] sm:$0xff] %v940
                %v942 = vld [vmem:[%s822 + $0x3b0] sm:$0xff]
                %943 = vst [vmem:[%s823 + $0x1d8] sm:$0xff] %v942
                %v944 = vld [vmem:[%s822 + $0x3c0] sm:$0xff]
                %945 = vst [vmem:[%s823 + $0x1e0] sm:$0xff] %v944
                %v946 = vld [vmem:[%s822 + $0x3d0] sm:$0xff]
                %947 = vst [vmem:[%s823 + $0x1e8] sm:$0xff] %v946
                %v948 = vld [vmem:[%s822 + $0x3e0] sm:$0xff]
                %949 = vst [vmem:[%s823 + $0x1f0] sm:$0xff] %v948
                %v950 = vld [vmem:[%s822 + $0x3f0] sm:$0xff]
                %951 = vst [vmem:[%s823 + $0x1f8] sm:$0xff] %v950
                %v952 = vld [vmem:[%s822 + $0x400] sm:$0xff]
                %953 = vst [vmem:[%s823 + $0x200] sm:$0xff] %v952
                %v954 = vld [vmem:[%s822 + $0x410] sm:$0xff]
                %955 = vst [vmem:[%s823 + $0x208] sm:$0xff] %v954
                %v956 = vld [vmem:[%s822 + $0x420] sm:$0xff]
                %957 = vst [vmem:[%s823 + $0x210] sm:$0xff] %v956
                %v958 = vld [vmem:[%s822 + $0x430] sm:$0xff]
                %959 = vst [vmem:[%s823 + $0x218] sm:$0xff] %v958
                %v960 = vld [vmem:[%s822 + $0x440] sm:$0xff]
                %961 = vst [vmem:[%s823 + $0x220] sm:$0xff] %v960
                %v962 = vld [vmem:[%s822 + $0x450] sm:$0xff]
                %963 = vst [vmem:[%s823 + $0x228] sm:$0xff] %v962
                %v964 = vld [vmem:[%s822 + $0x460] sm:$0xff]
                %965 = vst [vmem:[%s823 + $0x230] sm:$0xff] %v964
                %v966 = vld [vmem:[%s822 + $0x470] sm:$0xff]
                %967 = vst [vmem:[%s823 + $0x238] sm:$0xff] %v966
                %v968 = vld [vmem:[%s822 + $0x480] sm:$0xff]
                %969 = vst [vmem:[%s823 + $0x240] sm:$0xff] %v968
                %v970 = vld [vmem:[%s822 + $0x490] sm:$0xff]
                %971 = vst [vmem:[%s823 + $0x248] sm:$0xff] %v970
                %v972 = vld [vmem:[%s822 + $0x4a0] sm:$0xff]
                %973 = vst [vmem:[%s823 + $0x250] sm:$0xff] %v972
                %v974 = vld [vmem:[%s822 + $0x4b0] sm:$0xff]
                %975 = vst [vmem:[%s823 + $0x258] sm:$0xff] %v974
                %v976 = vld [vmem:[%s822 + $0x4c0] sm:$0xff]
                %977 = vst [vmem:[%s823 + $0x260] sm:$0xff] %v976
                %v978 = vld [vmem:[%s822 + $0x4d0] sm:$0xff]
                %979 = vst [vmem:[%s823 + $0x268] sm:$0xff] %v978
                %v980 = vld [vmem:[%s822 + $0x4e0] sm:$0xff]
                %981 = vst [vmem:[%s823 + $0x270] sm:$0xff] %v980
                %v982 = vld [vmem:[%s822 + $0x4f0] sm:$0xff]
                %983 = vst [vmem:[%s823 + $0x278] sm:$0xff] %v982
                %v984 = vld [vmem:[%s822 + $0x500] sm:$0xff]
                %985 = vst [vmem:[%s823 + $0x280] sm:$0xff] %v984
                %v986 = vld [vmem:[%s822 + $0x510] sm:$0xff]
                %987 = vst [vmem:[%s823 + $0x288] sm:$0xff] %v986
                %v988 = vld [vmem:[%s822 + $0x520] sm:$0xff]
                %989 = vst [vmem:[%s823 + $0x290] sm:$0xff] %v988
                %v990 = vld [vmem:[%s822 + $0x530] sm:$0xff]
                %991 = vst [vmem:[%s823 + $0x298] sm:$0xff] %v990
                %v992 = vld [vmem:[%s822 + $0x540] sm:$0xff]
                %993 = vst [vmem:[%s823 + $0x2a0] sm:$0xff] %v992
                %v994 = vld [vmem:[%s822 + $0x550] sm:$0xff]
                %995 = vst [vmem:[%s823 + $0x2a8] sm:$0xff] %v994
                %v996 = vld [vmem:[%s822 + $0x560] sm:$0xff]
                %997 = vst [vmem:[%s823 + $0x2b0] sm:$0xff] %v996
                %v998 = vld [vmem:[%s822 + $0x570] sm:$0xff]
                %999 = vst [vmem:[%s823 + $0x2b8] sm:$0xff] %v998
                %v1000 = vld [vmem:[%s822 + $0x580] sm:$0xff]
                %1001 = vst [vmem:[%s823 + $0x2c0] sm:$0xff] %v1000
                %v1002 = vld [vmem:[%s822 + $0x590] sm:$0xff]
                %1003 = vst [vmem:[%s823 + $0x2c8] sm:$0xff] %v1002
                %v1004 = vld [vmem:[%s822 + $0x5a0] sm:$0xff]
                %1005 = vst [vmem:[%s823 + $0x2d0] sm:$0xff] %v1004
                %v1006 = vld [vmem:[%s822 + $0x5b0] sm:$0xff]
                %1007 = vst [vmem:[%s823 + $0x2d8] sm:$0xff] %v1006
                %v1008 = vld [vmem:[%s822 + $0x5c0] sm:$0xff]
                %1009 = vst [vmem:[%s823 + $0x2e0] sm:$0xff] %v1008
                %v1010 = vld [vmem:[%s822 + $0x5d0] sm:$0xff]
                %1011 = vst [vmem:[%s823 + $0x2e8] sm:$0xff] %v1010
                %v1012 = vld [vmem:[%s822 + $0x5e0] sm:$0xff]
                %1013 = vst [vmem:[%s823 + $0x2f0] sm:$0xff] %v1012
                %v1014 = vld [vmem:[%s822 + $0x5f0] sm:$0xff]
                %1015 = vst [vmem:[%s823 + $0x2f8] sm:$0xff] %v1014
                %v1016 = vld [vmem:[%s822 + $0x600] sm:$0xff]
                %1017 = vst [vmem:[%s823 + $0x300] sm:$0xff] %v1016
                %v1018 = vld [vmem:[%s822 + $0x610] sm:$0xff]
                %1019 = vst [vmem:[%s823 + $0x308] sm:$0xff] %v1018
                %v1020 = vld [vmem:[%s822 + $0x620] sm:$0xff]
                %1021 = vst [vmem:[%s823 + $0x310] sm:$0xff] %v1020
                %v1022 = vld [vmem:[%s822 + $0x630] sm:$0xff]
                %1023 = vst [vmem:[%s823 + $0x318] sm:$0xff] %v1022
                %v1024 = vld [vmem:[%s822 + $0x640] sm:$0xff]
                %1025 = vst [vmem:[%s823 + $0x320] sm:$0xff] %v1024
                %v1026 = vld [vmem:[%s822 + $0x650] sm:$0xff]
                %1027 = vst [vmem:[%s823 + $0x328] sm:$0xff] %v1026
                %v1028 = vld [vmem:[%s822 + $0x660] sm:$0xff]
                %1029 = vst [vmem:[%s823 + $0x330] sm:$0xff] %v1028
                %v1030 = vld [vmem:[%s822 + $0x670] sm:$0xff]
                %1031 = vst [vmem:[%s823 + $0x338] sm:$0xff] %v1030
                %v1032 = vld [vmem:[%s822 + $0x680] sm:$0xff]
                %1033 = vst [vmem:[%s823 + $0x340] sm:$0xff] %v1032
                %v1034 = vld [vmem:[%s822 + $0x690] sm:$0xff]
                %1035 = vst [vmem:[%s823 + $0x348] sm:$0xff] %v1034
                %v1036 = vld [vmem:[%s822 + $0x6a0] sm:$0xff]
                %1037 = vst [vmem:[%s823 + $0x350] sm:$0xff] %v1036
                %v1038 = vld [vmem:[%s822 + $0x6b0] sm:$0xff]
                %1039 = vst [vmem:[%s823 + $0x358] sm:$0xff] %v1038
                %v1040 = vld [vmem:[%s822 + $0x6c0] sm:$0xff]
                %1041 = vst [vmem:[%s823 + $0x360] sm:$0xff] %v1040
                %v1042 = vld [vmem:[%s822 + $0x6d0] sm:$0xff]
                %1043 = vst [vmem:[%s823 + $0x368] sm:$0xff] %v1042
                %v1044 = vld [vmem:[%s822 + $0x6e0] sm:$0xff]
                %1045 = vst [vmem:[%s823 + $0x370] sm:$0xff] %v1044
                %v1046 = vld [vmem:[%s822 + $0x6f0] sm:$0xff]
                %1047 = vst [vmem:[%s823 + $0x378] sm:$0xff] %v1046
                %v1048 = vld [vmem:[%s822 + $0x700] sm:$0xff]
                %1049 = vst [vmem:[%s823 + $0x380] sm:$0xff] %v1048
                %v1050 = vld [vmem:[%s822 + $0x710] sm:$0xff]
                %1051 = vst [vmem:[%s823 + $0x388] sm:$0xff] %v1050
                %v1052 = vld [vmem:[%s822 + $0x720] sm:$0xff]
                %1053 = vst [vmem:[%s823 + $0x390] sm:$0xff] %v1052
                %v1054 = vld [vmem:[%s822 + $0x730] sm:$0xff]
                %1055 = vst [vmem:[%s823 + $0x398] sm:$0xff] %v1054
                %v1056 = vld [vmem:[%s822 + $0x740] sm:$0xff]
                %1057 = vst [vmem:[%s823 + $0x3a0] sm:$0xff] %v1056
                %v1058 = vld [vmem:[%s822 + $0x750] sm:$0xff]
                %1059 = vst [vmem:[%s823 + $0x3a8] sm:$0xff] %v1058
                %v1060 = vld [vmem:[%s822 + $0x760] sm:$0xff]
                %1061 = vst [vmem:[%s823 + $0x3b0] sm:$0xff] %v1060
                %v1062 = vld [vmem:[%s822 + $0x770] sm:$0xff]
                %1063 = vst [vmem:[%s823 + $0x3b8] sm:$0xff] %v1062
                %v1064 = vld [vmem:[%s822 + $0x780] sm:$0xff]
                %1065 = vst [vmem:[%s823 + $0x3c0] sm:$0xff] %v1064
                %v1066 = vld [vmem:[%s822 + $0x790] sm:$0xff]
                %1067 = vst [vmem:[%s823 + $0x3c8] sm:$0xff] %v1066
                %v1068 = vld [vmem:[%s822 + $0x7a0] sm:$0xff]
                %1069 = vst [vmem:[%s823 + $0x3d0] sm:$0xff] %v1068
                %v1070 = vld [vmem:[%s822 + $0x7b0] sm:$0xff]
                %1071 = vst [vmem:[%s823 + $0x3d8] sm:$0xff] %v1070
                %v1072 = vld [vmem:[%s822 + $0x7c0] sm:$0xff]
                %1073 = vst [vmem:[%s823 + $0x3e0] sm:$0xff] %v1072
                %v1074 = vld [vmem:[%s822 + $0x7d0] sm:$0xff]
                %1075 = vst [vmem:[%s823 + $0x3e8] sm:$0xff] %v1074
                %v1076 = vld [vmem:[%s822 + $0x7e0] sm:$0xff]
                %1077 = vst [vmem:[%s823 + $0x3f0] sm:$0xff] %v1076
                %v1078 = vld [vmem:[%s822 + $0x7f0] sm:$0xff]
                %1079 = vst [vmem:[%s823 + $0x3f8] sm:$0xff] %v1078
              $region90: #{attn_net_forward.3} parent=84 // loop_footer
                %s821 = sadd.s32 1, %s817
              $region91: #{attn_net_forward.3} parent=84 // loop_footer_branch
                %816 = sbr.rel target = $region87
              $region92: #{attn_net_forward.3} parent=84 // loop_exit
                _
            $region85: #{attn_net_forward.3} parent=76 // pred_fallthru
              _
          $region77: #{attn_net_forward.3} parent=72 // pred_fallthru
            _
          %1348 = vnop
        $region73: #{attn_net_forward.3} parent=23 // pred_fallthru
          _
        // Predicated region
        $region108: #{attn_net_forward.3} parent=23 // pred_check
          %p1349 = pneg %p154
        $region109: #{attn_net_forward.3} parent=23 // pred_check_branch
          %1351 = sbr.rel (%p1349) target = $region111
        $region110: #{attn_net_forward.3} parent=23 // pred_region
          %s1352 = smul.u32 2, %s14
          %p1353 = scmp.lt.s32.totalorder %s1352, 3
          %s1354 = scalar_select %p1353, %s1352, 3
          %s1355 = scalar_lea.vmem %s5, %s1354
          %s1356 = smul.u32 2, %s14
        $region111: #{attn_net_forward.3} parent=23 // pred_fallthru
          _
      $region24: #{attn_net_forward.3} parent=5 // pred_fallthru
        _
      %p1357 = scmp.le.s32.totalorder 1, %s14
      %p1358 = scmp.lt.s32.totalorder %s14, 3
      %p1359 = pnand %p1357, %p1358
      %p1360 = pneg %p1359
      // Predicated region
      $region112: #{attn_net_forward.3} parent=5 // pred_check
        _
      $region113: #{attn_net_forward.3} parent=5 // pred_check_branch
        %1362 = sbr.rel (%p1359) target = $region115
      $region114: #{attn_net_forward.3} parent=5 // pred_region
        %s1363 = ssub.s32 %s14, 1
        %s1364 = sand.u32 %s69, 1
        %s1365 = sand.u32 %s69, 1
        %s1366 = smul.addr %s1365, 512
        %s1367 = scalar_lea.vmem [#allocation2], %s1366
        // Predicated region
        $region116: #{attn_net_forward.3} parent=114 // pred_check
          %p1368 = pneg %p82
        $region117: #{attn_net_forward.3} parent=114 // pred_check_branch
          %1370 = sbr.rel (%p1368) target = $region119
        $region118: #{attn_net_forward.3} parent=114 // pred_region
          _
        $region119: #{attn_net_forward.3} parent=114 // pred_fallthru
          _
        %s1371 = sand.u32 %s121, 1
        %s1372 = sand.u32 %s121, 1
        %s1373 = smul.addr %s1372, 1024
        %s1374 = scalar_lea.vmem [#allocation3], %s1373
        // Predicated region
        $region120: #{attn_net_forward.3} parent=114 // pred_check
          %p1375 = pneg %p134
        $region121: #{attn_net_forward.3} parent=114 // pred_check_branch
          %1377 = sbr.rel (%p1375) target = $region123
        $region122: #{attn_net_forward.3} parent=114 // pred_region
          _
        $region123: #{attn_net_forward.3} parent=114 // pred_fallthru
          _
        %p1378 = pneg %p35
        %p1379 = pneg %p32
        %p1380 = pneg %p56
        %p1381 = pneg %p53
        %s1382 = sand.u32 %s69, 1
        %s1383 = sand.u32 %s69, 1
        %s1384 = smul.addr %s1383, 512
        %s1385 = scalar_lea.vmem [#allocation2], %s1384
        %p1386 = pneg %p82
        %p1387 = pneg %p79
        %p1388 = scmp.lt.s32.totalorder %s19, 1
        %s1389 = scalar_select %p1388, %s19, 1
        %s1390 = scalar_lea.vmem %s3, %s1389
        %p1391 = pneg %p108
        %p1392 = pneg %p105
        %s1393 = sand.u32 %s121, 1
        %s1394 = sand.u32 %s121, 1
        %s1395 = smul.addr %s1394, 1024
        %s1396 = scalar_lea.vmem [#allocation3], %s1395
        %p1397 = pneg %p134
        %p1398 = pneg %p131
        %s1399 = smul.u32 2, %s19
        %p1400 = scmp.lt.s32.totalorder %s1399, 3
        %s1401 = scalar_select %p1400, %s1399, 3
        %s1402 = scalar_lea.vmem %s5, %s1401
        %p1403 = pneg %p160
        %p1404 = pneg %p157
        %p1405 = pneg %p186
        %p1406 = pneg %p183
        %p1407 = scmp.lt.s32.totalorder %s19, 1
        %s1408 = scalar_select %p1407, %s19, 1
        %s1409 = smul.addr %s1408, 2
        %s1410 = scalar_lea.vmem %s6, %s1409
        %p1411 = pneg %p212
        %p1412 = pneg %p209
        %s1413 = smul.u32 2, %s19
        %p1414 = scmp.lt.s32.totalorder %s1413, 3
        %s1415 = scalar_select %p1414, %s1413, 3
        %s1416 = smul.addr %s1415, 2
        %s1417 = scalar_lea.vmem %s7, %s1416
        %p1418 = scmp.lt.s32.totalorder %s19, 1
        %s1419 = scalar_select %p1418, %s19, 1
        %s1420 = scalar_lea.vmem %s3, %s1419
        %s1421 = smul.u32 2, %s19
        %s1422 = smul.u32 2, %s19
        %p1423 = scmp.lt.s32.totalorder %s1422, 3
        %s1424 = scalar_select %p1423, %s1422, 3
        %s1425 = scalar_lea.vmem %s5, %s1424
        %s1426 = smul.u32 2, %s19
        %p1427 = scmp.lt.s32.totalorder %s19, 1
        %s1428 = scalar_select %p1427, %s19, 1
        %s1429 = smul.addr %s1428, 2
        %s1430 = scalar_lea.vmem %s6, %s1429
        %s1431 = smul.u32 2, %s19
        %p1432 = scmp.lt.s32.totalorder %s1431, 3
        %s1433 = scalar_select %p1432, %s1431, 3
        %s1434 = smul.addr %s1433, 2
        %s1435 = scalar_lea.vmem %s7, %s1434
        %s1436 = smul.u32 2, %s19
        %v1438 = vld [vmem:[%s0] sm:$0xff]
        %v1439 = vld [vmem:[%s0 + $0x8] sm:$0xff]
        %v1442 = vcombine.high %v1438, %v1438
        %v1444 = vunpack.c.l.s4 1983009808
        %v1445 = vunpack.c.0.s8 %v1444
        %v1446 = vlaneseq
        %v1447 = vshrl.u32 %v1446, 7
        %v1448 = vsub.s32 %v1445, %v1447
        %v1449 = vrot.slane %v1438, %v1448
        %v1451 = vunpack.c.l.s4 1983009808
        %v1452 = vunpack.c.0.s8 %v1451
        %v1453 = vlaneseq
        %v1454 = vshrl.u32 %v1453, 7
        %v1455 = vsub.s32 %v1452, %v1454
        %v1456 = vrot.slane %v1442, %v1455
        %v1457 = vcombine.high %v1449, %v1449
        %v1458 = vcombine.high %v1456, %v1456
        %v1459 = vcombine.high %v1439, %v1439
        %v1461 = vunpack.c.l.s4 1983009808
        %v1462 = vunpack.c.0.s8 %v1461
        %v1463 = vlaneseq
        %v1464 = vshrl.u32 %v1463, 7
        %v1465 = vsub.s32 %v1462, %v1464
        %v1466 = vrot.slane %v1439, %v1465
        %v1468 = vunpack.c.l.s4 1983009808
        %v1469 = vunpack.c.0.s8 %v1468
        %v1470 = vlaneseq
        %v1471 = vshrl.u32 %v1470, 7
        %v1472 = vsub.s32 %v1469, %v1471
        %v1473 = vrot.slane %v1459, %v1472
        %v1474 = vcombine.high %v1466, %v1466
        %v1475 = vcombine.high %v1473, %v1473
        %v1484 = vpack.c.bf16 %v1449, %v1449
        %v1485 = vpack.c.bf16 %v1457, %v1457
        %v1486 = vpack.c.bf16 %v1456, %v1456
        %v1487 = vpack.c.bf16 %v1458, %v1458
        %v1488 = vpack.c.bf16 %v1466, %v1466
        %v1489 = vpack.c.bf16 %v1474, %v1474
        %v1490 = vpack.c.bf16 %v1473, %v1473
        %v1491 = vpack.c.bf16 %v1475, %v1475
        %v1492 = vld [vmem:[%s1] sm:$0xff]
        %v1493 = vld [vmem:[%s1 + $0x8] sm:$0xff]
        %v1496 = vcombine.high %v1492, %v1492
        %v1498 = vunpack.c.l.s4 1983009808
        %v1499 = vunpack.c.0.s8 %v1498
        %v1500 = vlaneseq
        %v1501 = vshrl.u32 %v1500, 7
        %v1502 = vsub.s32 %v1499, %v1501
        %v1503 = vrot.slane %v1492, %v1502
        %v1505 = vunpack.c.l.s4 1983009808
        %v1506 = vunpack.c.0.s8 %v1505
        %v1507 = vlaneseq
        %v1508 = vshrl.u32 %v1507, 7
        %v1509 = vsub.s32 %v1506, %v1508
        %v1510 = vrot.slane %v1496, %v1509
        %v1511 = vcombine.high %v1503, %v1503
        %v1512 = vcombine.high %v1510, %v1510
        %v1513 = vcombine.high %v1493, %v1493
        %v1515 = vunpack.c.l.s4 1983009808
        %v1516 = vunpack.c.0.s8 %v1515
        %v1517 = vlaneseq
        %v1518 = vshrl.u32 %v1517, 7
        %v1519 = vsub.s32 %v1516, %v1518
        %v1520 = vrot.slane %v1493, %v1519
        %v1522 = vunpack.c.l.s4 1983009808
        %v1523 = vunpack.c.0.s8 %v1522
        %v1524 = vlaneseq
        %v1525 = vshrl.u32 %v1524, 7
        %v1526 = vsub.s32 %v1523, %v1525
        %v1527 = vrot.slane %v1513, %v1526
        %v1528 = vcombine.high %v1520, %v1520
        %v1529 = vcombine.high %v1527, %v1527
        %v1538 = vpack.c.bf16 %v1503, %v1503
        %v1539 = vpack.c.bf16 %v1511, %v1511
        %v1540 = vpack.c.bf16 %v1510, %v1510
        %v1541 = vpack.c.bf16 %v1512, %v1512
        %v1542 = vpack.c.bf16 %v1520, %v1520
        %v1543 = vpack.c.bf16 %v1528, %v1528
        %v1544 = vpack.c.bf16 %v1527, %v1527
        %v1545 = vpack.c.bf16 %v1529, %v1529
        %v1546 = vld [vmem:[%s1367] sm:$0xf]
        %v1547 = vld [vmem:[%s1367 + $0x4] sm:$0xf]
        %v1548 = vld [vmem:[%s1367 + $0x8] sm:$0xf]
        %v1549 = vld [vmem:[%s1367 + $0xc] sm:$0xf]
        %v1550 = vld [vmem:[%s1367 + $0x10] sm:$0xf]
        %v1551 = vld [vmem:[%s1367 + $0x14] sm:$0xf]
        %v1552 = vld [vmem:[%s1367 + $0x18] sm:$0xf]
        %v1553 = vld [vmem:[%s1367 + $0x1c] sm:$0xf]
        %v1554 = vld [vmem:[%s1367 + $0x20] sm:$0xf]
        %v1555 = vld [vmem:[%s1367 + $0x24] sm:$0xf]
        %v1556 = vld [vmem:[%s1367 + $0x28] sm:$0xf]
        %v1557 = vld [vmem:[%s1367 + $0x2c] sm:$0xf]
        %v1558 = vld [vmem:[%s1367 + $0x30] sm:$0xf]
        %v1559 = vld [vmem:[%s1367 + $0x34] sm:$0xf]
        %v1560 = vld [vmem:[%s1367 + $0x38] sm:$0xf]
        %v1561 = vld [vmem:[%s1367 + $0x3c] sm:$0xf]
        %v1562 = vld [vmem:[%s1367 + $0x40] sm:$0xf]
        %v1563 = vld [vmem:[%s1367 + $0x44] sm:$0xf]
        %v1564 = vld [vmem:[%s1367 + $0x48] sm:$0xf]
        %v1565 = vld [vmem:[%s1367 + $0x4c] sm:$0xf]
        %v1566 = vld [vmem:[%s1367 + $0x50] sm:$0xf]
        %v1567 = vld [vmem:[%s1367 + $0x54] sm:$0xf]
        %v1568 = vld [vmem:[%s1367 + $0x58] sm:$0xf]
        %v1569 = vld [vmem:[%s1367 + $0x5c] sm:$0xf]
        %v1570 = vld [vmem:[%s1367 + $0x60] sm:$0xf]
        %v1571 = vld [vmem:[%s1367 + $0x64] sm:$0xf]
        %v1572 = vld [vmem:[%s1367 + $0x68] sm:$0xf]
        %v1573 = vld [vmem:[%s1367 + $0x6c] sm:$0xf]
        %v1574 = vld [vmem:[%s1367 + $0x70] sm:$0xf]
        %v1575 = vld [vmem:[%s1367 + $0x74] sm:$0xf]
        %v1576 = vld [vmem:[%s1367 + $0x78] sm:$0xf]
        %v1577 = vld [vmem:[%s1367 + $0x7c] sm:$0xf]
        %v1578 = vld [vmem:[%s1367 + $0x80] sm:$0xf]
        %v1579 = vld [vmem:[%s1367 + $0x84] sm:$0xf]
        %v1580 = vld [vmem:[%s1367 + $0x88] sm:$0xf]
        %v1581 = vld [vmem:[%s1367 + $0x8c] sm:$0xf]
        %v1582 = vld [vmem:[%s1367 + $0x90] sm:$0xf]
        %v1583 = vld [vmem:[%s1367 + $0x94] sm:$0xf]
        %v1584 = vld [vmem:[%s1367 + $0x98] sm:$0xf]
        %v1585 = vld [vmem:[%s1367 + $0x9c] sm:$0xf]
        %v1586 = vld [vmem:[%s1367 + $0xa0] sm:$0xf]
        %v1587 = vld [vmem:[%s1367 + $0xa4] sm:$0xf]
        %v1588 = vld [vmem:[%s1367 + $0xa8] sm:$0xf]
        %v1589 = vld [vmem:[%s1367 + $0xac] sm:$0xf]
        %v1590 = vld [vmem:[%s1367 + $0xb0] sm:$0xf]
        %v1591 = vld [vmem:[%s1367 + $0xb4] sm:$0xf]
        %v1592 = vld [vmem:[%s1367 + $0xb8] sm:$0xf]
        %v1593 = vld [vmem:[%s1367 + $0xbc] sm:$0xf]
        %v1594 = vld [vmem:[%s1367 + $0xc0] sm:$0xf]
        %v1595 = vld [vmem:[%s1367 + $0xc4] sm:$0xf]
        %v1596 = vld [vmem:[%s1367 + $0xc8] sm:$0xf]
        %v1597 = vld [vmem:[%s1367 + $0xcc] sm:$0xf]
        %v1598 = vld [vmem:[%s1367 + $0xd0] sm:$0xf]
        %v1599 = vld [vmem:[%s1367 + $0xd4] sm:$0xf]
        %v1600 = vld [vmem:[%s1367 + $0xd8] sm:$0xf]
        %v1601 = vld [vmem:[%s1367 + $0xdc] sm:$0xf]
        %v1602 = vld [vmem:[%s1367 + $0xe0] sm:$0xf]
        %v1603 = vld [vmem:[%s1367 + $0xe4] sm:$0xf]
        %v1604 = vld [vmem:[%s1367 + $0xe8] sm:$0xf]
        %v1605 = vld [vmem:[%s1367 + $0xec] sm:$0xf]
        %v1606 = vld [vmem:[%s1367 + $0xf0] sm:$0xf]
        %v1607 = vld [vmem:[%s1367 + $0xf4] sm:$0xf]
        %v1608 = vld [vmem:[%s1367 + $0xf8] sm:$0xf]
        %v1609 = vld [vmem:[%s1367 + $0xfc] sm:$0xf]
        %v1610 = vld [vmem:[%s1367 + $0x100] sm:$0xf]
        %v1611 = vld [vmem:[%s1367 + $0x104] sm:$0xf]
        %v1612 = vld [vmem:[%s1367 + $0x108] sm:$0xf]
        %v1613 = vld [vmem:[%s1367 + $0x10c] sm:$0xf]
        %v1614 = vld [vmem:[%s1367 + $0x110] sm:$0xf]
        %v1615 = vld [vmem:[%s1367 + $0x114] sm:$0xf]
        %v1616 = vld [vmem:[%s1367 + $0x118] sm:$0xf]
        %v1617 = vld [vmem:[%s1367 + $0x11c] sm:$0xf]
        %v1618 = vld [vmem:[%s1367 + $0x120] sm:$0xf]
        %v1619 = vld [vmem:[%s1367 + $0x124] sm:$0xf]
        %v1620 = vld [vmem:[%s1367 + $0x128] sm:$0xf]
        %v1621 = vld [vmem:[%s1367 + $0x12c] sm:$0xf]
        %v1622 = vld [vmem:[%s1367 + $0x130] sm:$0xf]
        %v1623 = vld [vmem:[%s1367 + $0x134] sm:$0xf]
        %v1624 = vld [vmem:[%s1367 + $0x138] sm:$0xf]
        %v1625 = vld [vmem:[%s1367 + $0x13c] sm:$0xf]
        %v1626 = vld [vmem:[%s1367 + $0x140] sm:$0xf]
        %v1627 = vld [vmem:[%s1367 + $0x144] sm:$0xf]
        %v1628 = vld [vmem:[%s1367 + $0x148] sm:$0xf]
        %v1629 = vld [vmem:[%s1367 + $0x14c] sm:$0xf]
        %v1630 = vld [vmem:[%s1367 + $0x150] sm:$0xf]
        %v1631 = vld [vmem:[%s1367 + $0x154] sm:$0xf]
        %v1632 = vld [vmem:[%s1367 + $0x158] sm:$0xf]
        %v1633 = vld [vmem:[%s1367 + $0x15c] sm:$0xf]
        %v1634 = vld [vmem:[%s1367 + $0x160] sm:$0xf]
        %v1635 = vld [vmem:[%s1367 + $0x164] sm:$0xf]
        %v1636 = vld [vmem:[%s1367 + $0x168] sm:$0xf]
        %v1637 = vld [vmem:[%s1367 + $0x16c] sm:$0xf]
        %v1638 = vld [vmem:[%s1367 + $0x170] sm:$0xf]
        %v1639 = vld [vmem:[%s1367 + $0x174] sm:$0xf]
        %v1640 = vld [vmem:[%s1367 + $0x178] sm:$0xf]
        %v1641 = vld [vmem:[%s1367 + $0x17c] sm:$0xf]
        %v1642 = vld [vmem:[%s1367 + $0x180] sm:$0xf]
        %v1643 = vld [vmem:[%s1367 + $0x184] sm:$0xf]
        %v1644 = vld [vmem:[%s1367 + $0x188] sm:$0xf]
        %v1645 = vld [vmem:[%s1367 + $0x18c] sm:$0xf]
        %v1646 = vld [vmem:[%s1367 + $0x190] sm:$0xf]
        %v1647 = vld [vmem:[%s1367 + $0x194] sm:$0xf]
        %v1648 = vld [vmem:[%s1367 + $0x198] sm:$0xf]
        %v1649 = vld [vmem:[%s1367 + $0x19c] sm:$0xf]
        %v1650 = vld [vmem:[%s1367 + $0x1a0] sm:$0xf]
        %v1651 = vld [vmem:[%s1367 + $0x1a4] sm:$0xf]
        %v1652 = vld [vmem:[%s1367 + $0x1a8] sm:$0xf]
        %v1653 = vld [vmem:[%s1367 + $0x1ac] sm:$0xf]
        %v1654 = vld [vmem:[%s1367 + $0x1b0] sm:$0xf]
        %v1655 = vld [vmem:[%s1367 + $0x1b4] sm:$0xf]
        %v1656 = vld [vmem:[%s1367 + $0x1b8] sm:$0xf]
        %v1657 = vld [vmem:[%s1367 + $0x1bc] sm:$0xf]
        %v1658 = vld [vmem:[%s1367 + $0x1c0] sm:$0xf]
        %v1659 = vld [vmem:[%s1367 + $0x1c4] sm:$0xf]
        %v1660 = vld [vmem:[%s1367 + $0x1c8] sm:$0xf]
        %v1661 = vld [vmem:[%s1367 + $0x1cc] sm:$0xf]
        %v1662 = vld [vmem:[%s1367 + $0x1d0] sm:$0xf]
        %v1663 = vld [vmem:[%s1367 + $0x1d4] sm:$0xf]
        %v1664 = vld [vmem:[%s1367 + $0x1d8] sm:$0xf]
        %v1665 = vld [vmem:[%s1367 + $0x1dc] sm:$0xf]
        %v1666 = vld [vmem:[%s1367 + $0x1e0] sm:$0xf]
        %v1667 = vld [vmem:[%s1367 + $0x1e4] sm:$0xf]
        %v1668 = vld [vmem:[%s1367 + $0x1e8] sm:$0xf]
        %v1669 = vld [vmem:[%s1367 + $0x1ec] sm:$0xf]
        %v1670 = vld [vmem:[%s1367 + $0x1f0] sm:$0xf]
        %v1671 = vld [vmem:[%s1367 + $0x1f4] sm:$0xf]
        %v1672 = vld [vmem:[%s1367 + $0x1f8] sm:$0xf]
        %v1673 = vld [vmem:[%s1367 + $0x1fc] sm:$0xf]
        %v1674 = vld [vmem:[%s1420] sm:$0x1]
        %v1676 = vlaneseq
        %v1677 = vshrl.u32 %v1676, 7
        %v1678 = vsub.s32 0, %v1677
        %v1679 = vrot.slane %v1674, %v1678
        %v1809 = vunpack.c.l.b16 %v1546
        %v1810 = vunpack.c.l.b16 %v1547
        %v1811 = vunpack.c.l.b16 %v1548
        %v1812 = vunpack.c.l.b16 %v1549
        %v1813 = vunpack.c.l.b16 %v1550
        %v1814 = vunpack.c.l.b16 %v1551
        %v1815 = vunpack.c.l.b16 %v1552
        %v1816 = vunpack.c.l.b16 %v1553
        %v1817 = vunpack.c.l.b16 %v1554
        %v1818 = vunpack.c.l.b16 %v1555
        %v1819 = vunpack.c.l.b16 %v1556
        %v1820 = vunpack.c.l.b16 %v1557
        %v1821 = vunpack.c.l.b16 %v1558
        %v1822 = vunpack.c.l.b16 %v1559
        %v1823 = vunpack.c.l.b16 %v1560
        %v1824 = vunpack.c.l.b16 %v1561
        %v1825 = vunpack.c.l.b16 %v1562
        %v1826 = vunpack.c.l.b16 %v1563
        %v1827 = vunpack.c.l.b16 %v1564
        %v1828 = vunpack.c.l.b16 %v1565
        %v1829 = vunpack.c.l.b16 %v1566
        %v1830 = vunpack.c.l.b16 %v1567
        %v1831 = vunpack.c.l.b16 %v1568
        %v1832 = vunpack.c.l.b16 %v1569
        %v1833 = vunpack.c.l.b16 %v1570
        %v1834 = vunpack.c.l.b16 %v1571
        %v1835 = vunpack.c.l.b16 %v1572
        %v1836 = vunpack.c.l.b16 %v1573
        %v1837 = vunpack.c.l.b16 %v1574
        %v1838 = vunpack.c.l.b16 %v1575
        %v1839 = vunpack.c.l.b16 %v1576
        %v1840 = vunpack.c.l.b16 %v1577
        %v1841 = vunpack.c.l.b16 %v1578
        %v1842 = vunpack.c.l.b16 %v1579
        %v1843 = vunpack.c.l.b16 %v1580
        %v1844 = vunpack.c.l.b16 %v1581
        %v1845 = vunpack.c.l.b16 %v1582
        %v1846 = vunpack.c.l.b16 %v1583
        %v1847 = vunpack.c.l.b16 %v1584
        %v1848 = vunpack.c.l.b16 %v1585
        %v1849 = vunpack.c.l.b16 %v1586
        %v1850 = vunpack.c.l.b16 %v1587
        %v1851 = vunpack.c.l.b16 %v1588
        %v1852 = vunpack.c.l.b16 %v1589
        %v1853 = vunpack.c.l.b16 %v1590
        %v1854 = vunpack.c.l.b16 %v1591
        %v1855 = vunpack.c.l.b16 %v1592
        %v1856 = vunpack.c.l.b16 %v1593
        %v1857 = vunpack.c.l.b16 %v1594
        %v1858 = vunpack.c.l.b16 %v1595
        %v1859 = vunpack.c.l.b16 %v1596
        %v1860 = vunpack.c.l.b16 %v1597
        %v1861 = vunpack.c.l.b16 %v1598
        %v1862 = vunpack.c.l.b16 %v1599
        %v1863 = vunpack.c.l.b16 %v1600
        %v1864 = vunpack.c.l.b16 %v1601
        %v1865 = vunpack.c.l.b16 %v1602
        %v1866 = vunpack.c.l.b16 %v1603
        %v1867 = vunpack.c.l.b16 %v1604
        %v1868 = vunpack.c.l.b16 %v1605
        %v1869 = vunpack.c.l.b16 %v1606
        %v1870 = vunpack.c.l.b16 %v1607
        %v1871 = vunpack.c.l.b16 %v1608
        %v1872 = vunpack.c.l.b16 %v1609
        %v1873 = vunpack.c.l.b16 %v1610
        %v1874 = vunpack.c.l.b16 %v1611
        %v1875 = vunpack.c.l.b16 %v1612
        %v1876 = vunpack.c.l.b16 %v1613
        %v1877 = vunpack.c.l.b16 %v1614
        %v1878 = vunpack.c.l.b16 %v1615
        %v1879 = vunpack.c.l.b16 %v1616
        %v1880 = vunpack.c.l.b16 %v1617
        %v1881 = vunpack.c.l.b16 %v1618
        %v1882 = vunpack.c.l.b16 %v1619
        %v1883 = vunpack.c.l.b16 %v1620
        %v1884 = vunpack.c.l.b16 %v1621
        %v1885 = vunpack.c.l.b16 %v1622
        %v1886 = vunpack.c.l.b16 %v1623
        %v1887 = vunpack.c.l.b16 %v1624
        %v1888 = vunpack.c.l.b16 %v1625
        %v1889 = vunpack.c.l.b16 %v1626
        %v1890 = vunpack.c.l.b16 %v1627
        %v1891 = vunpack.c.l.b16 %v1628
        %v1892 = vunpack.c.l.b16 %v1629
        %v1893 = vunpack.c.l.b16 %v1630
        %v1894 = vunpack.c.l.b16 %v1631
        %v1895 = vunpack.c.l.b16 %v1632
        %v1896 = vunpack.c.l.b16 %v1633
        %v1897 = vunpack.c.l.b16 %v1634
        %v1898 = vunpack.c.l.b16 %v1635
        %v1899 = vunpack.c.l.b16 %v1636
        %v1900 = vunpack.c.l.b16 %v1637
        %v1901 = vunpack.c.l.b16 %v1638
        %v1902 = vunpack.c.l.b16 %v1639
        %v1903 = vunpack.c.l.b16 %v1640
        %v1904 = vunpack.c.l.b16 %v1641
        %v1905 = vunpack.c.l.b16 %v1642
        %v1906 = vunpack.c.l.b16 %v1643
        %v1907 = vunpack.c.l.b16 %v1644
        %v1908 = vunpack.c.l.b16 %v1645
        %v1909 = vunpack.c.l.b16 %v1646
        %v1910 = vunpack.c.l.b16 %v1647
        %v1911 = vunpack.c.l.b16 %v1648
        %v1912 = vunpack.c.l.b16 %v1649
        %v1913 = vunpack.c.l.b16 %v1650
        %v1914 = vunpack.c.l.b16 %v1651
        %v1915 = vunpack.c.l.b16 %v1652
        %v1916 = vunpack.c.l.b16 %v1653
        %v1917 = vunpack.c.l.b16 %v1654
        %v1918 = vunpack.c.l.b16 %v1655
        %v1919 = vunpack.c.l.b16 %v1656
        %v1920 = vunpack.c.l.b16 %v1657
        %v1921 = vunpack.c.l.b16 %v1658
        %v1922 = vunpack.c.l.b16 %v1659
        %v1923 = vunpack.c.l.b16 %v1660
        %v1924 = vunpack.c.l.b16 %v1661
        %v1925 = vunpack.c.l.b16 %v1662
        %v1926 = vunpack.c.l.b16 %v1663
        %v1927 = vunpack.c.l.b16 %v1664
        %v1928 = vunpack.c.l.b16 %v1665
        %v1929 = vunpack.c.l.b16 %v1666
        %v1930 = vunpack.c.l.b16 %v1667
        %v1931 = vunpack.c.l.b16 %v1668
        %v1932 = vunpack.c.l.b16 %v1669
        %v1933 = vunpack.c.l.b16 %v1670
        %v1934 = vunpack.c.l.b16 %v1671
        %v1935 = vunpack.c.l.b16 %v1672
        %v1936 = vunpack.c.l.b16 %v1673
        %v1937 = vpack.c.b16 %v1810, %v1809
        %v1938 = vpack.c.b16 %v1812, %v1811
        %v1939 = vpack.c.b16 %v1814, %v1813
        %v1940 = vpack.c.b16 %v1816, %v1815
        %v1941 = vpack.c.b16 %v1818, %v1817
        %v1942 = vpack.c.b16 %v1820, %v1819
        %v1943 = vpack.c.b16 %v1822, %v1821
        %v1944 = vpack.c.b16 %v1824, %v1823
        %v1945 = vpack.c.b16 %v1826, %v1825
        %v1946 = vpack.c.b16 %v1828, %v1827
        %v1947 = vpack.c.b16 %v1830, %v1829
        %v1948 = vpack.c.b16 %v1832, %v1831
        %v1949 = vpack.c.b16 %v1834, %v1833
        %v1950 = vpack.c.b16 %v1836, %v1835
        %v1951 = vpack.c.b16 %v1838, %v1837
        %v1952 = vpack.c.b16 %v1840, %v1839
        %v1953 = vpack.c.b16 %v1842, %v1841
        %v1954 = vpack.c.b16 %v1844, %v1843
        %v1955 = vpack.c.b16 %v1846, %v1845
        %v1956 = vpack.c.b16 %v1848, %v1847
        %v1957 = vpack.c.b16 %v1850, %v1849
        %v1958 = vpack.c.b16 %v1852, %v1851
        %v1959 = vpack.c.b16 %v1854, %v1853
        %v1960 = vpack.c.b16 %v1856, %v1855
        %v1961 = vpack.c.b16 %v1858, %v1857
        %v1962 = vpack.c.b16 %v1860, %v1859
        %v1963 = vpack.c.b16 %v1862, %v1861
        %v1964 = vpack.c.b16 %v1864, %v1863
        %v1965 = vpack.c.b16 %v1866, %v1865
        %v1966 = vpack.c.b16 %v1868, %v1867
        %v1967 = vpack.c.b16 %v1870, %v1869
        %v1968 = vpack.c.b16 %v1872, %v1871
        %v1969 = vpack.c.b16 %v1874, %v1873
        %v1970 = vpack.c.b16 %v1876, %v1875
        %v1971 = vpack.c.b16 %v1878, %v1877
        %v1972 = vpack.c.b16 %v1880, %v1879
        %v1973 = vpack.c.b16 %v1882, %v1881
        %v1974 = vpack.c.b16 %v1884, %v1883
        %v1975 = vpack.c.b16 %v1886, %v1885
        %v1976 = vpack.c.b16 %v1888, %v1887
        %v1977 = vpack.c.b16 %v1890, %v1889
        %v1978 = vpack.c.b16 %v1892, %v1891
        %v1979 = vpack.c.b16 %v1894, %v1893
        %v1980 = vpack.c.b16 %v1896, %v1895
        %v1981 = vpack.c.b16 %v1898, %v1897
        %v1982 = vpack.c.b16 %v1900, %v1899
        %v1983 = vpack.c.b16 %v1902, %v1901
        %v1984 = vpack.c.b16 %v1904, %v1903
        %v1985 = vpack.c.b16 %v1906, %v1905
        %v1986 = vpack.c.b16 %v1908, %v1907
        %v1987 = vpack.c.b16 %v1910, %v1909
        %v1988 = vpack.c.b16 %v1912, %v1911
        %v1989 = vpack.c.b16 %v1914, %v1913
        %v1990 = vpack.c.b16 %v1916, %v1915
        %v1991 = vpack.c.b16 %v1918, %v1917
        %v1992 = vpack.c.b16 %v1920, %v1919
        %v1993 = vpack.c.b16 %v1922, %v1921
        %v1994 = vpack.c.b16 %v1924, %v1923
        %v1995 = vpack.c.b16 %v1926, %v1925
        %v1996 = vpack.c.b16 %v1928, %v1927
        %v1997 = vpack.c.b16 %v1930, %v1929
        %v1998 = vpack.c.b16 %v1932, %v1931
        %v1999 = vpack.c.b16 %v1934, %v1933
        %v2000 = vpack.c.b16 %v1936, %v1935
        %2065 = vmatprep.subr.bf16.mxu0 0
        %2066 = vmatpush1.bf16.msra.mxu0 %v1937
        %2067 = vmatprep.subr.bf16.mxu0 0
        %2068 = vmatpush1.bf16.msra.mxu0 %v1938
        %2069 = vmatprep.subr.bf16.mxu0 0
        %2070 = vmatpush1.bf16.msra.mxu0 %v1939
        %2071 = vmatprep.subr.bf16.mxu0 0
        %2072 = vmatpush1.bf16.msra.mxu0 %v1940
        %2073 = vmatprep.subr.bf16.mxu0 0
        %2074 = vmatpush1.bf16.msra.mxu0 %v1941
        %2075 = vmatprep.subr.bf16.mxu0 0
        %2076 = vmatpush1.bf16.msra.mxu0 %v1942
        %2077 = vmatprep.subr.bf16.mxu0 0
        %2078 = vmatpush1.bf16.msra.mxu0 %v1943
        %2079 = vmatprep.subr.bf16.mxu0 0
        %2080 = vmatpush1.bf16.msra.mxu0 %v1944
        %2081 = vmatprep.subr.bf16.mxu0 0
        %2082 = vmatpush1.bf16.msra.mxu0 %v1945
        %2083 = vmatprep.subr.bf16.mxu0 0
        %2084 = vmatpush1.bf16.msra.mxu0 %v1946
        %2085 = vmatprep.subr.bf16.mxu0 0
        %2086 = vmatpush1.bf16.msra.mxu0 %v1947
        %2087 = vmatprep.subr.bf16.mxu0 0
        %2088 = vmatpush1.bf16.msra.mxu0 %v1948
        %2089 = vmatprep.subr.bf16.mxu0 0
        %2090 = vmatpush1.bf16.msra.mxu0 %v1949
        %2091 = vmatprep.subr.bf16.mxu0 0
        %2092 = vmatpush1.bf16.msra.mxu0 %v1950
        %2093 = vmatprep.subr.bf16.mxu0 0
        %2094 = vmatpush1.bf16.msra.mxu0 %v1951
        %2095 = vmatprep.subr.bf16.mxu0 0
        %2096 = vmatpush1.bf16.msra.mxu0 %v1952
        %2097 = vmatprep.mubr.bf16.mxu0 %v1485
        %2098 = vmatmul.mubr.bf16.gmra.mrb[0].mxu0 %v1484
        %v2099 = vpop.f32.mrb[0].mxu0
        %v2100 = vadd.f32 %v1679, %v2099
        %v2101 = vpop.f32.mrb[0].mxu0
        %v2102 = vpop.f32.mrb[0].mxu0
        %v2103 = vpop.f32.mrb[0].mxu0
        %2104 = vdwg.mxu0
        %2105 = vmatprep.subr.bf16.mxu0 0
        %2106 = vmatpush1.bf16.msra.mxu0 %v1953
        %2107 = vmatprep.subr.bf16.mxu0 0
        %2108 = vmatpush1.bf16.msra.mxu0 %v1954
        %2109 = vmatprep.subr.bf16.mxu0 0
        %2110 = vmatpush1.bf16.msra.mxu0 %v1955
        %2111 = vmatprep.subr.bf16.mxu0 0
        %2112 = vmatpush1.bf16.msra.mxu0 %v1956
        %2113 = vmatprep.subr.bf16.mxu0 0
        %2114 = vmatpush1.bf16.msra.mxu0 %v1957
        %2115 = vmatprep.subr.bf16.mxu0 0
        %2116 = vmatpush1.bf16.msra.mxu0 %v1958
        %2117 = vmatprep.subr.bf16.mxu0 0
        %2118 = vmatpush1.bf16.msra.mxu0 %v1959
        %2119 = vmatprep.subr.bf16.mxu0 0
        %2120 = vmatpush1.bf16.msra.mxu0 %v1960
        %2121 = vmatprep.subr.bf16.mxu0 0
        %2122 = vmatpush1.bf16.msra.mxu0 %v1961
        %2123 = vmatprep.subr.bf16.mxu0 0
        %2124 = vmatpush1.bf16.msra.mxu0 %v1962
        %2125 = vmatprep.subr.bf16.mxu0 0
        %2126 = vmatpush1.bf16.msra.mxu0 %v1963
        %2127 = vmatprep.subr.bf16.mxu0 0
        %2128 = vmatpush1.bf16.msra.mxu0 %v1964
        %2129 = vmatprep.subr.bf16.mxu0 0
        %2130 = vmatpush1.bf16.msra.mxu0 %v1965
        %2131 = vmatprep.subr.bf16.mxu0 0
        %2132 = vmatpush1.bf16.msra.mxu0 %v1966
        %2133 = vmatprep.subr.bf16.mxu0 0
        %2134 = vmatpush1.bf16.msra.mxu0 %v1967
        %2135 = vmatprep.subr.bf16.mxu0 0
        %2136 = vmatpush1.bf16.msra.mxu0 %v1968
        %2137 = vmatprep.mubr.bf16.mxu0 %v1487
        %2138 = vmatmul.mubr.bf16.gmra.mrb[0].mxu0 %v1486
        %v2139 = vpop.f32.mrb[0].mxu0
        %v2140 = vadd.f32 %v2100, %v2139
        %v2141 = vpop.f32.mrb[0].mxu0
        %v2142 = vpop.f32.mrb[0].mxu0
        %v2143 = vpop.f32.mrb[0].mxu0
        %2144 = vdwg.mxu0
        %2145 = vmatprep.subr.bf16.mxu0 0
        %2146 = vmatpush1.bf16.msra.mxu0 %v1969
        %2147 = vmatprep.subr.bf16.mxu0 0
        %2148 = vmatpush1.bf16.msra.mxu0 %v1970
        %2149 = vmatprep.subr.bf16.mxu0 0
        %2150 = vmatpush1.bf16.msra.mxu0 %v1971
        %2151 = vmatprep.subr.bf16.mxu0 0
        %2152 = vmatpush1.bf16.msra.mxu0 %v1972
        %2153 = vmatprep.subr.bf16.mxu0 0
        %2154 = vmatpush1.bf16.msra.mxu0 %v1973
        %2155 = vmatprep.subr.bf16.mxu0 0
        %2156 = vmatpush1.bf16.msra.mxu0 %v1974
        %2157 = vmatprep.subr.bf16.mxu0 0
        %2158 = vmatpush1.bf16.msra.mxu0 %v1975
        %2159 = vmatprep.subr.bf16.mxu0 0
        %2160 = vmatpush1.bf16.msra.mxu0 %v1976
        %2161 = vmatprep.subr.bf16.mxu0 0
        %2162 = vmatpush1.bf16.msra.mxu0 %v1977
        %2163 = vmatprep.subr.bf16.mxu0 0
        %2164 = vmatpush1.bf16.msra.mxu0 %v1978
        %2165 = vmatprep.subr.bf16.mxu0 0
        %2166 = vmatpush1.bf16.msra.mxu0 %v1979
        %2167 = vmatprep.subr.bf16.mxu0 0
        %2168 = vmatpush1.bf16.msra.mxu0 %v1980
        %2169 = vmatprep.subr.bf16.mxu0 0
        %2170 = vmatpush1.bf16.msra.mxu0 %v1981
        %2171 = vmatprep.subr.bf16.mxu0 0
        %2172 = vmatpush1.bf16.msra.mxu0 %v1982
        %2173 = vmatprep.subr.bf16.mxu0 0
        %2174 = vmatpush1.bf16.msra.mxu0 %v1983
        %2175 = vmatprep.subr.bf16.mxu0 0
        %2176 = vmatpush1.bf16.msra.mxu0 %v1984
        %2177 = vmatprep.mubr.bf16.mxu0 %v1489
        %2178 = vmatmul.mubr.bf16.gmra.mrb[0].mxu0 %v1488
        %v2179 = vpop.f32.mrb[0].mxu0
        %v2180 = vadd.f32 %v2140, %v2179
        %v2181 = vpop.f32.mrb[0].mxu0
        %v2182 = vpop.f32.mrb[0].mxu0
        %v2183 = vpop.f32.mrb[0].mxu0
        %2184 = vdwg.mxu0
        %2185 = vmatprep.subr.bf16.mxu0 0
        %2186 = vmatpush1.bf16.msra.mxu0 %v1985
        %2187 = vmatprep.subr.bf16.mxu0 0
        %2188 = vmatpush1.bf16.msra.mxu0 %v1986
        %2189 = vmatprep.subr.bf16.mxu0 0
        %2190 = vmatpush1.bf16.msra.mxu0 %v1987
        %2191 = vmatprep.subr.bf16.mxu0 0
        %2192 = vmatpush1.bf16.msra.mxu0 %v1988
        %2193 = vmatprep.subr.bf16.mxu0 0
        %2194 = vmatpush1.bf16.msra.mxu0 %v1989
        %2195 = vmatprep.subr.bf16.mxu0 0
        %2196 = vmatpush1.bf16.msra.mxu0 %v1990
        %2197 = vmatprep.subr.bf16.mxu0 0
        %2198 = vmatpush1.bf16.msra.mxu0 %v1991
        %2199 = vmatprep.subr.bf16.mxu0 0
        %2200 = vmatpush1.bf16.msra.mxu0 %v1992
        %2201 = vmatprep.subr.bf16.mxu0 0
        %2202 = vmatpush1.bf16.msra.mxu0 %v1993
        %2203 = vmatprep.subr.bf16.mxu0 0
        %2204 = vmatpush1.bf16.msra.mxu0 %v1994
        %2205 = vmatprep.subr.bf16.mxu0 0
        %2206 = vmatpush1.bf16.msra.mxu0 %v1995
        %2207 = vmatprep.subr.bf16.mxu0 0
        %2208 = vmatpush1.bf16.msra.mxu0 %v1996
        %2209 = vmatprep.subr.bf16.mxu0 0
        %2210 = vmatpush1.bf16.msra.mxu0 %v1997
        %2211 = vmatprep.subr.bf16.mxu0 0
        %2212 = vmatpush1.bf16.msra.mxu0 %v1998
        %2213 = vmatprep.subr.bf16.mxu0 0
        %2214 = vmatpush1.bf16.msra.mxu0 %v1999
        %2215 = vmatprep.subr.bf16.mxu0 0
        %2216 = vmatpush1.bf16.msra.mxu0 %v2000
        %2217 = vmatprep.mubr.bf16.mxu0 %v1491
        %2218 = vmatmul.mubr.bf16.gmra.mrb[0].mxu0 %v1490
        %v2219 = vpop.f32.mrb[0].mxu0
        %v2220 = vadd.f32 %v2180, %v2219
        %v2221 = vpop.f32.mrb[0].mxu0
        %v2222 = vpop.f32.mrb[0].mxu0
        %v2223 = vpop.f32.mrb[0].mxu0
        %2224 = vdwg.mxu0
        %2225 = vst [vmem:[%s1430] sm:$0x3] %v2220
        %v2226 = vld [vmem:[%s1374] sm:$0xff]
        %v2227 = vld [vmem:[%s1374 + $0x8] sm:$0xff]
        %v2228 = vld [vmem:[%s1374 + $0x10] sm:$0xff]
        %v2229 = vld [vmem:[%s1374 + $0x18] sm:$0xff]
        %v2230 = vld [vmem:[%s1374 + $0x20] sm:$0xff]
        %v2231 = vld [vmem:[%s1374 + $0x28] sm:$0xff]
        %v2232 = vld [vmem:[%s1374 + $0x30] sm:$0xff]
        %v2233 = vld [vmem:[%s1374 + $0x38] sm:$0xff]
        %v2234 = vld [vmem:[%s1374 + $0x40] sm:$0xff]
        %v2235 = vld [vmem:[%s1374 + $0x48] sm:$0xff]
        %v2236 = vld [vmem:[%s1374 + $0x50] sm:$0xff]
        %v2237 = vld [vmem:[%s1374 + $0x58] sm:$0xff]
        %v2238 = vld [vmem:[%s1374 + $0x60] sm:$0xff]
        %v2239 = vld [vmem:[%s1374 + $0x68] sm:$0xff]
        %v2240 = vld [vmem:[%s1374 + $0x70] sm:$0xff]
        %v2241 = vld [vmem:[%s1374 + $0x78] sm:$0xff]
        %v2242 = vld [vmem:[%s1374 + $0x80] sm:$0xff]
        %v2243 = vld [vmem:[%s1374 + $0x88] sm:$0xff]
        %v2244 = vld [vmem:[%s1374 + $0x90] sm:$0xff]
        %v2245 = vld [vmem:[%s1374 + $0x98] sm:$0xff]
        %v2246 = vld [vmem:[%s1374 + $0xa0] sm:$0xff]
        %v2247 = vld [vmem:[%s1374 + $0xa8] sm:$0xff]
        %v2248 = vld [vmem:[%s1374 + $0xb0] sm:$0xff]
        %v2249 = vld [vmem:[%s1374 + $0xb8] sm:$0xff]
        %v2250 = vld [vmem:[%s1374 + $0xc0] sm:$0xff]
        %v2251 = vld [vmem:[%s1374 + $0xc8] sm:$0xff]
        %v2252 = vld [vmem:[%s1374 + $0xd0] sm:$0xff]
        %v2253 = vld [vmem:[%s1374 + $0xd8] sm:$0xff]
        %v2254 = vld [vmem:[%s1374 + $0xe0] sm:$0xff]
        %v2255 = vld [vmem:[%s1374 + $0xe8] sm:$0xff]
        %v2256 = vld [vmem:[%s1374 + $0xf0] sm:$0xff]
        %v2257 = vld [vmem:[%s1374 + $0xf8] sm:$0xff]
        %v2258 = vld [vmem:[%s1374 + $0x100] sm:$0xff]
        %v2259 = vld [vmem:[%s1374 + $0x108] sm:$0xff]
        %v2260 = vld [vmem:[%s1374 + $0x110] sm:$0xff]
        %v2261 = vld [vmem:[%s1374 + $0x118] sm:$0xff]
        %v2262 = vld [vmem:[%s1374 + $0x120] sm:$0xff]
        %v2263 = vld [vmem:[%s1374 + $0x128] sm:$0xff]
        %v2264 = vld [vmem:[%s1374 + $0x130] sm:$0xff]
        %v2265 = vld [vmem:[%s1374 + $0x138] sm:$0xff]
        %v2266 = vld [vmem:[%s1374 + $0x140] sm:$0xff]
        %v2267 = vld [vmem:[%s1374 + $0x148] sm:$0xff]
        %v2268 = vld [vmem:[%s1374 + $0x150] sm:$0xff]
        %v2269 = vld [vmem:[%s1374 + $0x158] sm:$0xff]
        %v2270 = vld [vmem:[%s1374 + $0x160] sm:$0xff]
        %v2271 = vld [vmem:[%s1374 + $0x168] sm:$0xff]
        %v2272 = vld [vmem:[%s1374 + $0x170] sm:$0xff]
        %v2273 = vld [vmem:[%s1374 + $0x178] sm:$0xff]
        %v2274 = vld [vmem:[%s1374 + $0x180] sm:$0xff]
        %v2275 = vld [vmem:[%s1374 + $0x188] sm:$0xff]
        %v2276 = vld [vmem:[%s1374 + $0x190] sm:$0xff]
        %v2277 = vld [vmem:[%s1374 + $0x198] sm:$0xff]
        %v2278 = vld [vmem:[%s1374 + $0x1a0] sm:$0xff]
        %v2279 = vld [vmem:[%s1374 + $0x1a8] sm:$0xff]
        %v2280 = vld [vmem:[%s1374 + $0x1b0] sm:$0xff]
        %v2281 = vld [vmem:[%s1374 + $0x1b8] sm:$0xff]
        %v2282 = vld [vmem:[%s1374 + $0x1c0] sm:$0xff]
        %v2283 = vld [vmem:[%s1374 + $0x1c8] sm:$0xff]
        %v2284 = vld [vmem:[%s1374 + $0x1d0] sm:$0xff]
        %v2285 = vld [vmem:[%s1374 + $0x1d8] sm:$0xff]
        %v2286 = vld [vmem:[%s1374 + $0x1e0] sm:$0xff]
        %v2287 = vld [vmem:[%s1374 + $0x1e8] sm:$0xff]
        %v2288 = vld [vmem:[%s1374 + $0x1f0] sm:$0xff]
        %v2289 = vld [vmem:[%s1374 + $0x1f8] sm:$0xff]
        %v2290 = vld [vmem:[%s1374 + $0x200] sm:$0xff]
        %v2291 = vld [vmem:[%s1374 + $0x208] sm:$0xff]
        %v2292 = vld [vmem:[%s1374 + $0x210] sm:$0xff]
        %v2293 = vld [vmem:[%s1374 + $0x218] sm:$0xff]
        %v2294 = vld [vmem:[%s1374 + $0x220] sm:$0xff]
        %v2295 = vld [vmem:[%s1374 + $0x228] sm:$0xff]
        %v2296 = vld [vmem:[%s1374 + $0x230] sm:$0xff]
        %v2297 = vld [vmem:[%s1374 + $0x238] sm:$0xff]
        %v2298 = vld [vmem:[%s1374 + $0x240] sm:$0xff]
        %v2299 = vld [vmem:[%s1374 + $0x248] sm:$0xff]
        %v2300 = vld [vmem:[%s1374 + $0x250] sm:$0xff]
        %v2301 = vld [vmem:[%s1374 + $0x258] sm:$0xff]
        %v2302 = vld [vmem:[%s1374 + $0x260] sm:$0xff]
        %v2303 = vld [vmem:[%s1374 + $0x268] sm:$0xff]
        %v2304 = vld [vmem:[%s1374 + $0x270] sm:$0xff]
        %v2305 = vld [vmem:[%s1374 + $0x278] sm:$0xff]
        %v2306 = vld [vmem:[%s1374 + $0x280] sm:$0xff]
        %v2307 = vld [vmem:[%s1374 + $0x288] sm:$0xff]
        %v2308 = vld [vmem:[%s1374 + $0x290] sm:$0xff]
        %v2309 = vld [vmem:[%s1374 + $0x298] sm:$0xff]
        %v2310 = vld [vmem:[%s1374 + $0x2a0] sm:$0xff]
        %v2311 = vld [vmem:[%s1374 + $0x2a8] sm:$0xff]
        %v2312 = vld [vmem:[%s1374 + $0x2b0] sm:$0xff]
        %v2313 = vld [vmem:[%s1374 + $0x2b8] sm:$0xff]
        %v2314 = vld [vmem:[%s1374 + $0x2c0] sm:$0xff]
        %v2315 = vld [vmem:[%s1374 + $0x2c8] sm:$0xff]
        %v2316 = vld [vmem:[%s1374 + $0x2d0] sm:$0xff]
        %v2317 = vld [vmem:[%s1374 + $0x2d8] sm:$0xff]
        %v2318 = vld [vmem:[%s1374 + $0x2e0] sm:$0xff]
        %v2319 = vld [vmem:[%s1374 + $0x2e8] sm:$0xff]
        %v2320 = vld [vmem:[%s1374 + $0x2f0] sm:$0xff]
        %v2321 = vld [vmem:[%s1374 + $0x2f8] sm:$0xff]
        %v2322 = vld [vmem:[%s1374 + $0x300] sm:$0xff]
        %v2323 = vld [vmem:[%s1374 + $0x308] sm:$0xff]
        %v2324 = vld [vmem:[%s1374 + $0x310] sm:$0xff]
        %v2325 = vld [vmem:[%s1374 + $0x318] sm:$0xff]
        %v2326 = vld [vmem:[%s1374 + $0x320] sm:$0xff]
        %v2327 = vld [vmem:[%s1374 + $0x328] sm:$0xff]
        %v2328 = vld [vmem:[%s1374 + $0x330] sm:$0xff]
        %v2329 = vld [vmem:[%s1374 + $0x338] sm:$0xff]
        %v2330 = vld [vmem:[%s1374 + $0x340] sm:$0xff]
        %v2331 = vld [vmem:[%s1374 + $0x348] sm:$0xff]
        %v2332 = vld [vmem:[%s1374 + $0x350] sm:$0xff]
        %v2333 = vld [vmem:[%s1374 + $0x358] sm:$0xff]
        %v2334 = vld [vmem:[%s1374 + $0x360] sm:$0xff]
        %v2335 = vld [vmem:[%s1374 + $0x368] sm:$0xff]
        %v2336 = vld [vmem:[%s1374 + $0x370] sm:$0xff]
        %v2337 = vld [vmem:[%s1374 + $0x378] sm:$0xff]
        %v2338 = vld [vmem:[%s1374 + $0x380] sm:$0xff]
        %v2339 = vld [vmem:[%s1374 + $0x388] sm:$0xff]
        %v2340 = vld [vmem:[%s1374 + $0x390] sm:$0xff]
        %v2341 = vld [vmem:[%s1374 + $0x398] sm:$0xff]
        %v2342 = vld [vmem:[%s1374 + $0x3a0] sm:$0xff]
        %v2343 = vld [vmem:[%s1374 + $0x3a8] sm:$0xff]
        %v2344 = vld [vmem:[%s1374 + $0x3b0] sm:$0xff]
        %v2345 = vld [vmem:[%s1374 + $0x3b8] sm:$0xff]
        %v2346 = vld [vmem:[%s1374 + $0x3c0] sm:$0xff]
        %v2347 = vld [vmem:[%s1374 + $0x3c8] sm:$0xff]
        %v2348 = vld [vmem:[%s1374 + $0x3d0] sm:$0xff]
        %v2349 = vld [vmem:[%s1374 + $0x3d8] sm:$0xff]
        %v2350 = vld [vmem:[%s1374 + $0x3e0] sm:$0xff]
        %v2351 = vld [vmem:[%s1374 + $0x3e8] sm:$0xff]
        %v2352 = vld [vmem:[%s1374 + $0x3f0] sm:$0xff]
        %v2353 = vld [vmem:[%s1374 + $0x3f8] sm:$0xff]
        %v2354 = vld [vmem:[%s1425] sm:$0x3]
        %v2356 = vlaneseq
        %v2357 = vshrl.u32 %v2356, 7
        %v2358 = vsub.s32 0, %v2357
        %v2359 = vrot.slane %v2354, %v2358
        %v2360 = vlaneseq
        %v2361 = vshrl.u32 %v2360, 7
        %v2362 = vsub.s32 1, %v2361
        %v2363 = vrot.slane %v2354, %v2362
        %v2494 = vunpack.c.l.b16 %v2226
        %v2495 = vunpack.c.h.b16 %v2226
        %v2496 = vunpack.c.l.b16 %v2227
        %v2497 = vunpack.c.h.b16 %v2227
        %v2498 = vunpack.c.l.b16 %v2228
        %v2499 = vunpack.c.h.b16 %v2228
        %v2500 = vunpack.c.l.b16 %v2229
        %v2501 = vunpack.c.h.b16 %v2229
        %v2502 = vunpack.c.l.b16 %v2230
        %v2503 = vunpack.c.h.b16 %v2230
        %v2504 = vunpack.c.l.b16 %v2231
        %v2505 = vunpack.c.h.b16 %v2231
        %v2506 = vunpack.c.l.b16 %v2232
        %v2507 = vunpack.c.h.b16 %v2232
        %v2508 = vunpack.c.l.b16 %v2233
        %v2509 = vunpack.c.h.b16 %v2233
        %v2510 = vunpack.c.l.b16 %v2234
        %v2511 = vunpack.c.h.b16 %v2234
        %v2512 = vunpack.c.l.b16 %v2235
        %v2513 = vunpack.c.h.b16 %v2235
        %v2514 = vunpack.c.l.b16 %v2236
        %v2515 = vunpack.c.h.b16 %v2236
        %v2516 = vunpack.c.l.b16 %v2237
        %v2517 = vunpack.c.h.b16 %v2237
        %v2518 = vunpack.c.l.b16 %v2238
        %v2519 = vunpack.c.h.b16 %v2238
        %v2520 = vunpack.c.l.b16 %v2239
        %v2521 = vunpack.c.h.b16 %v2239
        %v2522 = vunpack.c.l.b16 %v2240
        %v2523 = vunpack.c.h.b16 %v2240
        %v2524 = vunpack.c.l.b16 %v2241
        %v2525 = vunpack.c.h.b16 %v2241
        %v2526 = vunpack.c.l.b16 %v2242
        %v2527 = vunpack.c.h.b16 %v2242
        %v2528 = vunpack.c.l.b16 %v2243
        %v2529 = vunpack.c.h.b16 %v2243
        %v2530 = vunpack.c.l.b16 %v2244
        %v2531 = vunpack.c.h.b16 %v2244
        %v2532 = vunpack.c.l.b16 %v2245
        %v2533 = vunpack.c.h.b16 %v2245
        %v2534 = vunpack.c.l.b16 %v2246
        %v2535 = vunpack.c.h.b16 %v2246
        %v2536 = vunpack.c.l.b16 %v2247
        %v2537 = vunpack.c.h.b16 %v2247
        %v2538 = vunpack.c.l.b16 %v2248
        %v2539 = vunpack.c.h.b16 %v2248
        %v2540 = vunpack.c.l.b16 %v2249
        %v2541 = vunpack.c.h.b16 %v2249
        %v2542 = vunpack.c.l.b16 %v2250
        %v2543 = vunpack.c.h.b16 %v2250
        %v2544 = vunpack.c.l.b16 %v2251
        %v2545 = vunpack.c.h.b16 %v2251
        %v2546 = vunpack.c.l.b16 %v2252
        %v2547 = vunpack.c.h.b16 %v2252
        %v2548 = vunpack.c.l.b16 %v2253
        %v2549 = vunpack.c.h.b16 %v2253
        %v2550 = vunpack.c.l.b16 %v2254
        %v2551 = vunpack.c.h.b16 %v2254
        %v2552 = vunpack.c.l.b16 %v2255
        %v2553 = vunpack.c.h.b16 %v2255
        %v2554 = vunpack.c.l.b16 %v2256
        %v2555 = vunpack.c.h.b16 %v2256
        %v2556 = vunpack.c.l.b16 %v2257
        %v2557 = vunpack.c.h.b16 %v2257
        %v2558 = vunpack.c.l.b16 %v2258
        %v2559 = vunpack.c.h.b16 %v2258
        %v2560 = vunpack.c.l.b16 %v2259
        %v2561 = vunpack.c.h.b16 %v2259
        %v2562 = vunpack.c.l.b16 %v2260
        %v2563 = vunpack.c.h.b16 %v2260
        %v2564 = vunpack.c.l.b16 %v2261
        %v2565 = vunpack.c.h.b16 %v2261
        %v2566 = vunpack.c.l.b16 %v2262
        %v2567 = vunpack.c.h.b16 %v2262
        %v2568 = vunpack.c.l.b16 %v2263
        %v2569 = vunpack.c.h.b16 %v2263
        %v2570 = vunpack.c.l.b16 %v2264
        %v2571 = vunpack.c.h.b16 %v2264
        %v2572 = vunpack.c.l.b16 %v2265
        %v2573 = vunpack.c.h.b16 %v2265
        %v2574 = vunpack.c.l.b16 %v2266
        %v2575 = vunpack.c.h.b16 %v2266
        %v2576 = vunpack.c.l.b16 %v2267
        %v2577 = vunpack.c.h.b16 %v2267
        %v2578 = vunpack.c.l.b16 %v2268
        %v2579 = vunpack.c.h.b16 %v2268
        %v2580 = vunpack.c.l.b16 %v2269
        %v2581 = vunpack.c.h.b16 %v2269
        %v2582 = vunpack.c.l.b16 %v2270
        %v2583 = vunpack.c.h.b16 %v2270
        %v2584 = vunpack.c.l.b16 %v2271
        %v2585 = vunpack.c.h.b16 %v2271
        %v2586 = vunpack.c.l.b16 %v2272
        %v2587 = vunpack.c.h.b16 %v2272
        %v2588 = vunpack.c.l.b16 %v2273
        %v2589 = vunpack.c.h.b16 %v2273
        %v2590 = vunpack.c.l.b16 %v2274
        %v2591 = vunpack.c.h.b16 %v2274
        %v2592 = vunpack.c.l.b16 %v2275
        %v2593 = vunpack.c.h.b16 %v2275
        %v2594 = vunpack.c.l.b16 %v2276
        %v2595 = vunpack.c.h.b16 %v2276
        %v2596 = vunpack.c.l.b16 %v2277
        %v2597 = vunpack.c.h.b16 %v2277
        %v2598 = vunpack.c.l.b16 %v2278
        %v2599 = vunpack.c.h.b16 %v2278
        %v2600 = vunpack.c.l.b16 %v2279
        %v2601 = vunpack.c.h.b16 %v2279
        %v2602 = vunpack.c.l.b16 %v2280
        %v2603 = vunpack.c.h.b16 %v2280
        %v2604 = vunpack.c.l.b16 %v2281
        %v2605 = vunpack.c.h.b16 %v2281
        %v2606 = vunpack.c.l.b16 %v2282
        %v2607 = vunpack.c.h.b16 %v2282
        %v2608 = vunpack.c.l.b16 %v2283
        %v2609 = vunpack.c.h.b16 %v2283
        %v2610 = vunpack.c.l.b16 %v2284
        %v2611 = vunpack.c.h.b16 %v2284
        %v2612 = vunpack.c.l.b16 %v2285
        %v2613 = vunpack.c.h.b16 %v2285
        %v2614 = vunpack.c.l.b16 %v2286
        %v2615 = vunpack.c.h.b16 %v2286
        %v2616 = vunpack.c.l.b16 %v2287
        %v2617 = vunpack.c.h.b16 %v2287
        %v2618 = vunpack.c.l.b16 %v2288
        %v2619 = vunpack.c.h.b16 %v2288
        %v2620 = vunpack.c.l.b16 %v2289
        %v2621 = vunpack.c.h.b16 %v2289
        %v2622 = vunpack.c.l.b16 %v2290
        %v2623 = vunpack.c.h.b16 %v2290
        %v2624 = vunpack.c.l.b16 %v2291
        %v2625 = vunpack.c.h.b16 %v2291
        %v2626 = vunpack.c.l.b16 %v2292
        %v2627 = vunpack.c.h.b16 %v2292
        %v2628 = vunpack.c.l.b16 %v2293
        %v2629 = vunpack.c.h.b16 %v2293
        %v2630 = vunpack.c.l.b16 %v2294
        %v2631 = vunpack.c.h.b16 %v2294
        %v2632 = vunpack.c.l.b16 %v2295
        %v2633 = vunpack.c.h.b16 %v2295
        %v2634 = vunpack.c.l.b16 %v2296
        %v2635 = vunpack.c.h.b16 %v2296
        %v2636 = vunpack.c.l.b16 %v2297
        %v2637 = vunpack.c.h.b16 %v2297
        %v2638 = vunpack.c.l.b16 %v2298
        %v2639 = vunpack.c.h.b16 %v2298
        %v2640 = vunpack.c.l.b16 %v2299
        %v2641 = vunpack.c.h.b16 %v2299
        %v2642 = vunpack.c.l.b16 %v2300
        %v2643 = vunpack.c.h.b16 %v2300
        %v2644 = vunpack.c.l.b16 %v2301
        %v2645 = vunpack.c.h.b16 %v2301
        %v2646 = vunpack.c.l.b16 %v2302
        %v2647 = vunpack.c.h.b16 %v2302
        %v2648 = vunpack.c.l.b16 %v2303
        %v2649 = vunpack.c.h.b16 %v2303
        %v2650 = vunpack.c.l.b16 %v2304
        %v2651 = vunpack.c.h.b16 %v2304
        %v2652 = vunpack.c.l.b16 %v2305
        %v2653 = vunpack.c.h.b16 %v2305
        %v2654 = vunpack.c.l.b16 %v2306
        %v2655 = vunpack.c.h.b16 %v2306
        %v2656 = vunpack.c.l.b16 %v2307
        %v2657 = vunpack.c.h.b16 %v2307
        %v2658 = vunpack.c.l.b16 %v2308
        %v2659 = vunpack.c.h.b16 %v2308
        %v2660 = vunpack.c.l.b16 %v2309
        %v2661 = vunpack.c.h.b16 %v2309
        %v2662 = vunpack.c.l.b16 %v2310
        %v2663 = vunpack.c.h.b16 %v2310
        %v2664 = vunpack.c.l.b16 %v2311
        %v2665 = vunpack.c.h.b16 %v2311
        %v2666 = vunpack.c.l.b16 %v2312
        %v2667 = vunpack.c.h.b16 %v2312
        %v2668 = vunpack.c.l.b16 %v2313
        %v2669 = vunpack.c.h.b16 %v2313
        %v2670 = vunpack.c.l.b16 %v2314
        %v2671 = vunpack.c.h.b16 %v2314
        %v2672 = vunpack.c.l.b16 %v2315
        %v2673 = vunpack.c.h.b16 %v2315
        %v2674 = vunpack.c.l.b16 %v2316
        %v2675 = vunpack.c.h.b16 %v2316
        %v2676 = vunpack.c.l.b16 %v2317
        %v2677 = vunpack.c.h.b16 %v2317
        %v2678 = vunpack.c.l.b16 %v2318
        %v2679 = vunpack.c.h.b16 %v2318
        %v2680 = vunpack.c.l.b16 %v2319
        %v2681 = vunpack.c.h.b16 %v2319
        %v2682 = vunpack.c.l.b16 %v2320
        %v2683 = vunpack.c.h.b16 %v2320
        %v2684 = vunpack.c.l.b16 %v2321
        %v2685 = vunpack.c.h.b16 %v2321
        %v2686 = vunpack.c.l.b16 %v2322
        %v2687 = vunpack.c.h.b16 %v2322
        %v2688 = vunpack.c.l.b16 %v2323
        %v2689 = vunpack.c.h.b16 %v2323
        %v2690 = vunpack.c.l.b16 %v2324
        %v2691 = vunpack.c.h.b16 %v2324
        %v2692 = vunpack.c.l.b16 %v2325
        %v2693 = vunpack.c.h.b16 %v2325
        %v2694 = vunpack.c.l.b16 %v2326
        %v2695 = vunpack.c.h.b16 %v2326
        %v2696 = vunpack.c.l.b16 %v2327
        %v2697 = vunpack.c.h.b16 %v2327
        %v2698 = vunpack.c.l.b16 %v2328
        %v2699 = vunpack.c.h.b16 %v2328
        %v2700 = vunpack.c.l.b16 %v2329
        %v2701 = vunpack.c.h.b16 %v2329
        %v2702 = vunpack.c.l.b16 %v2330
        %v2703 = vunpack.c.h.b16 %v2330
        %v2704 = vunpack.c.l.b16 %v2331
        %v2705 = vunpack.c.h.b16 %v2331
        %v2706 = vunpack.c.l.b16 %v2332
        %v2707 = vunpack.c.h.b16 %v2332
        %v2708 = vunpack.c.l.b16 %v2333
        %v2709 = vunpack.c.h.b16 %v2333
        %v2710 = vunpack.c.l.b16 %v2334
        %v2711 = vunpack.c.h.b16 %v2334
        %v2712 = vunpack.c.l.b16 %v2335
        %v2713 = vunpack.c.h.b16 %v2335
        %v2714 = vunpack.c.l.b16 %v2336
        %v2715 = vunpack.c.h.b16 %v2336
        %v2716 = vunpack.c.l.b16 %v2337
        %v2717 = vunpack.c.h.b16 %v2337
        %v2718 = vunpack.c.l.b16 %v2338
        %v2719 = vunpack.c.h.b16 %v2338
        %v2720 = vunpack.c.l.b16 %v2339
        %v2721 = vunpack.c.h.b16 %v2339
        %v2722 = vunpack.c.l.b16 %v2340
        %v2723 = vunpack.c.h.b16 %v2340
        %v2724 = vunpack.c.l.b16 %v2341
        %v2725 = vunpack.c.h.b16 %v2341
        %v2726 = vunpack.c.l.b16 %v2342
        %v2727 = vunpack.c.h.b16 %v2342
        %v2728 = vunpack.c.l.b16 %v2343
        %v2729 = vunpack.c.h.b16 %v2343
        %v2730 = vunpack.c.l.b16 %v2344
        %v2731 = vunpack.c.h.b16 %v2344
        %v2732 = vunpack.c.l.b16 %v2345
        %v2733 = vunpack.c.h.b16 %v2345
        %v2734 = vunpack.c.l.b16 %v2346
        %v2735 = vunpack.c.h.b16 %v2346
        %v2736 = vunpack.c.l.b16 %v2347
        %v2737 = vunpack.c.h.b16 %v2347
        %v2738 = vunpack.c.l.b16 %v2348
        %v2739 = vunpack.c.h.b16 %v2348
        %v2740 = vunpack.c.l.b16 %v2349
        %v2741 = vunpack.c.h.b16 %v2349
        %v2742 = vunpack.c.l.b16 %v2350
        %v2743 = vunpack.c.h.b16 %v2350
        %v2744 = vunpack.c.l.b16 %v2351
        %v2745 = vunpack.c.h.b16 %v2351
        %v2746 = vunpack.c.l.b16 %v2352
        %v2747 = vunpack.c.h.b16 %v2352
        %v2748 = vunpack.c.l.b16 %v2353
        %v2749 = vunpack.c.h.b16 %v2353
        %v2750 = vpack.c.b16 %v2496, %v2494
        %v2751 = vpack.c.b16 %v2497, %v2495
        %v2752 = vpack.c.b16 %v2500, %v2498
        %v2753 = vpack.c.b16 %v2501, %v2499
        %v2754 = vpack.c.b16 %v2504, %v2502
        %v2755 = vpack.c.b16 %v2505, %v2503
        %v2756 = vpack.c.b16 %v2508, %v2506
        %v2757 = vpack.c.b16 %v2509, %v2507
        %v2758 = vpack.c.b16 %v2512, %v2510
        %v2759 = vpack.c.b16 %v2513, %v2511
        %v2760 = vpack.c.b16 %v2516, %v2514
        %v2761 = vpack.c.b16 %v2517, %v2515
        %v2762 = vpack.c.b16 %v2520, %v2518
        %v2763 = vpack.c.b16 %v2521, %v2519
        %v2764 = vpack.c.b16 %v2524, %v2522
        %v2765 = vpack.c.b16 %v2525, %v2523
        %v2766 = vpack.c.b16 %v2528, %v2526
        %v2767 = vpack.c.b16 %v2529, %v2527
        %v2768 = vpack.c.b16 %v2532, %v2530
        %v2769 = vpack.c.b16 %v2533, %v2531
        %v2770 = vpack.c.b16 %v2536, %v2534
        %v2771 = vpack.c.b16 %v2537, %v2535
        %v2772 = vpack.c.b16 %v2540, %v2538
        %v2773 = vpack.c.b16 %v2541, %v2539
        %v2774 = vpack.c.b16 %v2544, %v2542
        %v2775 = vpack.c.b16 %v2545, %v2543
        %v2776 = vpack.c.b16 %v2548, %v2546
        %v2777 = vpack.c.b16 %v2549, %v2547
        %v2778 = vpack.c.b16 %v2552, %v2550
        %v2779 = vpack.c.b16 %v2553, %v2551
        %v2780 = vpack.c.b16 %v2556, %v2554
        %v2781 = vpack.c.b16 %v2557, %v2555
        %v2782 = vpack.c.b16 %v2560, %v2558
        %v2783 = vpack.c.b16 %v2561, %v2559
        %v2784 = vpack.c.b16 %v2564, %v2562
        %v2785 = vpack.c.b16 %v2565, %v2563
        %v2786 = vpack.c.b16 %v2568, %v2566
        %v2787 = vpack.c.b16 %v2569, %v2567
        %v2788 = vpack.c.b16 %v2572, %v2570
        %v2789 = vpack.c.b16 %v2573, %v2571
        %v2790 = vpack.c.b16 %v2576, %v2574
        %v2791 = vpack.c.b16 %v2577, %v2575
        %v2792 = vpack.c.b16 %v2580, %v2578
        %v2793 = vpack.c.b16 %v2581, %v2579
        %v2794 = vpack.c.b16 %v2584, %v2582
        %v2795 = vpack.c.b16 %v2585, %v2583
        %v2796 = vpack.c.b16 %v2588, %v2586
        %v2797 = vpack.c.b16 %v2589, %v2587
        %v2798 = vpack.c.b16 %v2592, %v2590
        %v2799 = vpack.c.b16 %v2593, %v2591
        %v2800 = vpack.c.b16 %v2596, %v2594
        %v2801 = vpack.c.b16 %v2597, %v2595
        %v2802 = vpack.c.b16 %v2600, %v2598
        %v2803 = vpack.c.b16 %v2601, %v2599
        %v2804 = vpack.c.b16 %v2604, %v2602
        %v2805 = vpack.c.b16 %v2605, %v2603
        %v2806 = vpack.c.b16 %v2608, %v2606
        %v2807 = vpack.c.b16 %v2609, %v2607
        %v2808 = vpack.c.b16 %v2612, %v2610
        %v2809 = vpack.c.b16 %v2613, %v2611
        %v2810 = vpack.c.b16 %v2616, %v2614
        %v2811 = vpack.c.b16 %v2617, %v2615
        %v2812 = vpack.c.b16 %v2620, %v2618
        %v2813 = vpack.c.b16 %v2621, %v2619
        %v2814 = vpack.c.b16 %v2624, %v2622
        %v2815 = vpack.c.b16 %v2625, %v2623
        %v2816 = vpack.c.b16 %v2628, %v2626
        %v2817 = vpack.c.b16 %v2629, %v2627
        %v2818 = vpack.c.b16 %v2632, %v2630
        %v2819 = vpack.c.b16 %v2633, %v2631
        %v2820 = vpack.c.b16 %v2636, %v2634
        %v2821 = vpack.c.b16 %v2637, %v2635
        %v2822 = vpack.c.b16 %v2640, %v2638
        %v2823 = vpack.c.b16 %v2641, %v2639
        %v2824 = vpack.c.b16 %v2644, %v2642
        %v2825 = vpack.c.b16 %v2645, %v2643
        %v2826 = vpack.c.b16 %v2648, %v2646
        %v2827 = vpack.c.b16 %v2649, %v2647
        %v2828 = vpack.c.b16 %v2652, %v2650
        %v2829 = vpack.c.b16 %v2653, %v2651
        %v2830 = vpack.c.b16 %v2656, %v2654
        %v2831 = vpack.c.b16 %v2657, %v2655
        %v2832 = vpack.c.b16 %v2660, %v2658
        %v2833 = vpack.c.b16 %v2661, %v2659
        %v2834 = vpack.c.b16 %v2664, %v2662
        %v2835 = vpack.c.b16 %v2665, %v2663
        %v2836 = vpack.c.b16 %v2668, %v2666
        %v2837 = vpack.c.b16 %v2669, %v2667
        %v2838 = vpack.c.b16 %v2672, %v2670
        %v2839 = vpack.c.b16 %v2673, %v2671
        %v2840 = vpack.c.b16 %v2676, %v2674
        %v2841 = vpack.c.b16 %v2677, %v2675
        %v2842 = vpack.c.b16 %v2680, %v2678
        %v2843 = vpack.c.b16 %v2681, %v2679
        %v2844 = vpack.c.b16 %v2684, %v2682
        %v2845 = vpack.c.b16 %v2685, %v2683
        %v2846 = vpack.c.b16 %v2688, %v2686
        %v2847 = vpack.c.b16 %v2689, %v2687
        %v2848 = vpack.c.b16 %v2692, %v2690
        %v2849 = vpack.c.b16 %v2693, %v2691
        %v2850 = vpack.c.b16 %v2696, %v2694
        %v2851 = vpack.c.b16 %v2697, %v2695
        %v2852 = vpack.c.b16 %v2700, %v2698
        %v2853 = vpack.c.b16 %v2701, %v2699
        %v2854 = vpack.c.b16 %v2704, %v2702
        %v2855 = vpack.c.b16 %v2705, %v2703
        %v2856 = vpack.c.b16 %v2708, %v2706
        %v2857 = vpack.c.b16 %v2709, %v2707
        %v2858 = vpack.c.b16 %v2712, %v2710
        %v2859 = vpack.c.b16 %v2713, %v2711
        %v2860 = vpack.c.b16 %v2716, %v2714
        %v2861 = vpack.c.b16 %v2717, %v2715
        %v2862 = vpack.c.b16 %v2720, %v2718
        %v2863 = vpack.c.b16 %v2721, %v2719
        %v2864 = vpack.c.b16 %v2724, %v2722
        %v2865 = vpack.c.b16 %v2725, %v2723
        %v2866 = vpack.c.b16 %v2728, %v2726
        %v2867 = vpack.c.b16 %v2729, %v2727
        %v2868 = vpack.c.b16 %v2732, %v2730
        %v2869 = vpack.c.b16 %v2733, %v2731
        %v2870 = vpack.c.b16 %v2736, %v2734
        %v2871 = vpack.c.b16 %v2737, %v2735
        %v2872 = vpack.c.b16 %v2740, %v2738
        %v2873 = vpack.c.b16 %v2741, %v2739
        %v2874 = vpack.c.b16 %v2744, %v2742
        %v2875 = vpack.c.b16 %v2745, %v2743
        %v2876 = vpack.c.b16 %v2748, %v2746
        %v2877 = vpack.c.b16 %v2749, %v2747
        %3006 = vmatprep.subr.bf16.mxu0 %v2751
        %3007 = vmatpush1.bf16.msra.mxu0 %v2750
        %3008 = vmatprep.subr.bf16.mxu0 %v2753
        %3009 = vmatpush1.bf16.msra.mxu0 %v2752
        %3010 = vmatprep.subr.bf16.mxu0 %v2755
        %3011 = vmatpush1.bf16.msra.mxu0 %v2754
        %3012 = vmatprep.subr.bf16.mxu0 %v2757
        %3013 = vmatpush1.bf16.msra.mxu0 %v2756
        %3014 = vmatprep.subr.bf16.mxu0 %v2759
        %3015 = vmatpush1.bf16.msra.mxu0 %v2758
        %3016 = vmatprep.subr.bf16.mxu0 %v2761
        %3017 = vmatpush1.bf16.msra.mxu0 %v2760
        %3018 = vmatprep.subr.bf16.mxu0 %v2763
        %3019 = vmatpush1.bf16.msra.mxu0 %v2762
        %3020 = vmatprep.subr.bf16.mxu0 %v2765
        %3021 = vmatpush1.bf16.msra.mxu0 %v2764
        %3022 = vmatprep.subr.bf16.mxu0 %v2767
        %3023 = vmatpush1.bf16.msra.mxu0 %v2766
        %3024 = vmatprep.subr.bf16.mxu0 %v2769
        %3025 = vmatpush1.bf16.msra.mxu0 %v2768
        %3026 = vmatprep.subr.bf16.mxu0 %v2771
        %3027 = vmatpush1.bf16.msra.mxu0 %v2770
        %3028 = vmatprep.subr.bf16.mxu0 %v2773
        %3029 = vmatpush1.bf16.msra.mxu0 %v2772
        %3030 = vmatprep.subr.bf16.mxu0 %v2775
        %3031 = vmatpush1.bf16.msra.mxu0 %v2774
        %3032 = vmatprep.subr.bf16.mxu0 %v2777
        %3033 = vmatpush1.bf16.msra.mxu0 %v2776
        %3034 = vmatprep.subr.bf16.mxu0 %v2779
        %3035 = vmatpush1.bf16.msra.mxu0 %v2778
        %3036 = vmatprep.subr.bf16.mxu0 %v2781
        %3037 = vmatpush1.bf16.msra.mxu0 %v2780
        %3038 = vmatprep.mubr.bf16.mxu0 %v1539
        %3039 = vmatmul.mubr.bf16.gmra.mrb[0].mxu0 %v1538
        %v3040 = vpop.f32.mrb[0].mxu0
        %v3041 = vadd.f32 %v2359, %v3040
        %v3042 = vpop.f32.mrb[0].mxu0
        %v3043 = vadd.f32 %v2363, %v3042
        %v3044 = vpop.f32.mrb[0].mxu0
        %v3045 = vpop.f32.mrb[0].mxu0
        %3046 = vdwg.mxu0
        %3047 = vmatprep.subr.bf16.mxu0 %v2783
        %3048 = vmatpush1.bf16.msra.mxu0 %v2782
        %3049 = vmatprep.subr.bf16.mxu0 %v2785
        %3050 = vmatpush1.bf16.msra.mxu0 %v2784
        %3051 = vmatprep.subr.bf16.mxu0 %v2787
        %3052 = vmatpush1.bf16.msra.mxu0 %v2786
        %3053 = vmatprep.subr.bf16.mxu0 %v2789
        %3054 = vmatpush1.bf16.msra.mxu0 %v2788
        %3055 = vmatprep.subr.bf16.mxu0 %v2791
        %3056 = vmatpush1.bf16.msra.mxu0 %v2790
        %3057 = vmatprep.subr.bf16.mxu0 %v2793
        %3058 = vmatpush1.bf16.msra.mxu0 %v2792
        %3059 = vmatprep.subr.bf16.mxu0 %v2795
        %3060 = vmatpush1.bf16.msra.mxu0 %v2794
        %3061 = vmatprep.subr.bf16.mxu0 %v2797
        %3062 = vmatpush1.bf16.msra.mxu0 %v2796
        %3063 = vmatprep.subr.bf16.mxu0 %v2799
        %3064 = vmatpush1.bf16.msra.mxu0 %v2798
        %3065 = vmatprep.subr.bf16.mxu0 %v2801
        %3066 = vmatpush1.bf16.msra.mxu0 %v2800
        %3067 = vmatprep.subr.bf16.mxu0 %v2803
        %3068 = vmatpush1.bf16.msra.mxu0 %v2802
        %3069 = vmatprep.subr.bf16.mxu0 %v2805
        %3070 = vmatpush1.bf16.msra.mxu0 %v2804
        %3071 = vmatprep.subr.bf16.mxu0 %v2807
        %3072 = vmatpush1.bf16.msra.mxu0 %v2806
        %3073 = vmatprep.subr.bf16.mxu0 %v2809
        %3074 = vmatpush1.bf16.msra.mxu0 %v2808
        %3075 = vmatprep.subr.bf16.mxu0 %v2811
        %3076 = vmatpush1.bf16.msra.mxu0 %v2810
        %3077 = vmatprep.subr.bf16.mxu0 %v2813
        %3078 = vmatpush1.bf16.msra.mxu0 %v2812
        %3079 = vmatprep.mubr.bf16.mxu0 %v1541
        %3080 = vmatmul.mubr.bf16.gmra.mrb[0].mxu0 %v1540
        %v3081 = vpop.f32.mrb[0].mxu0
        %v3082 = vadd.f32 %v3041, %v3081
        %v3083 = vpop.f32.mrb[0].mxu0
        %v3084 = vadd.f32 %v3043, %v3083
        %v3085 = vpop.f32.mrb[0].mxu0
        %v3086 = vpop.f32.mrb[0].mxu0
        %3087 = vdwg.mxu0
        %3088 = vmatprep.subr.bf16.mxu0 %v2815
        %3089 = vmatpush1.bf16.msra.mxu0 %v2814
        %3090 = vmatprep.subr.bf16.mxu0 %v2817
        %3091 = vmatpush1.bf16.msra.mxu0 %v2816
        %3092 = vmatprep.subr.bf16.mxu0 %v2819
        %3093 = vmatpush1.bf16.msra.mxu0 %v2818
        %3094 = vmatprep.subr.bf16.mxu0 %v2821
        %3095 = vmatpush1.bf16.msra.mxu0 %v2820
        %3096 = vmatprep.subr.bf16.mxu0 %v2823
        %3097 = vmatpush1.bf16.msra.mxu0 %v2822
        %3098 = vmatprep.subr.bf16.mxu0 %v2825
        %3099 = vmatpush1.bf16.msra.mxu0 %v2824
        %3100 = vmatprep.subr.bf16.mxu0 %v2827
        %3101 = vmatpush1.bf16.msra.mxu0 %v2826
        %3102 = vmatprep.subr.bf16.mxu0 %v2829
        %3103 = vmatpush1.bf16.msra.mxu0 %v2828
        %3104 = vmatprep.subr.bf16.mxu0 %v2831
        %3105 = vmatpush1.bf16.msra.mxu0 %v2830
        %3106 = vmatprep.subr.bf16.mxu0 %v2833
        %3107 = vmatpush1.bf16.msra.mxu0 %v2832
        %3108 = vmatprep.subr.bf16.mxu0 %v2835
        %3109 = vmatpush1.bf16.msra.mxu0 %v2834
        %3110 = vmatprep.subr.bf16.mxu0 %v2837
        %3111 = vmatpush1.bf16.msra.mxu0 %v2836
        %3112 = vmatprep.subr.bf16.mxu0 %v2839
        %3113 = vmatpush1.bf16.msra.mxu0 %v2838
        %3114 = vmatprep.subr.bf16.mxu0 %v2841
        %3115 = vmatpush1.bf16.msra.mxu0 %v2840
        %3116 = vmatprep.subr.bf16.mxu0 %v2843
        %3117 = vmatpush1.bf16.msra.mxu0 %v2842
        %3118 = vmatprep.subr.bf16.mxu0 %v2845
        %3119 = vmatpush1.bf16.msra.mxu0 %v2844
        %3120 = vmatprep.mubr.bf16.mxu0 %v1543
        %3121 = vmatmul.mubr.bf16.gmra.mrb[0].mxu0 %v1542
        %v3122 = vpop.f32.mrb[0].mxu0
        %v3123 = vadd.f32 %v3082, %v3122
        %v3124 = vpop.f32.mrb[0].mxu0
        %v3125 = vadd.f32 %v3084, %v3124
        %v3126 = vpop.f32.mrb[0].mxu0
        %v3127 = vpop.f32.mrb[0].mxu0
        %3128 = vdwg.mxu0
        %3129 = vmatprep.subr.bf16.mxu0 %v2847
        %3130 = vmatpush1.bf16.msra.mxu0 %v2846
        %3131 = vmatprep.subr.bf16.mxu0 %v2849
        %3132 = vmatpush1.bf16.msra.mxu0 %v2848
        %3133 = vmatprep.subr.bf16.mxu0 %v2851
        %3134 = vmatpush1.bf16.msra.mxu0 %v2850
        %3135 = vmatprep.subr.bf16.mxu0 %v2853
        %3136 = vmatpush1.bf16.msra.mxu0 %v2852
        %3137 = vmatprep.subr.bf16.mxu0 %v2855
        %3138 = vmatpush1.bf16.msra.mxu0 %v2854
        %3139 = vmatprep.subr.bf16.mxu0 %v2857
        %3140 = vmatpush1.bf16.msra.mxu0 %v2856
        %3141 = vmatprep.subr.bf16.mxu0 %v2859
        %3142 = vmatpush1.bf16.msra.mxu0 %v2858
        %3143 = vmatprep.subr.bf16.mxu0 %v2861
        %3144 = vmatpush1.bf16.msra.mxu0 %v2860
        %3145 = vmatprep.subr.bf16.mxu0 %v2863
        %3146 = vmatpush1.bf16.msra.mxu0 %v2862
        %3147 = vmatprep.subr.bf16.mxu0 %v2865
        %3148 = vmatpush1.bf16.msra.mxu0 %v2864
        %3149 = vmatprep.subr.bf16.mxu0 %v2867
        %3150 = vmatpush1.bf16.msra.mxu0 %v2866
        %3151 = vmatprep.subr.bf16.mxu0 %v2869
        %3152 = vmatpush1.bf16.msra.mxu0 %v2868
        %3153 = vmatprep.subr.bf16.mxu0 %v2871
        %3154 = vmatpush1.bf16.msra.mxu0 %v2870
        %3155 = vmatprep.subr.bf16.mxu0 %v2873
        %3156 = vmatpush1.bf16.msra.mxu0 %v2872
        %3157 = vmatprep.subr.bf16.mxu0 %v2875
        %3158 = vmatpush1.bf16.msra.mxu0 %v2874
        %3159 = vmatprep.subr.bf16.mxu0 %v2877
        %3160 = vmatpush1.bf16.msra.mxu0 %v2876
        %3161 = vmatprep.mubr.bf16.mxu0 %v1545
        %3162 = vmatmul.mubr.bf16.gmra.mrb[0].mxu0 %v1544
        %v3163 = vpop.f32.mrb[0].mxu0
        %v3164 = vadd.f32 %v3123, %v3163
        %v3165 = vpop.f32.mrb[0].mxu0
        %v3166 = vadd.f32 %v3125, %v3165
        %v3167 = vpop.f32.mrb[0].mxu0
        %v3168 = vpop.f32.mrb[0].mxu0
        %3169 = vdwg.mxu0
        %v3172 = vcombine.low %v3164, %v3166
        %v3174 = vunpack.c.l.s4 1983009808
        %v3175 = vunpack.c.0.s8 %v3174
        %v3176 = vlaneseq
        %v3177 = vshrl.u32 %v3176, 7
        %v3178 = vsub.s32 %v3175, %v3177
        %v3179 = vrot.slane %v3172, %v3178
        %3181 = vst [vmem:[%s1435] sm:$0xf] %v3179
        %p3182 = scmp.lt.s32.totalorder %s19, 1
        %s3183 = scalar_select %p3182, %s19, 1
        %s3184 = smul.addr %s3183, 2
        %s3185 = scalar_lea.vmem %s6, %s3184
        %s3186 = smul.u32 2, %s19
        %p3187 = scmp.lt.s32.totalorder %s3186, 3
        %s3188 = scalar_select %p3187, %s3186, 3
        %s3189 = smul.addr %s3188, 2
        %s3190 = scalar_lea.vmem %s7, %s3189
        // Predicated region
        $region124: #{attn_net_forward.3} parent=114 // pred_check
          %p3191 = pneg %p183
        $region125: #{attn_net_forward.3} parent=114 // pred_check_branch
          %3193 = sbr.rel (%p3191) target = $region127
        $region126: #{attn_net_forward.3} parent=114 // pred_region
          _
        $region127: #{attn_net_forward.3} parent=114 // pred_fallthru
          _
        // Predicated region
        $region128: #{attn_net_forward.3} parent=114 // pred_check
          %p3194 = pneg %p209
        $region129: #{attn_net_forward.3} parent=114 // pred_check_branch
          %3196 = sbr.rel (%p3194) target = $region131
        $region130: #{attn_net_forward.3} parent=114 // pred_region
          %s3197 = smul.u32 2, %s19
        $region131: #{attn_net_forward.3} parent=114 // pred_fallthru
          _
      $region115: #{attn_net_forward.3} parent=5 // pred_fallthru
        _
      %p3198 = scmp.le.s32.totalorder 2, %s14
      // Predicated region
      $region132: #{attn_net_forward.3} parent=5 // pred_check
        %p3199 = pneg %p3198
      $region133: #{attn_net_forward.3} parent=5 // pred_check_branch
        %3201 = sbr.rel (%p3199) target = $region135
      $region134: #{attn_net_forward.3} parent=5 // pred_region
        %s3202 = ssub.s32 %s14, 2
        // Predicated region
        $region136: #{attn_net_forward.3} parent=134 // pred_check
          %p3203 = pneg %p189
        $region137: #{attn_net_forward.3} parent=134 // pred_check_branch
          %3205 = sbr.rel (%p3203) target = $region139
        $region138: #{attn_net_forward.3} parent=134 // pred_region
          %p3206 = scmp.lt.s32.totalorder %s20, 1
          %s3207 = scalar_select %p3206, %s20, 1
          %s3208 = smul.addr %s3207, 2
          %s3209 = scalar_lea.vmem %s6, %s3208
        $region139: #{attn_net_forward.3} parent=134 // pred_fallthru
          _
        // Predicated region
        $region140: #{attn_net_forward.3} parent=134 // pred_check
          %p3210 = pneg %p215
        $region141: #{attn_net_forward.3} parent=134 // pred_check_branch
          %3212 = sbr.rel (%p3210) target = $region143
        $region142: #{attn_net_forward.3} parent=134 // pred_region
          %s3213 = smul.u32 2, %s20
          %p3214 = scmp.lt.s32.totalorder %s3213, 3
          %s3215 = scalar_select %p3214, %s3213, 3
          %s3216 = smul.addr %s3215, 2
          %s3217 = scalar_lea.vmem %s7, %s3216
        $region143: #{attn_net_forward.3} parent=134 // pred_fallthru
          _
      $region135: #{attn_net_forward.3} parent=5 // pred_fallthru
        _
    $region6: #{attn_net_forward.3} parent=1 // loop_footer
      %s18 = sadd.s32 1, %s14
    $region7: #{attn_net_forward.3} parent=1 // loop_footer_branch
      %13 = sbr.rel target = $region3
    $region8: #{attn_net_forward.3} parent=1 // loop_exit
      _

// kernel: attn_net_forward.5
$region0: #{attn_net_forward.5}
  #allocation0 [shape = 'u32[]', space=smem, size = 0x4, offset = 0x4, fixed_abs, tag = 'smem constant byte address 0x4 - core index']
  #allocation1 [shape = 'u32[144,128]{1,0:T(1,128)}', space=vmem, size = 0x12000, scoped, tag = 'internal scratch']
  %s0 = inlined_call_operand.vmem [shape: f32[2,256], index: 0, kind: input, shape index: {}]
  %s1 = inlined_call_operand.vmem [shape: bf16[256,1024], index: 1, kind: input, shape index: {}]
  %s2 = inlined_call_operand.vmem [shape: f32[1,1024], index: 2, kind: input, shape index: {}]
  %s3 = inlined_call_operand.vmem [shape: f32[1024,2], index: 3, kind: input, shape index: {}]
  %s4 = inlined_call_operand.vmem [shape: f32[1,2], index: 4, kind: input, shape index: {}]
  %s5 = inlined_call_operand.hbm [shape: f32[2,2], index: 5, kind: output, shape index: {}]
  %s6 = sld [smem:[#allocation0]]
  $region30: #{attn_net_forward.5} parent=0
    _
  %s8 = ssub.s32 1, %s6
  %s9 = scalar_select 0, %s8, %s6
  $region1: #{attn_net_forward.5} parent=0
    #allocation2 [shape = 'u8[1024]{0}', space=vmem, size = 0x400, scoped, tag = 'output window, operand 0, single buffered']
    #allocation3 [shape = 's32[1]{0}', space=sflag, size = 0x4, scoped, tag = 'scoped memory for attn_net_forward.5']
    %10 = vsyncpa [#allocation3], 0
    // Predicated region
    $region2: #{attn_net_forward.5} parent=1 // pred_check
      _
    $region3: #{attn_net_forward.5} parent=1 // pred_check_branch
      %12 = sbr.rel (0) target = $region5
    $region4: #{attn_net_forward.5} parent=1 // pred_region
      _
    $region5: #{attn_net_forward.5} parent=1 // pred_fallthru
      _
    // Predicated region
    $region6: #{attn_net_forward.5} parent=1 // pred_check
      _
    $region7: #{attn_net_forward.5} parent=1 // pred_check_branch
      %14 = sbr.rel (0) target = $region9
    $region8: #{attn_net_forward.5} parent=1 // pred_region
      _
    $region9: #{attn_net_forward.5} parent=1 // pred_fallthru
      _
    // Predicated region
    $region10: #{attn_net_forward.5} parent=1 // pred_check
      _
    $region11: #{attn_net_forward.5} parent=1 // pred_check_branch
      %16 = sbr.rel (0) target = $region13
    $region12: #{attn_net_forward.5} parent=1 // pred_region
      _
    $region13: #{attn_net_forward.5} parent=1 // pred_fallthru
      _
    // Predicated region
    $region14: #{attn_net_forward.5} parent=1 // pred_check
      _
    $region15: #{attn_net_forward.5} parent=1 // pred_check_branch
      %18 = sbr.rel (0) target = $region17
    $region16: #{attn_net_forward.5} parent=1 // pred_region
      _
    $region17: #{attn_net_forward.5} parent=1 // pred_fallthru
      _
    // Predicated region
    $region18: #{attn_net_forward.5} parent=1 // pred_check
      _
    $region19: #{attn_net_forward.5} parent=1 // pred_check_branch
      %20 = sbr.rel (0) target = $region21
    $region20: #{attn_net_forward.5} parent=1 // pred_region
      _
    $region21: #{attn_net_forward.5} parent=1 // pred_fallthru
      _
    %v21 = vld [vmem:[%s0] sm:$0xf]
    %v24 = vunpack.c.l.s4 1983009808
    %v25 = vunpack.c.0.s8 %v24
    %v26 = vlaneseq
    %v27 = vshrl.u32 %v26, 7
    %v28 = vsub.s32 %v25, %v27
    %v29 = vrot.slane %v21, %v28
    %v30 = vcombine.high %v29, %v29
    %v33 = vpack.c.bf16 %v29, %v29
    %v34 = vpack.c.bf16 %v30, %v30
    %v35 = vld [vmem:[%s1] sm:$0xff]
    %v36 = vld [vmem:[%s1 + $0x8] sm:$0xff]
    %v37 = vld [vmem:[%s1 + $0x10] sm:$0xff]
    %v38 = vld [vmem:[%s1 + $0x18] sm:$0xff]
    %v39 = vld [vmem:[%s1 + $0x20] sm:$0xff]
    %v40 = vld [vmem:[%s1 + $0x28] sm:$0xff]
    %v41 = vld [vmem:[%s1 + $0x30] sm:$0xff]
    %v42 = vld [vmem:[%s1 + $0x38] sm:$0xff]
    %v43 = vld [vmem:[%s1 + $0x40] sm:$0xff]
    %v44 = vld [vmem:[%s1 + $0x48] sm:$0xff]
    %v45 = vld [vmem:[%s1 + $0x50] sm:$0xff]
    %v46 = vld [vmem:[%s1 + $0x58] sm:$0xff]
    %v47 = vld [vmem:[%s1 + $0x60] sm:$0xff]
    %v48 = vld [vmem:[%s1 + $0x68] sm:$0xff]
    %v49 = vld [vmem:[%s1 + $0x70] sm:$0xff]
    %v50 = vld [vmem:[%s1 + $0x78] sm:$0xff]
    %v51 = vld [vmem:[%s1 + $0x80] sm:$0xff]
    %v52 = vld [vmem:[%s1 + $0x88] sm:$0xff]
    %v53 = vld [vmem:[%s1 + $0x90] sm:$0xff]
    %v54 = vld [vmem:[%s1 + $0x98] sm:$0xff]
    %v55 = vld [vmem:[%s1 + $0xa0] sm:$0xff]
    %v56 = vld [vmem:[%s1 + $0xa8] sm:$0xff]
    %v57 = vld [vmem:[%s1 + $0xb0] sm:$0xff]
    %v58 = vld [vmem:[%s1 + $0xb8] sm:$0xff]
    %v59 = vld [vmem:[%s1 + $0xc0] sm:$0xff]
    %v60 = vld [vmem:[%s1 + $0xc8] sm:$0xff]
    %v61 = vld [vmem:[%s1 + $0xd0] sm:$0xff]
    %v62 = vld [vmem:[%s1 + $0xd8] sm:$0xff]
    %v63 = vld [vmem:[%s1 + $0xe0] sm:$0xff]
    %v64 = vld [vmem:[%s1 + $0xe8] sm:$0xff]
    %v65 = vld [vmem:[%s1 + $0xf0] sm:$0xff]
    %v66 = vld [vmem:[%s1 + $0xf8] sm:$0xff]
    %v67 = vld [vmem:[%s1 + $0x100] sm:$0xff]
    %v68 = vld [vmem:[%s1 + $0x108] sm:$0xff]
    %v69 = vld [vmem:[%s1 + $0x110] sm:$0xff]
    %v70 = vld [vmem:[%s1 + $0x118] sm:$0xff]
    %v71 = vld [vmem:[%s1 + $0x120] sm:$0xff]
    %v72 = vld [vmem:[%s1 + $0x128] sm:$0xff]
    %v73 = vld [vmem:[%s1 + $0x130] sm:$0xff]
    %v74 = vld [vmem:[%s1 + $0x138] sm:$0xff]
    %v75 = vld [vmem:[%s1 + $0x140] sm:$0xff]
    %v76 = vld [vmem:[%s1 + $0x148] sm:$0xff]
    %v77 = vld [vmem:[%s1 + $0x150] sm:$0xff]
    %v78 = vld [vmem:[%s1 + $0x158] sm:$0xff]
    %v79 = vld [vmem:[%s1 + $0x160] sm:$0xff]
    %v80 = vld [vmem:[%s1 + $0x168] sm:$0xff]
    %v81 = vld [vmem:[%s1 + $0x170] sm:$0xff]
    %v82 = vld [vmem:[%s1 + $0x178] sm:$0xff]
    %v83 = vld [vmem:[%s1 + $0x180] sm:$0xff]
    %v84 = vld [vmem:[%s1 + $0x188] sm:$0xff]
    %v85 = vld [vmem:[%s1 + $0x190] sm:$0xff]
    %v86 = vld [vmem:[%s1 + $0x198] sm:$0xff]
    %v87 = vld [vmem:[%s1 + $0x1a0] sm:$0xff]
    %v88 = vld [vmem:[%s1 + $0x1a8] sm:$0xff]
    %v89 = vld [vmem:[%s1 + $0x1b0] sm:$0xff]
    %v90 = vld [vmem:[%s1 + $0x1b8] sm:$0xff]
    %v91 = vld [vmem:[%s1 + $0x1c0] sm:$0xff]
    %v92 = vld [vmem:[%s1 + $0x1c8] sm:$0xff]
    %v93 = vld [vmem:[%s1 + $0x1d0] sm:$0xff]
    %v94 = vld [vmem:[%s1 + $0x1d8] sm:$0xff]
    %v95 = vld [vmem:[%s1 + $0x1e0] sm:$0xff]
    %v96 = vld [vmem:[%s1 + $0x1e8] sm:$0xff]
    %v97 = vld [vmem:[%s1 + $0x1f0] sm:$0xff]
    %v98 = vld [vmem:[%s1 + $0x1f8] sm:$0xff]
    %v99 = vld [vmem:[%s1 + $0x200] sm:$0xff]
    %v100 = vld [vmem:[%s1 + $0x208] sm:$0xff]
    %v101 = vld [vmem:[%s1 + $0x210] sm:$0xff]
    %v102 = vld [vmem:[%s1 + $0x218] sm:$0xff]
    %v103 = vld [vmem:[%s1 + $0x220] sm:$0xff]
    %v104 = vld [vmem:[%s1 + $0x228] sm:$0xff]
    %v105 = vld [vmem:[%s1 + $0x230] sm:$0xff]
    %v106 = vld [vmem:[%s1 + $0x238] sm:$0xff]
    %v107 = vld [vmem:[%s1 + $0x240] sm:$0xff]
    %v108 = vld [vmem:[%s1 + $0x248] sm:$0xff]
    %v109 = vld [vmem:[%s1 + $0x250] sm:$0xff]
    %v110 = vld [vmem:[%s1 + $0x258] sm:$0xff]
    %v111 = vld [vmem:[%s1 + $0x260] sm:$0xff]
    %v112 = vld [vmem:[%s1 + $0x268] sm:$0xff]
    %v113 = vld [vmem:[%s1 + $0x270] sm:$0xff]
    %v114 = vld [vmem:[%s1 + $0x278] sm:$0xff]
    %v115 = vld [vmem:[%s1 + $0x280] sm:$0xff]
    %v116 = vld [vmem:[%s1 + $0x288] sm:$0xff]
    %v117 = vld [vmem:[%s1 + $0x290] sm:$0xff]
    %v118 = vld [vmem:[%s1 + $0x298] sm:$0xff]
    %v119 = vld [vmem:[%s1 + $0x2a0] sm:$0xff]
    %v120 = vld [vmem:[%s1 + $0x2a8] sm:$0xff]
    %v121 = vld [vmem:[%s1 + $0x2b0] sm:$0xff]
    %v122 = vld [vmem:[%s1 + $0x2b8] sm:$0xff]
    %v123 = vld [vmem:[%s1 + $0x2c0] sm:$0xff]
    %v124 = vld [vmem:[%s1 + $0x2c8] sm:$0xff]
    %v125 = vld [vmem:[%s1 + $0x2d0] sm:$0xff]
    %v126 = vld [vmem:[%s1 + $0x2d8] sm:$0xff]
    %v127 = vld [vmem:[%s1 + $0x2e0] sm:$0xff]
    %v128 = vld [vmem:[%s1 + $0x2e8] sm:$0xff]
    %v129 = vld [vmem:[%s1 + $0x2f0] sm:$0xff]
    %v130 = vld [vmem:[%s1 + $0x2f8] sm:$0xff]
    %v131 = vld [vmem:[%s1 + $0x300] sm:$0xff]
    %v132 = vld [vmem:[%s1 + $0x308] sm:$0xff]
    %v133 = vld [vmem:[%s1 + $0x310] sm:$0xff]
    %v134 = vld [vmem:[%s1 + $0x318] sm:$0xff]
    %v135 = vld [vmem:[%s1 + $0x320] sm:$0xff]
    %v136 = vld [vmem:[%s1 + $0x328] sm:$0xff]
    %v137 = vld [vmem:[%s1 + $0x330] sm:$0xff]
    %v138 = vld [vmem:[%s1 + $0x338] sm:$0xff]
    %v139 = vld [vmem:[%s1 + $0x340] sm:$0xff]
    %v140 = vld [vmem:[%s1 + $0x348] sm:$0xff]
    %v141 = vld [vmem:[%s1 + $0x350] sm:$0xff]
    %v142 = vld [vmem:[%s1 + $0x358] sm:$0xff]
    %v143 = vld [vmem:[%s1 + $0x360] sm:$0xff]
    %v144 = vld [vmem:[%s1 + $0x368] sm:$0xff]
    %v145 = vld [vmem:[%s1 + $0x370] sm:$0xff]
    %v146 = vld [vmem:[%s1 + $0x378] sm:$0xff]
    %v147 = vld [vmem:[%s1 + $0x380] sm:$0xff]
    %v148 = vld [vmem:[%s1 + $0x388] sm:$0xff]
    %v149 = vld [vmem:[%s1 + $0x390] sm:$0xff]
    %v150 = vld [vmem:[%s1 + $0x398] sm:$0xff]
    %v151 = vld [vmem:[%s1 + $0x3a0] sm:$0xff]
    %v152 = vld [vmem:[%s1 + $0x3a8] sm:$0xff]
    %v153 = vld [vmem:[%s1 + $0x3b0] sm:$0xff]
    %v154 = vld [vmem:[%s1 + $0x3b8] sm:$0xff]
    %v155 = vld [vmem:[%s1 + $0x3c0] sm:$0xff]
    %v156 = vld [vmem:[%s1 + $0x3c8] sm:$0xff]
    %v157 = vld [vmem:[%s1 + $0x3d0] sm:$0xff]
    %v158 = vld [vmem:[%s1 + $0x3d8] sm:$0xff]
    %v159 = vld [vmem:[%s1 + $0x3e0] sm:$0xff]
    %v160 = vld [vmem:[%s1 + $0x3e8] sm:$0xff]
    %v161 = vld [vmem:[%s1 + $0x3f0] sm:$0xff]
    %v162 = vld [vmem:[%s1 + $0x3f8] sm:$0xff]
    %v163 = vld [vmem:[%s2] sm:$0xff]
    %v165 = vlaneseq
    %v166 = vshrl.u32 %v165, 7
    %v167 = vsub.s32 0, %v166
    %v168 = vrot.slane %v163, %v167
    %v169 = vlaneseq
    %v170 = vshrl.u32 %v169, 7
    %v171 = vsub.s32 1, %v170
    %v172 = vrot.slane %v163, %v171
    %v173 = vlaneseq
    %v174 = vshrl.u32 %v173, 7
    %v175 = vsub.s32 2, %v174
    %v176 = vrot.slane %v163, %v175
    %v177 = vlaneseq
    %v178 = vshrl.u32 %v177, 7
    %v179 = vsub.s32 3, %v178
    %v180 = vrot.slane %v163, %v179
    %v181 = vlaneseq
    %v182 = vshrl.u32 %v181, 7
    %v183 = vsub.s32 4, %v182
    %v184 = vrot.slane %v163, %v183
    %v185 = vlaneseq
    %v186 = vshrl.u32 %v185, 7
    %v187 = vsub.s32 5, %v186
    %v188 = vrot.slane %v163, %v187
    %v189 = vlaneseq
    %v190 = vshrl.u32 %v189, 7
    %v191 = vsub.s32 6, %v190
    %v192 = vrot.slane %v163, %v191
    %v193 = vlaneseq
    %v194 = vshrl.u32 %v193, 7
    %v195 = vsub.s32 7, %v194
    %v196 = vrot.slane %v163, %v195
    %v333 = vunpack.c.l.b16 %v35
    %v334 = vunpack.c.h.b16 %v35
    %v335 = vunpack.c.l.b16 %v36
    %v336 = vunpack.c.h.b16 %v36
    %v337 = vunpack.c.l.b16 %v37
    %v338 = vunpack.c.h.b16 %v37
    %v339 = vunpack.c.l.b16 %v38
    %v340 = vunpack.c.h.b16 %v38
    %v341 = vunpack.c.l.b16 %v39
    %v342 = vunpack.c.h.b16 %v39
    %v343 = vunpack.c.l.b16 %v40
    %v344 = vunpack.c.h.b16 %v40
    %v345 = vunpack.c.l.b16 %v41
    %v346 = vunpack.c.h.b16 %v41
    %v347 = vunpack.c.l.b16 %v42
    %v348 = vunpack.c.h.b16 %v42
    %v349 = vunpack.c.l.b16 %v43
    %v350 = vunpack.c.h.b16 %v43
    %v351 = vunpack.c.l.b16 %v44
    %v352 = vunpack.c.h.b16 %v44
    %v353 = vunpack.c.l.b16 %v45
    %v354 = vunpack.c.h.b16 %v45
    %v355 = vunpack.c.l.b16 %v46
    %v356 = vunpack.c.h.b16 %v46
    %v357 = vunpack.c.l.b16 %v47
    %v358 = vunpack.c.h.b16 %v47
    %v359 = vunpack.c.l.b16 %v48
    %v360 = vunpack.c.h.b16 %v48
    %v361 = vunpack.c.l.b16 %v49
    %v362 = vunpack.c.h.b16 %v49
    %v363 = vunpack.c.l.b16 %v50
    %v364 = vunpack.c.h.b16 %v50
    %v365 = vunpack.c.l.b16 %v51
    %v366 = vunpack.c.h.b16 %v51
    %v367 = vunpack.c.l.b16 %v52
    %v368 = vunpack.c.h.b16 %v52
    %v369 = vunpack.c.l.b16 %v53
    %v370 = vunpack.c.h.b16 %v53
    %v371 = vunpack.c.l.b16 %v54
    %v372 = vunpack.c.h.b16 %v54
    %v373 = vunpack.c.l.b16 %v55
    %v374 = vunpack.c.h.b16 %v55
    %v375 = vunpack.c.l.b16 %v56
    %v376 = vunpack.c.h.b16 %v56
    %v377 = vunpack.c.l.b16 %v57
    %v378 = vunpack.c.h.b16 %v57
    %v379 = vunpack.c.l.b16 %v58
    %v380 = vunpack.c.h.b16 %v58
    %v381 = vunpack.c.l.b16 %v59
    %v382 = vunpack.c.h.b16 %v59
    %v383 = vunpack.c.l.b16 %v60
    %v384 = vunpack.c.h.b16 %v60
    %v385 = vunpack.c.l.b16 %v61
    %v386 = vunpack.c.h.b16 %v61
    %v387 = vunpack.c.l.b16 %v62
    %v388 = vunpack.c.h.b16 %v62
    %v389 = vunpack.c.l.b16 %v63
    %v390 = vunpack.c.h.b16 %v63
    %v391 = vunpack.c.l.b16 %v64
    %v392 = vunpack.c.h.b16 %v64
    %v393 = vunpack.c.l.b16 %v65
    %v394 = vunpack.c.h.b16 %v65
    %v395 = vunpack.c.l.b16 %v66
    %v396 = vunpack.c.h.b16 %v66
    %v397 = vunpack.c.l.b16 %v67
    %v398 = vunpack.c.h.b16 %v67
    %v399 = vunpack.c.l.b16 %v68
    %v400 = vunpack.c.h.b16 %v68
    %v401 = vunpack.c.l.b16 %v69
    %v402 = vunpack.c.h.b16 %v69
    %v403 = vunpack.c.l.b16 %v70
    %v404 = vunpack.c.h.b16 %v70
    %v405 = vunpack.c.l.b16 %v71
    %v406 = vunpack.c.h.b16 %v71
    %v407 = vunpack.c.l.b16 %v72
    %v408 = vunpack.c.h.b16 %v72
    %v409 = vunpack.c.l.b16 %v73
    %v410 = vunpack.c.h.b16 %v73
    %v411 = vunpack.c.l.b16 %v74
    %v412 = vunpack.c.h.b16 %v74
    %v413 = vunpack.c.l.b16 %v75
    %v414 = vunpack.c.h.b16 %v75
    %v415 = vunpack.c.l.b16 %v76
    %v416 = vunpack.c.h.b16 %v76
    %v417 = vunpack.c.l.b16 %v77
    %v418 = vunpack.c.h.b16 %v77
    %v419 = vunpack.c.l.b16 %v78
    %v420 = vunpack.c.h.b16 %v78
    %v421 = vunpack.c.l.b16 %v79
    %v422 = vunpack.c.h.b16 %v79
    %v423 = vunpack.c.l.b16 %v80
    %v424 = vunpack.c.h.b16 %v80
    %v425 = vunpack.c.l.b16 %v81
    %v426 = vunpack.c.h.b16 %v81
    %v427 = vunpack.c.l.b16 %v82
    %v428 = vunpack.c.h.b16 %v82
    %v429 = vunpack.c.l.b16 %v83
    %v430 = vunpack.c.h.b16 %v83
    %v431 = vunpack.c.l.b16 %v84
    %v432 = vunpack.c.h.b16 %v84
    %v433 = vunpack.c.l.b16 %v85
    %v434 = vunpack.c.h.b16 %v85
    %v435 = vunpack.c.l.b16 %v86
    %v436 = vunpack.c.h.b16 %v86
    %v437 = vunpack.c.l.b16 %v87
    %v438 = vunpack.c.h.b16 %v87
    %v439 = vunpack.c.l.b16 %v88
    %v440 = vunpack.c.h.b16 %v88
    %v441 = vunpack.c.l.b16 %v89
    %v442 = vunpack.c.h.b16 %v89
    %v443 = vunpack.c.l.b16 %v90
    %v444 = vunpack.c.h.b16 %v90
    %v445 = vunpack.c.l.b16 %v91
    %v446 = vunpack.c.h.b16 %v91
    %v447 = vunpack.c.l.b16 %v92
    %v448 = vunpack.c.h.b16 %v92
    %v449 = vunpack.c.l.b16 %v93
    %v450 = vunpack.c.h.b16 %v93
    %v451 = vunpack.c.l.b16 %v94
    %v452 = vunpack.c.h.b16 %v94
    %v453 = vunpack.c.l.b16 %v95
    %v454 = vunpack.c.h.b16 %v95
    %v455 = vunpack.c.l.b16 %v96
    %v456 = vunpack.c.h.b16 %v96
    %v457 = vunpack.c.l.b16 %v97
    %v458 = vunpack.c.h.b16 %v97
    %v459 = vunpack.c.l.b16 %v98
    %v460 = vunpack.c.h.b16 %v98
    %v461 = vunpack.c.l.b16 %v99
    %v462 = vunpack.c.h.b16 %v99
    %v463 = vunpack.c.l.b16 %v100
    %v464 = vunpack.c.h.b16 %v100
    %v465 = vunpack.c.l.b16 %v101
    %v466 = vunpack.c.h.b16 %v101
    %v467 = vunpack.c.l.b16 %v102
    %v468 = vunpack.c.h.b16 %v102
    %v469 = vunpack.c.l.b16 %v103
    %v470 = vunpack.c.h.b16 %v103
    %v471 = vunpack.c.l.b16 %v104
    %v472 = vunpack.c.h.b16 %v104
    %v473 = vunpack.c.l.b16 %v105
    %v474 = vunpack.c.h.b16 %v105
    %v475 = vunpack.c.l.b16 %v106
    %v476 = vunpack.c.h.b16 %v106
    %v477 = vunpack.c.l.b16 %v107
    %v478 = vunpack.c.h.b16 %v107
    %v479 = vunpack.c.l.b16 %v108
    %v480 = vunpack.c.h.b16 %v108
    %v481 = vunpack.c.l.b16 %v109
    %v482 = vunpack.c.h.b16 %v109
    %v483 = vunpack.c.l.b16 %v110
    %v484 = vunpack.c.h.b16 %v110
    %v485 = vunpack.c.l.b16 %v111
    %v486 = vunpack.c.h.b16 %v111
    %v487 = vunpack.c.l.b16 %v112
    %v488 = vunpack.c.h.b16 %v112
    %v489 = vunpack.c.l.b16 %v113
    %v490 = vunpack.c.h.b16 %v113
    %v491 = vunpack.c.l.b16 %v114
    %v492 = vunpack.c.h.b16 %v114
    %v493 = vunpack.c.l.b16 %v115
    %v494 = vunpack.c.h.b16 %v115
    %v495 = vunpack.c.l.b16 %v116
    %v496 = vunpack.c.h.b16 %v116
    %v497 = vunpack.c.l.b16 %v117
    %v498 = vunpack.c.h.b16 %v117
    %v499 = vunpack.c.l.b16 %v118
    %v500 = vunpack.c.h.b16 %v118
    %v501 = vunpack.c.l.b16 %v119
    %v502 = vunpack.c.h.b16 %v119
    %v503 = vunpack.c.l.b16 %v120
    %v504 = vunpack.c.h.b16 %v120
    %v505 = vunpack.c.l.b16 %v121
    %v506 = vunpack.c.h.b16 %v121
    %v507 = vunpack.c.l.b16 %v122
    %v508 = vunpack.c.h.b16 %v122
    %v509 = vunpack.c.l.b16 %v123
    %v510 = vunpack.c.h.b16 %v123
    %v511 = vunpack.c.l.b16 %v124
    %v512 = vunpack.c.h.b16 %v124
    %v513 = vunpack.c.l.b16 %v125
    %v514 = vunpack.c.h.b16 %v125
    %v515 = vunpack.c.l.b16 %v126
    %v516 = vunpack.c.h.b16 %v126
    %v517 = vunpack.c.l.b16 %v127
    %v518 = vunpack.c.h.b16 %v127
    %v519 = vunpack.c.l.b16 %v128
    %v520 = vunpack.c.h.b16 %v128
    %v521 = vunpack.c.l.b16 %v129
    %v522 = vunpack.c.h.b16 %v129
    %v523 = vunpack.c.l.b16 %v130
    %v524 = vunpack.c.h.b16 %v130
    %v525 = vunpack.c.l.b16 %v131
    %v526 = vunpack.c.h.b16 %v131
    %v527 = vunpack.c.l.b16 %v132
    %v528 = vunpack.c.h.b16 %v132
    %v529 = vunpack.c.l.b16 %v133
    %v530 = vunpack.c.h.b16 %v133
    %v531 = vunpack.c.l.b16 %v134
    %v532 = vunpack.c.h.b16 %v134
    %v533 = vunpack.c.l.b16 %v135
    %v534 = vunpack.c.h.b16 %v135
    %v535 = vunpack.c.l.b16 %v136
    %v536 = vunpack.c.h.b16 %v136
    %v537 = vunpack.c.l.b16 %v137
    %v538 = vunpack.c.h.b16 %v137
    %v539 = vunpack.c.l.b16 %v138
    %v540 = vunpack.c.h.b16 %v138
    %v541 = vunpack.c.l.b16 %v139
    %v542 = vunpack.c.h.b16 %v139
    %v543 = vunpack.c.l.b16 %v140
    %v544 = vunpack.c.h.b16 %v140
    %v545 = vunpack.c.l.b16 %v141
    %v546 = vunpack.c.h.b16 %v141
    %v547 = vunpack.c.l.b16 %v142
    %v548 = vunpack.c.h.b16 %v142
    %v549 = vunpack.c.l.b16 %v143
    %v550 = vunpack.c.h.b16 %v143
    %v551 = vunpack.c.l.b16 %v144
    %v552 = vunpack.c.h.b16 %v144
    %v553 = vunpack.c.l.b16 %v145
    %v554 = vunpack.c.h.b16 %v145
    %v555 = vunpack.c.l.b16 %v146
    %v556 = vunpack.c.h.b16 %v146
    %v557 = vunpack.c.l.b16 %v147
    %v558 = vunpack.c.h.b16 %v147
    %v559 = vunpack.c.l.b16 %v148
    %v560 = vunpack.c.h.b16 %v148
    %v561 = vunpack.c.l.b16 %v149
    %v562 = vunpack.c.h.b16 %v149
    %v563 = vunpack.c.l.b16 %v150
    %v564 = vunpack.c.h.b16 %v150
    %v565 = vunpack.c.l.b16 %v151
    %v566 = vunpack.c.h.b16 %v151
    %v567 = vunpack.c.l.b16 %v152
    %v568 = vunpack.c.h.b16 %v152
    %v569 = vunpack.c.l.b16 %v153
    %v570 = vunpack.c.h.b16 %v153
    %v571 = vunpack.c.l.b16 %v154
    %v572 = vunpack.c.h.b16 %v154
    %v573 = vunpack.c.l.b16 %v155
    %v574 = vunpack.c.h.b16 %v155
    %v575 = vunpack.c.l.b16 %v156
    %v576 = vunpack.c.h.b16 %v156
    %v577 = vunpack.c.l.b16 %v157
    %v578 = vunpack.c.h.b16 %v157
    %v579 = vunpack.c.l.b16 %v158
    %v580 = vunpack.c.h.b16 %v158
    %v581 = vunpack.c.l.b16 %v159
    %v582 = vunpack.c.h.b16 %v159
    %v583 = vunpack.c.l.b16 %v160
    %v584 = vunpack.c.h.b16 %v160
    %v585 = vunpack.c.l.b16 %v161
    %v586 = vunpack.c.h.b16 %v161
    %v587 = vunpack.c.l.b16 %v162
    %v588 = vunpack.c.h.b16 %v162
    %v589 = vpack.c.b16 %v341, %v333
    %v590 = vpack.c.b16 %v342, %v334
    %v591 = vpack.c.b16 %v343, %v335
    %v592 = vpack.c.b16 %v344, %v336
    %v593 = vpack.c.b16 %v345, %v337
    %v594 = vpack.c.b16 %v346, %v338
    %v595 = vpack.c.b16 %v347, %v339
    %v596 = vpack.c.b16 %v348, %v340
    %v597 = vpack.c.b16 %v357, %v349
    %v598 = vpack.c.b16 %v358, %v350
    %v599 = vpack.c.b16 %v359, %v351
    %v600 = vpack.c.b16 %v360, %v352
    %v601 = vpack.c.b16 %v361, %v353
    %v602 = vpack.c.b16 %v362, %v354
    %v603 = vpack.c.b16 %v363, %v355
    %v604 = vpack.c.b16 %v364, %v356
    %v605 = vpack.c.b16 %v373, %v365
    %v606 = vpack.c.b16 %v374, %v366
    %v607 = vpack.c.b16 %v375, %v367
    %v608 = vpack.c.b16 %v376, %v368
    %v609 = vpack.c.b16 %v377, %v369
    %v610 = vpack.c.b16 %v378, %v370
    %v611 = vpack.c.b16 %v379, %v371
    %v612 = vpack.c.b16 %v380, %v372
    %v613 = vpack.c.b16 %v389, %v381
    %v614 = vpack.c.b16 %v390, %v382
    %v615 = vpack.c.b16 %v391, %v383
    %v616 = vpack.c.b16 %v392, %v384
    %v617 = vpack.c.b16 %v393, %v385
    %v618 = vpack.c.b16 %v394, %v386
    %v619 = vpack.c.b16 %v395, %v387
    %v620 = vpack.c.b16 %v396, %v388
    %v621 = vpack.c.b16 %v405, %v397
    %v622 = vpack.c.b16 %v406, %v398
    %v623 = vpack.c.b16 %v407, %v399
    %v624 = vpack.c.b16 %v408, %v400
    %v625 = vpack.c.b16 %v409, %v401
    %v626 = vpack.c.b16 %v410, %v402
    %v627 = vpack.c.b16 %v411, %v403
    %v628 = vpack.c.b16 %v412, %v404
    %v629 = vpack.c.b16 %v421, %v413
    %v630 = vpack.c.b16 %v422, %v414
    %v631 = vpack.c.b16 %v423, %v415
    %v632 = vpack.c.b16 %v424, %v416
    %v633 = vpack.c.b16 %v425, %v417
    %v634 = vpack.c.b16 %v426, %v418
    %v635 = vpack.c.b16 %v427, %v419
    %v636 = vpack.c.b16 %v428, %v420
    %v637 = vpack.c.b16 %v437, %v429
    %v638 = vpack.c.b16 %v438, %v430
    %v639 = vpack.c.b16 %v439, %v431
    %v640 = vpack.c.b16 %v440, %v432
    %v641 = vpack.c.b16 %v441, %v433
    %v642 = vpack.c.b16 %v442, %v434
    %v643 = vpack.c.b16 %v443, %v435
    %v644 = vpack.c.b16 %v444, %v436
    %v645 = vpack.c.b16 %v453, %v445
    %v646 = vpack.c.b16 %v454, %v446
    %v647 = vpack.c.b16 %v455, %v447
    %v648 = vpack.c.b16 %v456, %v448
    %v649 = vpack.c.b16 %v457, %v449
    %v650 = vpack.c.b16 %v458, %v450
    %v651 = vpack.c.b16 %v459, %v451
    %v652 = vpack.c.b16 %v460, %v452
    %v653 = vpack.c.b16 %v469, %v461
    %v654 = vpack.c.b16 %v470, %v462
    %v655 = vpack.c.b16 %v471, %v463
    %v656 = vpack.c.b16 %v472, %v464
    %v657 = vpack.c.b16 %v473, %v465
    %v658 = vpack.c.b16 %v474, %v466
    %v659 = vpack.c.b16 %v475, %v467
    %v660 = vpack.c.b16 %v476, %v468
    %v661 = vpack.c.b16 %v485, %v477
    %v662 = vpack.c.b16 %v486, %v478
    %v663 = vpack.c.b16 %v487, %v479
    %v664 = vpack.c.b16 %v488, %v480
    %v665 = vpack.c.b16 %v489, %v481
    %v666 = vpack.c.b16 %v490, %v482
    %v667 = vpack.c.b16 %v491, %v483
    %v668 = vpack.c.b16 %v492, %v484
    %v669 = vpack.c.b16 %v501, %v493
    %v670 = vpack.c.b16 %v502, %v494
    %v671 = vpack.c.b16 %v503, %v495
    %v672 = vpack.c.b16 %v504, %v496
    %v673 = vpack.c.b16 %v505, %v497
    %v674 = vpack.c.b16 %v506, %v498
    %v675 = vpack.c.b16 %v507, %v499
    %v676 = vpack.c.b16 %v508, %v500
    %v677 = vpack.c.b16 %v517, %v509
    %v678 = vpack.c.b16 %v518, %v510
    %v679 = vpack.c.b16 %v519, %v511
    %v680 = vpack.c.b16 %v520, %v512
    %v681 = vpack.c.b16 %v521, %v513
    %v682 = vpack.c.b16 %v522, %v514
    %v683 = vpack.c.b16 %v523, %v515
    %v684 = vpack.c.b16 %v524, %v516
    %v685 = vpack.c.b16 %v533, %v525
    %v686 = vpack.c.b16 %v534, %v526
    %v687 = vpack.c.b16 %v535, %v527
    %v688 = vpack.c.b16 %v536, %v528
    %v689 = vpack.c.b16 %v537, %v529
    %v690 = vpack.c.b16 %v538, %v530
    %v691 = vpack.c.b16 %v539, %v531
    %v692 = vpack.c.b16 %v540, %v532
    %v693 = vpack.c.b16 %v549, %v541
    %v694 = vpack.c.b16 %v550, %v542
    %v695 = vpack.c.b16 %v551, %v543
    %v696 = vpack.c.b16 %v552, %v544
    %v697 = vpack.c.b16 %v553, %v545
    %v698 = vpack.c.b16 %v554, %v546
    %v699 = vpack.c.b16 %v555, %v547
    %v700 = vpack.c.b16 %v556, %v548
    %v701 = vpack.c.b16 %v565, %v557
    %v702 = vpack.c.b16 %v566, %v558
    %v703 = vpack.c.b16 %v567, %v559
    %v704 = vpack.c.b16 %v568, %v560
    %v705 = vpack.c.b16 %v569, %v561
    %v706 = vpack.c.b16 %v570, %v562
    %v707 = vpack.c.b16 %v571, %v563
    %v708 = vpack.c.b16 %v572, %v564
    %v709 = vpack.c.b16 %v581, %v573
    %v710 = vpack.c.b16 %v582, %v574
    %v711 = vpack.c.b16 %v583, %v575
    %v712 = vpack.c.b16 %v584, %v576
    %v713 = vpack.c.b16 %v585, %v577
    %v714 = vpack.c.b16 %v586, %v578
    %v715 = vpack.c.b16 %v587, %v579
    %v716 = vpack.c.b16 %v588, %v580
    %845 = vmatprep.subr.bf16.mxu0 %v590
    %846 = vmatpush1.bf16.msra.mxu0 %v589
    %847 = vmatprep.subr.bf16.mxu0 %v598
    %848 = vmatpush1.bf16.msra.mxu0 %v597
    %849 = vmatprep.subr.bf16.mxu0 %v606
    %850 = vmatpush1.bf16.msra.mxu0 %v605
    %851 = vmatprep.subr.bf16.mxu0 %v614
    %852 = vmatpush1.bf16.msra.mxu0 %v613
    %853 = vmatprep.subr.bf16.mxu0 %v622
    %854 = vmatpush1.bf16.msra.mxu0 %v621
    %855 = vmatprep.subr.bf16.mxu0 %v630
    %856 = vmatpush1.bf16.msra.mxu0 %v629
    %857 = vmatprep.subr.bf16.mxu0 %v638
    %858 = vmatpush1.bf16.msra.mxu0 %v637
    %859 = vmatprep.subr.bf16.mxu0 %v646
    %860 = vmatpush1.bf16.msra.mxu0 %v645
    %861 = vmatprep.subr.bf16.mxu0 %v654
    %862 = vmatpush1.bf16.msra.mxu0 %v653
    %863 = vmatprep.subr.bf16.mxu0 %v662
    %864 = vmatpush1.bf16.msra.mxu0 %v661
    %865 = vmatprep.subr.bf16.mxu0 %v670
    %866 = vmatpush1.bf16.msra.mxu0 %v669
    %867 = vmatprep.subr.bf16.mxu0 %v678
    %868 = vmatpush1.bf16.msra.mxu0 %v677
    %869 = vmatprep.subr.bf16.mxu0 %v686
    %870 = vmatpush1.bf16.msra.mxu0 %v685
    %871 = vmatprep.subr.bf16.mxu0 %v694
    %872 = vmatpush1.bf16.msra.mxu0 %v693
    %873 = vmatprep.subr.bf16.mxu0 %v702
    %874 = vmatpush1.bf16.msra.mxu0 %v701
    %875 = vmatprep.subr.bf16.mxu0 %v710
    %876 = vmatpush1.bf16.msra.mxu0 %v709
    %877 = vmatprep.mubr.bf16.mxu0 %v34
    %878 = vmatmul.mubr.bf16.gmra.mrb[0].mxu0 %v33
    %v879 = vpop.f32.mrb[0].mxu0
    %v880 = vadd.f32 %v168, %v879
    %v881 = vpop.f32.mrb[0].mxu0
    %v882 = vadd.f32 %v172, %v881
    %v883 = vpop.f32.mrb[0].mxu0
    %v884 = vpop.f32.mrb[0].mxu0
    %885 = vdwg.mxu0
    %886 = vmatprep.subr.bf16.mxu0 %v592
    %887 = vmatpush1.bf16.msra.mxu0 %v591
    %888 = vmatprep.subr.bf16.mxu0 %v600
    %889 = vmatpush1.bf16.msra.mxu0 %v599
    %890 = vmatprep.subr.bf16.mxu0 %v608
    %891 = vmatpush1.bf16.msra.mxu0 %v607
    %892 = vmatprep.subr.bf16.mxu0 %v616
    %893 = vmatpush1.bf16.msra.mxu0 %v615
    %894 = vmatprep.subr.bf16.mxu0 %v624
    %895 = vmatpush1.bf16.msra.mxu0 %v623
    %896 = vmatprep.subr.bf16.mxu0 %v632
    %897 = vmatpush1.bf16.msra.mxu0 %v631
    %898 = vmatprep.subr.bf16.mxu0 %v640
    %899 = vmatpush1.bf16.msra.mxu0 %v639
    %900 = vmatprep.subr.bf16.mxu0 %v648
    %901 = vmatpush1.bf16.msra.mxu0 %v647
    %902 = vmatprep.subr.bf16.mxu0 %v656
    %903 = vmatpush1.bf16.msra.mxu0 %v655
    %904 = vmatprep.subr.bf16.mxu0 %v664
    %905 = vmatpush1.bf16.msra.mxu0 %v663
    %906 = vmatprep.subr.bf16.mxu0 %v672
    %907 = vmatpush1.bf16.msra.mxu0 %v671
    %908 = vmatprep.subr.bf16.mxu0 %v680
    %909 = vmatpush1.bf16.msra.mxu0 %v679
    %910 = vmatprep.subr.bf16.mxu0 %v688
    %911 = vmatpush1.bf16.msra.mxu0 %v687
    %912 = vmatprep.subr.bf16.mxu0 %v696
    %913 = vmatpush1.bf16.msra.mxu0 %v695
    %914 = vmatprep.subr.bf16.mxu0 %v704
    %915 = vmatpush1.bf16.msra.mxu0 %v703
    %916 = vmatprep.subr.bf16.mxu0 %v712
    %917 = vmatpush1.bf16.msra.mxu0 %v711
    %918 = vmatprep.mubr.bf16.mxu0 %v34
    %919 = vmatmul.mubr.bf16.gmra.mrb[0].mxu0 %v33
    %v920 = vpop.f32.mrb[0].mxu0
    %v921 = vadd.f32 %v176, %v920
    %v922 = vpop.f32.mrb[0].mxu0
    %v923 = vadd.f32 %v180, %v922
    %v924 = vpop.f32.mrb[0].mxu0
    %v925 = vpop.f32.mrb[0].mxu0
    %926 = vdwg.mxu0
    %927 = vmatprep.subr.bf16.mxu0 %v594
    %928 = vmatpush1.bf16.msra.mxu0 %v593
    %929 = vmatprep.subr.bf16.mxu0 %v602
    %930 = vmatpush1.bf16.msra.mxu0 %v601
    %931 = vmatprep.subr.bf16.mxu0 %v610
    %932 = vmatpush1.bf16.msra.mxu0 %v609
    %933 = vmatprep.subr.bf16.mxu0 %v618
    %934 = vmatpush1.bf16.msra.mxu0 %v617
    %935 = vmatprep.subr.bf16.mxu0 %v626
    %936 = vmatpush1.bf16.msra.mxu0 %v625
    %937 = vmatprep.subr.bf16.mxu0 %v634
    %938 = vmatpush1.bf16.msra.mxu0 %v633
    %939 = vmatprep.subr.bf16.mxu0 %v642
    %940 = vmatpush1.bf16.msra.mxu0 %v641
    %941 = vmatprep.subr.bf16.mxu0 %v650
    %942 = vmatpush1.bf16.msra.mxu0 %v649
    %943 = vmatprep.subr.bf16.mxu0 %v658
    %944 = vmatpush1.bf16.msra.mxu0 %v657
    %945 = vmatprep.subr.bf16.mxu0 %v666
    %946 = vmatpush1.bf16.msra.mxu0 %v665
    %947 = vmatprep.subr.bf16.mxu0 %v674
    %948 = vmatpush1.bf16.msra.mxu0 %v673
    %949 = vmatprep.subr.bf16.mxu0 %v682
    %950 = vmatpush1.bf16.msra.mxu0 %v681
    %951 = vmatprep.subr.bf16.mxu0 %v690
    %952 = vmatpush1.bf16.msra.mxu0 %v689
    %953 = vmatprep.subr.bf16.mxu0 %v698
    %954 = vmatpush1.bf16.msra.mxu0 %v697
    %955 = vmatprep.subr.bf16.mxu0 %v706
    %956 = vmatpush1.bf16.msra.mxu0 %v705
    %957 = vmatprep.subr.bf16.mxu0 %v714
    %958 = vmatpush1.bf16.msra.mxu0 %v713
    %959 = vmatprep.mubr.bf16.mxu0 %v34
    %960 = vmatmul.mubr.bf16.gmra.mrb[0].mxu0 %v33
    %v961 = vpop.f32.mrb[0].mxu0
    %v962 = vadd.f32 %v184, %v961
    %v963 = vpop.f32.mrb[0].mxu0
    %v964 = vadd.f32 %v188, %v963
    %v965 = vpop.f32.mrb[0].mxu0
    %v966 = vpop.f32.mrb[0].mxu0
    %967 = vdwg.mxu0
    %968 = vmatprep.subr.bf16.mxu0 %v596
    %969 = vmatpush1.bf16.msra.mxu0 %v595
    %970 = vmatprep.subr.bf16.mxu0 %v604
    %971 = vmatpush1.bf16.msra.mxu0 %v603
    %972 = vmatprep.subr.bf16.mxu0 %v612
    %973 = vmatpush1.bf16.msra.mxu0 %v611
    %974 = vmatprep.subr.bf16.mxu0 %v620
    %975 = vmatpush1.bf16.msra.mxu0 %v619
    %976 = vmatprep.subr.bf16.mxu0 %v628
    %977 = vmatpush1.bf16.msra.mxu0 %v627
    %978 = vmatprep.subr.bf16.mxu0 %v636
    %979 = vmatpush1.bf16.msra.mxu0 %v635
    %980 = vmatprep.subr.bf16.mxu0 %v644
    %981 = vmatpush1.bf16.msra.mxu0 %v643
    %982 = vmatprep.subr.bf16.mxu0 %v652
    %983 = vmatpush1.bf16.msra.mxu0 %v651
    %984 = vmatprep.subr.bf16.mxu0 %v660
    %985 = vmatpush1.bf16.msra.mxu0 %v659
    %986 = vmatprep.subr.bf16.mxu0 %v668
    %987 = vmatpush1.bf16.msra.mxu0 %v667
    %988 = vmatprep.subr.bf16.mxu0 %v676
    %989 = vmatpush1.bf16.msra.mxu0 %v675
    %990 = vmatprep.subr.bf16.mxu0 %v684
    %991 = vmatpush1.bf16.msra.mxu0 %v683
    %992 = vmatprep.subr.bf16.mxu0 %v692
    %993 = vmatpush1.bf16.msra.mxu0 %v691
    %994 = vmatprep.subr.bf16.mxu0 %v700
    %995 = vmatpush1.bf16.msra.mxu0 %v699
    %996 = vmatprep.subr.bf16.mxu0 %v708
    %997 = vmatpush1.bf16.msra.mxu0 %v707
    %998 = vmatprep.subr.bf16.mxu0 %v716
    %999 = vmatpush1.bf16.msra.mxu0 %v715
    %1000 = vmatprep.mubr.bf16.mxu0 %v34
    %1001 = vmatmul.mubr.bf16.gmra.mrb[0].mxu0 %v33
    %v1002 = vpop.f32.mrb[0].mxu0
    %v1003 = vadd.f32 %v192, %v1002
    %v1004 = vpop.f32.mrb[0].mxu0
    %v1005 = vadd.f32 %v196, %v1004
    %v1006 = vpop.f32.mrb[0].mxu0
    %v1007 = vpop.f32.mrb[0].mxu0
    %1008 = vdwg.mxu0
    %v1009 = vmax.f32 %v880, 0.0
    %v1010 = vmax.f32 %v882, 0.0
    %v1011 = vmax.f32 %v921, 0.0
    %v1012 = vmax.f32 %v923, 0.0
    %v1013 = vmax.f32 %v962, 0.0
    %v1014 = vmax.f32 %v964, 0.0
    %v1015 = vmax.f32 %v1003, 0.0
    %v1016 = vmax.f32 %v1005, 0.0
    %v1017 = vld [vmem:[%s3] sm:$0xff]
    %v1018 = vld [vmem:[%s3 + $0x8] sm:$0xff]
    %v1019 = vld [vmem:[%s3 + $0x10] sm:$0xff]
    %v1020 = vld [vmem:[%s3 + $0x18] sm:$0xff]
    %v1021 = vld [vmem:[%s3 + $0x20] sm:$0xff]
    %v1022 = vld [vmem:[%s3 + $0x28] sm:$0xff]
    %v1023 = vld [vmem:[%s3 + $0x30] sm:$0xff]
    %v1024 = vld [vmem:[%s3 + $0x38] sm:$0xff]
    %v1025 = vld [vmem:[%s3 + $0x40] sm:$0xff]
    %v1026 = vld [vmem:[%s3 + $0x48] sm:$0xff]
    %v1027 = vld [vmem:[%s3 + $0x50] sm:$0xff]
    %v1028 = vld [vmem:[%s3 + $0x58] sm:$0xff]
    %v1029 = vld [vmem:[%s3 + $0x60] sm:$0xff]
    %v1030 = vld [vmem:[%s3 + $0x68] sm:$0xff]
    %v1031 = vld [vmem:[%s3 + $0x70] sm:$0xff]
    %v1032 = vld [vmem:[%s3 + $0x78] sm:$0xff]
    %v1033 = vld [vmem:[%s3 + $0x80] sm:$0xff]
    %v1034 = vld [vmem:[%s3 + $0x88] sm:$0xff]
    %v1035 = vld [vmem:[%s3 + $0x90] sm:$0xff]
    %v1036 = vld [vmem:[%s3 + $0x98] sm:$0xff]
    %v1037 = vld [vmem:[%s3 + $0xa0] sm:$0xff]
    %v1038 = vld [vmem:[%s3 + $0xa8] sm:$0xff]
    %v1039 = vld [vmem:[%s3 + $0xb0] sm:$0xff]
    %v1040 = vld [vmem:[%s3 + $0xb8] sm:$0xff]
    %v1041 = vld [vmem:[%s3 + $0xc0] sm:$0xff]
    %v1042 = vld [vmem:[%s3 + $0xc8] sm:$0xff]
    %v1043 = vld [vmem:[%s3 + $0xd0] sm:$0xff]
    %v1044 = vld [vmem:[%s3 + $0xd8] sm:$0xff]
    %v1045 = vld [vmem:[%s3 + $0xe0] sm:$0xff]
    %v1046 = vld [vmem:[%s3 + $0xe8] sm:$0xff]
    %v1047 = vld [vmem:[%s3 + $0xf0] sm:$0xff]
    %v1048 = vld [vmem:[%s3 + $0xf8] sm:$0xff]
    %v1049 = vld [vmem:[%s3 + $0x100] sm:$0xff]
    %v1050 = vld [vmem:[%s3 + $0x108] sm:$0xff]
    %v1051 = vld [vmem:[%s3 + $0x110] sm:$0xff]
    %v1052 = vld [vmem:[%s3 + $0x118] sm:$0xff]
    %v1053 = vld [vmem:[%s3 + $0x120] sm:$0xff]
    %v1054 = vld [vmem:[%s3 + $0x128] sm:$0xff]
    %v1055 = vld [vmem:[%s3 + $0x130] sm:$0xff]
    %v1056 = vld [vmem:[%s3 + $0x138] sm:$0xff]
    %v1057 = vld [vmem:[%s3 + $0x140] sm:$0xff]
    %v1058 = vld [vmem:[%s3 + $0x148] sm:$0xff]
    %v1059 = vld [vmem:[%s3 + $0x150] sm:$0xff]
    %v1060 = vld [vmem:[%s3 + $0x158] sm:$0xff]
    %v1061 = vld [vmem:[%s3 + $0x160] sm:$0xff]
    %v1062 = vld [vmem:[%s3 + $0x168] sm:$0xff]
    %v1063 = vld [vmem:[%s3 + $0x170] sm:$0xff]
    %v1064 = vld [vmem:[%s3 + $0x178] sm:$0xff]
    %v1065 = vld [vmem:[%s3 + $0x180] sm:$0xff]
    %v1066 = vld [vmem:[%s3 + $0x188] sm:$0xff]
    %v1067 = vld [vmem:[%s3 + $0x190] sm:$0xff]
    %v1068 = vld [vmem:[%s3 + $0x198] sm:$0xff]
    %v1069 = vld [vmem:[%s3 + $0x1a0] sm:$0xff]
    %v1070 = vld [vmem:[%s3 + $0x1a8] sm:$0xff]
    %v1071 = vld [vmem:[%s3 + $0x1b0] sm:$0xff]
    %v1072 = vld [vmem:[%s3 + $0x1b8] sm:$0xff]
    %v1073 = vld [vmem:[%s3 + $0x1c0] sm:$0xff]
    %v1074 = vld [vmem:[%s3 + $0x1c8] sm:$0xff]
    %v1075 = vld [vmem:[%s3 + $0x1d0] sm:$0xff]
    %v1076 = vld [vmem:[%s3 + $0x1d8] sm:$0xff]
    %v1077 = vld [vmem:[%s3 + $0x1e0] sm:$0xff]
    %v1078 = vld [vmem:[%s3 + $0x1e8] sm:$0xff]
    %v1079 = vld [vmem:[%s3 + $0x1f0] sm:$0xff]
    %v1080 = vld [vmem:[%s3 + $0x1f8] sm:$0xff]
    %v1081 = vld [vmem:[%s3 + $0x200] sm:$0xff]
    %v1082 = vld [vmem:[%s3 + $0x208] sm:$0xff]
    %v1083 = vld [vmem:[%s3 + $0x210] sm:$0xff]
    %v1084 = vld [vmem:[%s3 + $0x218] sm:$0xff]
    %v1085 = vld [vmem:[%s3 + $0x220] sm:$0xff]
    %v1086 = vld [vmem:[%s3 + $0x228] sm:$0xff]
    %v1087 = vld [vmem:[%s3 + $0x230] sm:$0xff]
    %v1088 = vld [vmem:[%s3 + $0x238] sm:$0xff]
    %v1089 = vld [vmem:[%s3 + $0x240] sm:$0xff]
    %v1090 = vld [vmem:[%s3 + $0x248] sm:$0xff]
    %v1091 = vld [vmem:[%s3 + $0x250] sm:$0xff]
    %v1092 = vld [vmem:[%s3 + $0x258] sm:$0xff]
    %v1093 = vld [vmem:[%s3 + $0x260] sm:$0xff]
    %v1094 = vld [vmem:[%s3 + $0x268] sm:$0xff]
    %v1095 = vld [vmem:[%s3 + $0x270] sm:$0xff]
    %v1096 = vld [vmem:[%s3 + $0x278] sm:$0xff]
    %v1097 = vld [vmem:[%s3 + $0x280] sm:$0xff]
    %v1098 = vld [vmem:[%s3 + $0x288] sm:$0xff]
    %v1099 = vld [vmem:[%s3 + $0x290] sm:$0xff]
    %v1100 = vld [vmem:[%s3 + $0x298] sm:$0xff]
    %v1101 = vld [vmem:[%s3 + $0x2a0] sm:$0xff]
    %v1102 = vld [vmem:[%s3 + $0x2a8] sm:$0xff]
    %v1103 = vld [vmem:[%s3 + $0x2b0] sm:$0xff]
    %v1104 = vld [vmem:[%s3 + $0x2b8] sm:$0xff]
    %v1105 = vld [vmem:[%s3 + $0x2c0] sm:$0xff]
    %v1106 = vld [vmem:[%s3 + $0x2c8] sm:$0xff]
    %v1107 = vld [vmem:[%s3 + $0x2d0] sm:$0xff]
    %v1108 = vld [vmem:[%s3 + $0x2d8] sm:$0xff]
    %v1109 = vld [vmem:[%s3 + $0x2e0] sm:$0xff]
    %v1110 = vld [vmem:[%s3 + $0x2e8] sm:$0xff]
    %v1111 = vld [vmem:[%s3 + $0x2f0] sm:$0xff]
    %v1112 = vld [vmem:[%s3 + $0x2f8] sm:$0xff]
    %v1113 = vld [vmem:[%s3 + $0x300] sm:$0xff]
    %v1114 = vld [vmem:[%s3 + $0x308] sm:$0xff]
    %v1115 = vld [vmem:[%s3 + $0x310] sm:$0xff]
    %v1116 = vld [vmem:[%s3 + $0x318] sm:$0xff]
    %v1117 = vld [vmem:[%s3 + $0x320] sm:$0xff]
    %v1118 = vld [vmem:[%s3 + $0x328] sm:$0xff]
    %v1119 = vld [vmem:[%s3 + $0x330] sm:$0xff]
    %v1120 = vld [vmem:[%s3 + $0x338] sm:$0xff]
    %v1121 = vld [vmem:[%s3 + $0x340] sm:$0xff]
    %v1122 = vld [vmem:[%s3 + $0x348] sm:$0xff]
    %v1123 = vld [vmem:[%s3 + $0x350] sm:$0xff]
    %v1124 = vld [vmem:[%s3 + $0x358] sm:$0xff]
    %v1125 = vld [vmem:[%s3 + $0x360] sm:$0xff]
    %v1126 = vld [vmem:[%s3 + $0x368] sm:$0xff]
    %v1127 = vld [vmem:[%s3 + $0x370] sm:$0xff]
    %v1128 = vld [vmem:[%s3 + $0x378] sm:$0xff]
    %v1129 = vld [vmem:[%s3 + $0x380] sm:$0xff]
    %v1130 = vld [vmem:[%s3 + $0x388] sm:$0xff]
    %v1131 = vld [vmem:[%s3 + $0x390] sm:$0xff]
    %v1132 = vld [vmem:[%s3 + $0x398] sm:$0xff]
    %v1133 = vld [vmem:[%s3 + $0x3a0] sm:$0xff]
    %v1134 = vld [vmem:[%s3 + $0x3a8] sm:$0xff]
    %v1135 = vld [vmem:[%s3 + $0x3b0] sm:$0xff]
    %v1136 = vld [vmem:[%s3 + $0x3b8] sm:$0xff]
    %v1137 = vld [vmem:[%s3 + $0x3c0] sm:$0xff]
    %v1138 = vld [vmem:[%s3 + $0x3c8] sm:$0xff]
    %v1139 = vld [vmem:[%s3 + $0x3d0] sm:$0xff]
    %v1140 = vld [vmem:[%s3 + $0x3d8] sm:$0xff]
    %v1141 = vld [vmem:[%s3 + $0x3e0] sm:$0xff]
    %v1142 = vld [vmem:[%s3 + $0x3e8] sm:$0xff]
    %v1143 = vld [vmem:[%s3 + $0x3f0] sm:$0xff]
    %v1144 = vld [vmem:[%s3 + $0x3f8] sm:$0xff]
    %v1145 = vld [vmem:[%s4] sm:$0x1]
    %v1147 = vlaneseq
    %v1148 = vshrl.u32 %v1147, 7
    %v1149 = vsub.s32 0, %v1148
    %v1150 = vrot.slane %v1145, %v1149
    %1152 = vmatprep.subr.mxu0 0.0
    %1153 = vmatpush1.msra.mxu0 %v1017
    %1154 = vmatprep.subr.mxu0 0.0
    %1155 = vmatpush1.msra.mxu0 %v1018
    %1156 = vmatprep.subr.mxu0 0.0
    %1157 = vmatpush1.msra.mxu0 %v1019
    %1158 = vmatprep.subr.mxu0 0.0
    %1159 = vmatpush1.msra.mxu0 %v1020
    %1160 = vmatprep.subr.mxu0 0.0
    %1161 = vmatpush1.msra.mxu0 %v1021
    %1162 = vmatprep.subr.mxu0 0.0
    %1163 = vmatpush1.msra.mxu0 %v1022
    %1164 = vmatprep.subr.mxu0 0.0
    %1165 = vmatpush1.msra.mxu0 %v1023
    %1166 = vmatprep.subr.mxu0 0.0
    %1167 = vmatpush1.msra.mxu0 %v1024
    %1168 = vmatprep.subr.mxu0 0.0
    %1169 = vmatpush1.msra.mxu0 %v1025
    %1170 = vmatprep.subr.mxu0 0.0
    %1171 = vmatpush1.msra.mxu0 %v1026
    %1172 = vmatprep.subr.mxu0 0.0
    %1173 = vmatpush1.msra.mxu0 %v1027
    %1174 = vmatprep.subr.mxu0 0.0
    %1175 = vmatpush1.msra.mxu0 %v1028
    %1176 = vmatprep.subr.mxu0 0.0
    %1177 = vmatpush1.msra.mxu0 %v1029
    %1178 = vmatprep.subr.mxu0 0.0
    %1179 = vmatpush1.msra.mxu0 %v1030
    %1180 = vmatprep.subr.mxu0 0.0
    %1181 = vmatpush1.msra.mxu0 %v1031
    %1182 = vmatprep.subr.mxu0 0.0
    %1183 = vmatpush1.msra.mxu0 %v1032
    %1184 = vmatprep.subr.mxu0 0.0
    %1185 = vmatpush1.msra.mxu0 %v1033
    %1186 = vmatprep.subr.mxu0 0.0
    %1187 = vmatpush1.msra.mxu0 %v1034
    %1188 = vmatprep.subr.mxu0 0.0
    %1189 = vmatpush1.msra.mxu0 %v1035
    %1190 = vmatprep.subr.mxu0 0.0
    %1191 = vmatpush1.msra.mxu0 %v1036
    %1192 = vmatprep.subr.mxu0 0.0
    %1193 = vmatpush1.msra.mxu0 %v1037
    %1194 = vmatprep.subr.mxu0 0.0
    %1195 = vmatpush1.msra.mxu0 %v1038
    %1196 = vmatprep.subr.mxu0 0.0
    %1197 = vmatpush1.msra.mxu0 %v1039
    %1198 = vmatprep.subr.mxu0 0.0
    %1199 = vmatpush1.msra.mxu0 %v1040
    %1200 = vmatprep.subr.mxu0 0.0
    %1201 = vmatpush1.msra.mxu0 %v1041
    %1202 = vmatprep.subr.mxu0 0.0
    %1203 = vmatpush1.msra.mxu0 %v1042
    %1204 = vmatprep.subr.mxu0 0.0
    %1205 = vmatpush1.msra.mxu0 %v1043
    %1206 = vmatprep.subr.mxu0 0.0
    %1207 = vmatpush1.msra.mxu0 %v1044
    %1208 = vmatprep.subr.mxu0 0.0
    %1209 = vmatpush1.msra.mxu0 %v1045
    %1210 = vmatprep.subr.mxu0 0.0
    %1211 = vmatpush1.msra.mxu0 %v1046
    %1212 = vmatprep.subr.mxu0 0.0
    %1213 = vmatpush1.msra.mxu0 %v1047
    %1214 = vmatprep.subr.mxu0 0.0
    %1215 = vmatpush1.msra.mxu0 %v1048
    %1216 = vmatprep.mubr.f32.mxu0 %v1010
    %1217 = vmatmul.mubr.f32.gmra.mrb[0].mxu0 %v1009
    %v1218 = vpop.f32.mrb[0].mxu0
    %v1219 = vadd.f32 %v1150, %v1218
    %v1220 = vpop.f32.mrb[0].mxu0
    %1221 = vdwg.mxu0
    %1222 = vmatprep.subr.mxu0 0.0
    %1223 = vmatpush1.msra.mxu0 %v1049
    %1224 = vmatprep.subr.mxu0 0.0
    %1225 = vmatpush1.msra.mxu0 %v1050
    %1226 = vmatprep.subr.mxu0 0.0
    %1227 = vmatpush1.msra.mxu0 %v1051
    %1228 = vmatprep.subr.mxu0 0.0
    %1229 = vmatpush1.msra.mxu0 %v1052
    %1230 = vmatprep.subr.mxu0 0.0
    %1231 = vmatpush1.msra.mxu0 %v1053
    %1232 = vmatprep.subr.mxu0 0.0
    %1233 = vmatpush1.msra.mxu0 %v1054
    %1234 = vmatprep.subr.mxu0 0.0
    %1235 = vmatpush1.msra.mxu0 %v1055
    %1236 = vmatprep.subr.mxu0 0.0
    %1237 = vmatpush1.msra.mxu0 %v1056
    %1238 = vmatprep.subr.mxu0 0.0
    %1239 = vmatpush1.msra.mxu0 %v1057
    %1240 = vmatprep.subr.mxu0 0.0
    %1241 = vmatpush1.msra.mxu0 %v1058
    %1242 = vmatprep.subr.mxu0 0.0
    %1243 = vmatpush1.msra.mxu0 %v1059
    %1244 = vmatprep.subr.mxu0 0.0
    %1245 = vmatpush1.msra.mxu0 %v1060
    %1246 = vmatprep.subr.mxu0 0.0
    %1247 = vmatpush1.msra.mxu0 %v1061
    %1248 = vmatprep.subr.mxu0 0.0
    %1249 = vmatpush1.msra.mxu0 %v1062
    %1250 = vmatprep.subr.mxu0 0.0
    %1251 = vmatpush1.msra.mxu0 %v1063
    %1252 = vmatprep.subr.mxu0 0.0
    %1253 = vmatpush1.msra.mxu0 %v1064
    %1254 = vmatprep.subr.mxu0 0.0
    %1255 = vmatpush1.msra.mxu0 %v1065
    %1256 = vmatprep.subr.mxu0 0.0
    %1257 = vmatpush1.msra.mxu0 %v1066
    %1258 = vmatprep.subr.mxu0 0.0
    %1259 = vmatpush1.msra.mxu0 %v1067
    %1260 = vmatprep.subr.mxu0 0.0
    %1261 = vmatpush1.msra.mxu0 %v1068
    %1262 = vmatprep.subr.mxu0 0.0
    %1263 = vmatpush1.msra.mxu0 %v1069
    %1264 = vmatprep.subr.mxu0 0.0
    %1265 = vmatpush1.msra.mxu0 %v1070
    %1266 = vmatprep.subr.mxu0 0.0
    %1267 = vmatpush1.msra.mxu0 %v1071
    %1268 = vmatprep.subr.mxu0 0.0
    %1269 = vmatpush1.msra.mxu0 %v1072
    %1270 = vmatprep.subr.mxu0 0.0
    %1271 = vmatpush1.msra.mxu0 %v1073
    %1272 = vmatprep.subr.mxu0 0.0
    %1273 = vmatpush1.msra.mxu0 %v1074
    %1274 = vmatprep.subr.mxu0 0.0
    %1275 = vmatpush1.msra.mxu0 %v1075
    %1276 = vmatprep.subr.mxu0 0.0
    %1277 = vmatpush1.msra.mxu0 %v1076
    %1278 = vmatprep.subr.mxu0 0.0
    %1279 = vmatpush1.msra.mxu0 %v1077
    %1280 = vmatprep.subr.mxu0 0.0
    %1281 = vmatpush1.msra.mxu0 %v1078
    %1282 = vmatprep.subr.mxu0 0.0
    %1283 = vmatpush1.msra.mxu0 %v1079
    %1284 = vmatprep.subr.mxu0 0.0
    %1285 = vmatpush1.msra.mxu0 %v1080
    %1286 = vmatprep.mubr.f32.mxu0 %v1012
    %1287 = vmatmul.mubr.f32.gmra.mrb[0].mxu0 %v1011
    %v1288 = vpop.f32.mrb[0].mxu0
    %v1289 = vadd.f32 %v1219, %v1288
    %v1290 = vpop.f32.mrb[0].mxu0
    %1291 = vdwg.mxu0
    %1292 = vmatprep.subr.mxu0 0.0
    %1293 = vmatpush1.msra.mxu0 %v1081
    %1294 = vmatprep.subr.mxu0 0.0
    %1295 = vmatpush1.msra.mxu0 %v1082
    %1296 = vmatprep.subr.mxu0 0.0
    %1297 = vmatpush1.msra.mxu0 %v1083
    %1298 = vmatprep.subr.mxu0 0.0
    %1299 = vmatpush1.msra.mxu0 %v1084
    %1300 = vmatprep.subr.mxu0 0.0
    %1301 = vmatpush1.msra.mxu0 %v1085
    %1302 = vmatprep.subr.mxu0 0.0
    %1303 = vmatpush1.msra.mxu0 %v1086
    %1304 = vmatprep.subr.mxu0 0.0
    %1305 = vmatpush1.msra.mxu0 %v1087
    %1306 = vmatprep.subr.mxu0 0.0
    %1307 = vmatpush1.msra.mxu0 %v1088
    %1308 = vmatprep.subr.mxu0 0.0
    %1309 = vmatpush1.msra.mxu0 %v1089
    %1310 = vmatprep.subr.mxu0 0.0
    %1311 = vmatpush1.msra.mxu0 %v1090
    %1312 = vmatprep.subr.mxu0 0.0
    %1313 = vmatpush1.msra.mxu0 %v1091
    %1314 = vmatprep.subr.mxu0 0.0
    %1315 = vmatpush1.msra.mxu0 %v1092
    %1316 = vmatprep.subr.mxu0 0.0
    %1317 = vmatpush1.msra.mxu0 %v1093
    %1318 = vmatprep.subr.mxu0 0.0
    %1319 = vmatpush1.msra.mxu0 %v1094
    %1320 = vmatprep.subr.mxu0 0.0
    %1321 = vmatpush1.msra.mxu0 %v1095
    %1322 = vmatprep.subr.mxu0 0.0
    %1323 = vmatpush1.msra.mxu0 %v1096
    %1324 = vmatprep.subr.mxu0 0.0
    %1325 = vmatpush1.msra.mxu0 %v1097
    %1326 = vmatprep.subr.mxu0 0.0
    %1327 = vmatpush1.msra.mxu0 %v1098
    %1328 = vmatprep.subr.mxu0 0.0
    %1329 = vmatpush1.msra.mxu0 %v1099
    %1330 = vmatprep.subr.mxu0 0.0
    %1331 = vmatpush1.msra.mxu0 %v1100
    %1332 = vmatprep.subr.mxu0 0.0
    %1333 = vmatpush1.msra.mxu0 %v1101
    %1334 = vmatprep.subr.mxu0 0.0
    %1335 = vmatpush1.msra.mxu0 %v1102
    %1336 = vmatprep.subr.mxu0 0.0
    %1337 = vmatpush1.msra.mxu0 %v1103
    %1338 = vmatprep.subr.mxu0 0.0
    %1339 = vmatpush1.msra.mxu0 %v1104
    %1340 = vmatprep.subr.mxu0 0.0
    %1341 = vmatpush1.msra.mxu0 %v1105
    %1342 = vmatprep.subr.mxu0 0.0
    %1343 = vmatpush1.msra.mxu0 %v1106
    %1344 = vmatprep.subr.mxu0 0.0
    %1345 = vmatpush1.msra.mxu0 %v1107
    %1346 = vmatprep.subr.mxu0 0.0
    %1347 = vmatpush1.msra.mxu0 %v1108
    %1348 = vmatprep.subr.mxu0 0.0
    %1349 = vmatpush1.msra.mxu0 %v1109
    %1350 = vmatprep.subr.mxu0 0.0
    %1351 = vmatpush1.msra.mxu0 %v1110
    %1352 = vmatprep.subr.mxu0 0.0
    %1353 = vmatpush1.msra.mxu0 %v1111
    %1354 = vmatprep.subr.mxu0 0.0
    %1355 = vmatpush1.msra.mxu0 %v1112
    %1356 = vmatprep.mubr.f32.mxu0 %v1014
    %1357 = vmatmul.mubr.f32.gmra.mrb[0].mxu0 %v1013
    %v1358 = vpop.f32.mrb[0].mxu0
    %v1359 = vadd.f32 %v1289, %v1358
    %v1360 = vpop.f32.mrb[0].mxu0
    %1361 = vdwg.mxu0
    %1362 = vmatprep.subr.mxu0 0.0
    %1363 = vmatpush1.msra.mxu0 %v1113
    %1364 = vmatprep.subr.mxu0 0.0
    %1365 = vmatpush1.msra.mxu0 %v1114
    %1366 = vmatprep.subr.mxu0 0.0
    %1367 = vmatpush1.msra.mxu0 %v1115
    %1368 = vmatprep.subr.mxu0 0.0
    %1369 = vmatpush1.msra.mxu0 %v1116
    %1370 = vmatprep.subr.mxu0 0.0
    %1371 = vmatpush1.msra.mxu0 %v1117
    %1372 = vmatprep.subr.mxu0 0.0
    %1373 = vmatpush1.msra.mxu0 %v1118
    %1374 = vmatprep.subr.mxu0 0.0
    %1375 = vmatpush1.msra.mxu0 %v1119
    %1376 = vmatprep.subr.mxu0 0.0
    %1377 = vmatpush1.msra.mxu0 %v1120
    %1378 = vmatprep.subr.mxu0 0.0
    %1379 = vmatpush1.msra.mxu0 %v1121
    %1380 = vmatprep.subr.mxu0 0.0
    %1381 = vmatpush1.msra.mxu0 %v1122
    %1382 = vmatprep.subr.mxu0 0.0
    %1383 = vmatpush1.msra.mxu0 %v1123
    %1384 = vmatprep.subr.mxu0 0.0
    %1385 = vmatpush1.msra.mxu0 %v1124
    %1386 = vmatprep.subr.mxu0 0.0
    %1387 = vmatpush1.msra.mxu0 %v1125
    %1388 = vmatprep.subr.mxu0 0.0
    %1389 = vmatpush1.msra.mxu0 %v1126
    %1390 = vmatprep.subr.mxu0 0.0
    %1391 = vmatpush1.msra.mxu0 %v1127
    %1392 = vmatprep.subr.mxu0 0.0
    %1393 = vmatpush1.msra.mxu0 %v1128
    %1394 = vmatprep.subr.mxu0 0.0
    %1395 = vmatpush1.msra.mxu0 %v1129
    %1396 = vmatprep.subr.mxu0 0.0
    %1397 = vmatpush1.msra.mxu0 %v1130
    %1398 = vmatprep.subr.mxu0 0.0
    %1399 = vmatpush1.msra.mxu0 %v1131
    %1400 = vmatprep.subr.mxu0 0.0
    %1401 = vmatpush1.msra.mxu0 %v1132
    %1402 = vmatprep.subr.mxu0 0.0
    %1403 = vmatpush1.msra.mxu0 %v1133
    %1404 = vmatprep.subr.mxu0 0.0
    %1405 = vmatpush1.msra.mxu0 %v1134
    %1406 = vmatprep.subr.mxu0 0.0
    %1407 = vmatpush1.msra.mxu0 %v1135
    %1408 = vmatprep.subr.mxu0 0.0
    %1409 = vmatpush1.msra.mxu0 %v1136
    %1410 = vmatprep.subr.mxu0 0.0
    %1411 = vmatpush1.msra.mxu0 %v1137
    %1412 = vmatprep.subr.mxu0 0.0
    %1413 = vmatpush1.msra.mxu0 %v1138
    %1414 = vmatprep.subr.mxu0 0.0
    %1415 = vmatpush1.msra.mxu0 %v1139
    %1416 = vmatprep.subr.mxu0 0.0
    %1417 = vmatpush1.msra.mxu0 %v1140
    %1418 = vmatprep.subr.mxu0 0.0
    %1419 = vmatpush1.msra.mxu0 %v1141
    %1420 = vmatprep.subr.mxu0 0.0
    %1421 = vmatpush1.msra.mxu0 %v1142
    %1422 = vmatprep.subr.mxu0 0.0
    %1423 = vmatpush1.msra.mxu0 %v1143
    %1424 = vmatprep.subr.mxu0 0.0
    %1425 = vmatpush1.msra.mxu0 %v1144
    %1426 = vmatprep.mubr.f32.mxu0 %v1016
    %1427 = vmatmul.mubr.f32.gmra.mrb[0].mxu0 %v1015
    %v1428 = vpop.f32.mrb[0].mxu0
    %v1429 = vadd.f32 %v1359, %v1428
    %v1430 = vpop.f32.mrb[0].mxu0
    %1431 = vdwg.mxu0
    %vm1432 = vcmask 9216
    %1433 = vst.msk [vmem:[#allocation2] sm:$0x3] %vm1432, %v1429
    // Predicated region
    $region22: #{attn_net_forward.5} parent=1 // pred_check
      _
    $region23: #{attn_net_forward.5} parent=1 // pred_check_branch
      %1435 = sbr.rel (0) target = $region25
    $region24: #{attn_net_forward.5} parent=1 // pred_region
      %s1437 = ssub.s32 32, 32
      %1438 = vsyncadd [#allocation3], %s1437
      %s1440 = sshll.u32 [#allocation2], 4
      %s1441 = int_to_ptr.vmem [resolvable:$true] %s1440
      %1443 = dma.vmem_to_hbm [thread:$0]  %s1441, 32, %s5, [#allocation3]
    $region25: #{attn_net_forward.5} parent=1 // pred_fallthru
      _
    // Predicated region
    $region26: #{attn_net_forward.5} parent=1 // pred_check
      _
    $region27: #{attn_net_forward.5} parent=1 // pred_check_branch
      %1445 = sbr.rel (0) target = $region29
    $region28: #{attn_net_forward.5} parent=1 // pred_region
      %1446 = dma.done [#allocation3], 32
    $region29: #{attn_net_forward.5} parent=1 // pred_fallthru
      _
    %1447 = vsyncpa [#allocation3], 1

</llo_original>
